<compile_context>
chip_gen: v7x
topology: tpu7x:2x2x1
jax: 0.10.0
libtpu: 0.0.40
codegen_flags: <defaults>
</compile_context>

<pallas_src>
import numpy as np
import jax
import jax.numpy as jnp
from jax import lax
from jax.experimental import pallas as pl
from jax.experimental.pallas import tpu as pltpu


_BLK_KEYS = ("w0a", "w1a", "ba", "w0b", "w1b", "bb", "wd", "bd")


# ----------------------------------------------------------------------------
# Fused kernel: TCN block1 -> TCN block2 -> embedding -> GRU -> decoder
# ----------------------------------------------------------------------------
def _astcg_kernel(x_ref,
                  b1_w0a, b1_w1a, b1_ba, b1_w0b, b1_w1b, b1_bb, b1_wd, b1_bd,
                  b2_w0a, b2_w1a, b2_ba, b2_w0b, b2_w1b, b2_bb, b2_wd, b2_bd,
                  emb_w_ref, emb_b_ref, wih_ref, bih_ref, whh_ref, bhn_ref,
                  dec_w_ref, dec_b_ref,
                  o_ref,
                  xg_scr, hseq_scr):
    L, BB, Cin = x_ref.shape
    M = L * BB
    H = hseq_scr.shape[2]
    f32 = jnp.float32
    bf16 = jnp.bfloat16

    def mm(a, b):
        # bf16 MXU operands, f32 accumulation; elementwise math stays f32.
        return jnp.dot(a.astype(bf16), b.astype(bf16), preferred_element_type=f32)

    def tshift(v, d):
        # Causal dilated shift on time-major flat rows (i = t*BB + b):
        #   out[i] = v[i - d*BB]  for t >= d, else 0 (conv zero padding).
        # Sublane rotate on the XLU (free wrt MXU/VPU slots) + iota mask,
        # replacing the old (M, M) shift matmul.
        s = d * BB
        rolled = pltpu.roll(v, shift=s, axis=0)
        rows = lax.broadcasted_iota(jnp.int32, v.shape, 0)
        return jnp.where(rows >= s, rolled, 0.0)

    def tblock(inp, d, w0a, w1a, ba, w0b, w1b, bb_, wd, bd):
        # conv1 (causal, dilation d, K=2) -> ReLU -> conv2 -> ReLU -> +res -> ReLU
        sh1 = tshift(inp, d)                                        # x[t - d]
        h1 = jnp.maximum(mm(sh1, w0a[...]) + mm(inp, w1a[...]) + ba[...], 0.0)
        sh2 = tshift(h1, d)
        h2 = jnp.maximum(mm(sh2, w0b[...]) + mm(h1, w1b[...]) + bb_[...], 0.0)
        res = mm(inp, wd[...]) + bd[...]                            # 1x1 downsample
        return jnp.maximum(h2 + res, 0.0)

    x = x_ref[...].reshape(M, Cin)        # time-major flat rows (i = t*BB + b)

    t1 = tblock(x, 1, b1_w0a, b1_w1a, b1_ba, b1_w0b, b1_w1b, b1_bb, b1_wd, b1_bd)
    t2 = tblock(t1, 2, b2_w0a, b2_w1a, b2_ba, b2_w0b, b2_w1b, b2_bb, b2_wd, b2_bd)
    # F.relu(Temporal_info.permute(...)) is identity: t2 is already >= 0.

    emb = mm(t2, emb_w_ref[...]) + emb_b_ref[...]                   # (M, E)

    # GRU input projection hoisted out of the recurrence (one big matmul);
    # r/z hidden biases were pre-summed into bih at parameter-prep time.
    xg_scr[...] = (mm(emb, wih_ref[...]) + bih_ref[...]).reshape(xg_scr.shape)

    whh = whh_ref[...]                                              # (H, 3H) f32
    bhn = jnp.broadcast_to(bhn_ref[...], (BB, H))                   # hoisted bcast

    def step(t, h):
        xt = xg_scr[t]                                              # (BB, 3H)
        hh = jnp.dot(h, whh, preferred_element_type=f32)            # (BB, 3H)
        r = jax.nn.sigmoid(xt[:, :H] + hh[:, :H])
        z = jax.nn.sigmoid(xt[:, H:2 * H] + hh[:, H:2 * H])
        n = jnp.tanh(xt[:, 2 * H:] + r * (hh[:, 2 * H:] + bhn))
        hn = (1.0 - z) * n + z * h
        hseq_scr[t] = jnp.maximum(hn, 0.0)                          # fused F.relu
        return hn                                                   # carry in vregs

    lax.fori_loop(0, L, step, jnp.zeros((BB, H), f32), unroll=True)

    # Decoder linear on the whole relu(h) sequence (single matmul + one store).
    hs = hseq_scr[...].reshape(M, H)
    o_ref[...] = (mm(hs, dec_w_ref[...]) + dec_b_ref[...]).reshape(o_ref.shape)


# ----------------------------------------------------------------------------
# Wrapper
# ----------------------------------------------------------------------------
def astcg_no_spatial_forward(x, params):
    """x: (B, seq_len, in_channels) -> (B, seq_len, out_channels)."""
    B, L, Cin = x.shape
    p1, p2 = params["b1"], params["b2"]
    EC, E = params["emb_w"].shape
    H = params["gru"]["whh"].shape[0]
    OC = params["dec_w"].shape[1]

    # Batch tile: whole batch if small, else 8-row tiles (sublane aligned).
    BB = 8 if (B >= 8 and B % 8 == 0) else B

    x_t = jnp.transpose(x, (1, 0, 2))                  # (L, B, Cin) time-major

    def full(shape):
        nd = len(shape)
        return pl.BlockSpec(shape, lambda b, _n=nd: (0,) * _n)

    in_specs = (
        [pl.BlockSpec((L, BB, Cin), lambda b: (0, b, 0))]
        + [full(tuple(p1[k].shape)) for k in _BLK_KEYS]
        + [full(tuple(p2[k].shape)) for k in _BLK_KEYS]
        + [full((EC, E)), full((1, E)),
           full((E, 3 * H)), full((1, 3 * H)),
           full((H, 3 * H)), full((1, H)),
           full((H, OC)), full((1, OC))]
    )
    out_specs = pl.BlockSpec((L, BB, OC), lambda b: (0, b, 0))

    out_t = pl.pallas_call(
        _astcg_kernel,
        grid=(B // BB,),
        in_specs=in_specs,
        out_specs=out_specs,
        out_shape=jax.ShapeDtypeStruct((L, B, OC), jnp.float32),
        scratch_shapes=[
            pltpu.VMEM((L, BB, 3 * H), jnp.float32),   # hoisted x@W_ih (time-major)
            pltpu.VMEM((L, BB, H), jnp.float32),       # relu(h_t) sequence
        ],
        compiler_params=pltpu.CompilerParams(
            dimension_semantics=("parallel",),
            vmem_limit_bytes=32 * 1024 * 1024),
    )(x_t,
      *(p1[k] for k in _BLK_KEYS),
      *(p2[k] for k in _BLK_KEYS),
      params["emb_w"], params["emb_b"],
      params["gru"]["wih"], params["gru"]["bih"],
      params["gru"]["whh"], params["gru"]["bhn"],
      params["dec_w"], params["dec_b"])

    return jnp.transpose(out_t, (1, 0, 2))             # (B, L, out)


# ----------------------------------------------------------------------------
# Parameter construction (mirrors the PyTorch module's init semantics)
# ----------------------------------------------------------------------------
def make_params(key, in_channels, embed_channels, out_channels):
    keys = iter(jax.random.split(key, 64))
    nxt = lambda: next(keys)
    f32, bf16 = jnp.float32, jnp.bfloat16

    def wn_conv(cout, cin, k):
        # weight_norm reparam: w = g * v / ||v||  (norm over (cin, k) per out ch)
        v = 0.01 * jax.random.normal(nxt(), (cout, cin, k), f32)
        g = jax.random.uniform(nxt(), (cout,), f32, 0.5, 1.5)
        nrm = jnp.sqrt(jnp.sum(v * v, axis=(1, 2), keepdims=True)) + 1e-12
        return g[:, None, None] * v / nrm

    def conv_bias(cout, fan_in):
        bound = 1.0 / np.sqrt(fan_in)
        return jax.random.uniform(nxt(), (1, cout), f32, -bound, bound)

    def block(cin, cout, k=2):
        w1 = wn_conv(cout, cin, k)          # conv1
        w2 = wn_conv(cout, cout, k)         # conv2
        ba = conv_bias(cout, cin * k)
        bb = conv_bias(cout, cout * k)
        if cin != cout:
            wd = (0.01 * jax.random.normal(nxt(), (cout, cin), f32)).T
            bd = conv_bias(cout, cin)
        else:
            # Reference uses identity residual when cin == cout; an identity
            # 1x1 conv reproduces it (exact up to the bf16 operand cast).
            wd = jnp.eye(cin, dtype=f32)
            bd = jnp.zeros((1, cout), f32)
        return dict(
            w0a=jnp.asarray(w1[:, :, 0].T, bf16), w1a=jnp.asarray(w1[:, :, 1].T, bf16),
            ba=ba,
            w0b=jnp.asarray(w2[:, :, 0].T, bf16), w1b=jnp.asarray(w2[:, :, 1].T, bf16),
            bb=bb,
            wd=jnp.asarray(wd, bf16), bd=bd,
        )

    embed_size = 12
    H = embed_channels // 2

    # GRU (PyTorch gate order r, z, n), uniform(-1/sqrt(H), 1/sqrt(H))
    bnd = 1.0 / np.sqrt(H)
    w_ih = jax.random.uniform(nxt(), (3 * H, embed_size), f32, -bnd, bnd)
    w_hh = jax.random.uniform(nxt(), (3 * H, H), f32, -bnd, bnd)
    b_ih = jax.random.uniform(nxt(), (3 * H,), f32, -bnd, bnd)
    b_hh = jax.random.uniform(nxt(), (3 * H,), f32, -bnd, bnd)
    # Pack gates [r|z|n]; pre-sum the hidden biases of r and z into the input
    # projection bias (b_hn must stay inside r * (h@W_hn + b_hn)).
    b_comb = b_ih + jnp.concatenate([b_hh[:2 * H], jnp.zeros((H,), f32)])
    gru = dict(
        wih=jnp.asarray(w_ih.T, bf16),      # (E, 3H)
        bih=b_comb[None, :],                # (1, 3H) f32
        whh=w_hh.T,                         # (H, 3H) f32 (recurrent path stays f32)
        bhn=b_hh[2 * H:][None, :],          # (1, H)  f32
    )

    # nn.Linear: weight ~ N(0,1), bias = 0   (per _init_weights)
    emb_w = jnp.asarray(jax.random.normal(nxt(), (embed_size, embed_channels), f32).T, bf16)
    dec_w = jnp.asarray(jax.random.normal(nxt(), (out_channels, H), f32).T, bf16)

    return dict(
        b1=block(in_channels, 64),
        b2=block(64, embed_channels),
        emb_w=emb_w, emb_b=jnp.zeros((1, embed_size), f32),
        gru=gru,
        dec_w=dec_w, dec_b=jnp.zeros((1, out_channels), f32),
    )


# ----------------------------------------------------------------------------
if __name__ == "__main__":
    B, L = 2, 16
    in_channels, embed_channels, out_channels = 8, 32, 4

    key = jax.random.PRNGKey(0)
    k_x, k_p = jax.random.split(key)
    x = jax.random.normal(k_x, (B, L, in_channels), jnp.float32)
    params = make_params(k_p, in_channels, embed_channels, out_channels)

    fwd = jax.jit(astcg_no_spatial_forward)
    out = jax.block_until_ready(fwd(x, params))
    assert out.shape == (B, L, out_channels)
    assert bool(jnp.all(jnp.isfinite(out)))
    print("KERNEL_OK")
</pallas_src>

<mosaic_0001>
module attributes {stable_mosaic.version = 11 : i64} {
  func.func @_astcg_kernel(%arg0: i32, %arg1: memref<16x2x8xf32, #tpu.memory_space<vmem>>, %arg2: memref<8x64xbf16, #tpu.memory_space<vmem>>, %arg3: memref<8x64xbf16, #tpu.memory_space<vmem>>, %arg4: memref<1x64xf32, #tpu.memory_space<vmem>>, %arg5: memref<64x64xbf16, #tpu.memory_space<vmem>>, %arg6: memref<64x64xbf16, #tpu.memory_space<vmem>>, %arg7: memref<1x64xf32, #tpu.memory_space<vmem>>, %arg8: memref<8x64xbf16, #tpu.memory_space<vmem>>, %arg9: memref<1x64xf32, #tpu.memory_space<vmem>>, %arg10: memref<64x32xbf16, #tpu.memory_space<vmem>>, %arg11: memref<64x32xbf16, #tpu.memory_space<vmem>>, %arg12: memref<1x32xf32, #tpu.memory_space<vmem>>, %arg13: memref<32x32xbf16, #tpu.memory_space<vmem>>, %arg14: memref<32x32xbf16, #tpu.memory_space<vmem>>, %arg15: memref<1x32xf32, #tpu.memory_space<vmem>>, %arg16: memref<64x32xbf16, #tpu.memory_space<vmem>>, %arg17: memref<1x32xf32, #tpu.memory_space<vmem>>, %arg18: memref<32x12xbf16, #tpu.memory_space<vmem>>, %arg19: memref<1x12xf32, #tpu.memory_space<vmem>>, %arg20: memref<12x48xbf16, #tpu.memory_space<vmem>>, %arg21: memref<1x48xf32, #tpu.memory_space<vmem>>, %arg22: memref<16x48xf32, #tpu.memory_space<vmem>>, %arg23: memref<1x16xf32, #tpu.memory_space<vmem>>, %arg24: memref<16x4xbf16, #tpu.memory_space<vmem>>, %arg25: memref<1x4xf32, #tpu.memory_space<vmem>>, %arg26: memref<16x2x4xf32, #tpu.memory_space<vmem>>, %arg27: memref<16x2x48xf32, #tpu.memory_space<vmem>>, %arg28: memref<16x2x16xf32, #tpu.memory_space<vmem>>) attributes {dimension_semantics = [#tpu.dimension_semantics<parallel>], iteration_bounds = array<i64: 1>, scalar_prefetch = 0 : i64, scratch_operands = 2 : i64, tpu.core_type = #tpu.core_type<tc>, window_params = [{transform_indices = @transform_0, window_bounds = array<i64: 16, 2, 8>}, {pipeline_mode = #tpu.pipeline_mode<synchronous>, transform_indices = @transform_1, window_bounds = array<i64: 8, 64>}, {pipeline_mode = #tpu.pipeline_mode<synchronous>, transform_indices = @transform_2, window_bounds = array<i64: 8, 64>}, {pipeline_mode = #tpu.pipeline_mode<synchronous>, transform_indices = @transform_3, window_bounds = array<i64: 1, 64>}, {pipeline_mode = #tpu.pipeline_mode<synchronous>, transform_indices = @transform_4, window_bounds = array<i64: 64, 64>}, {pipeline_mode = #tpu.pipeline_mode<synchronous>, transform_indices = @transform_5, window_bounds = array<i64: 64, 64>}, {pipeline_mode = #tpu.pipeline_mode<synchronous>, transform_indices = @transform_6, window_bounds = array<i64: 1, 64>}, {pipeline_mode = #tpu.pipeline_mode<synchronous>, transform_indices = @transform_7, window_bounds = array<i64: 8, 64>}, {pipeline_mode = #tpu.pipeline_mode<synchronous>, transform_indices = @transform_8, window_bounds = array<i64: 1, 64>}, {pipeline_mode = #tpu.pipeline_mode<synchronous>, transform_indices = @transform_9, window_bounds = array<i64: 64, 32>}, {pipeline_mode = #tpu.pipeline_mode<synchronous>, transform_indices = @transform_10, window_bounds = array<i64: 64, 32>}, {pipeline_mode = #tpu.pipeline_mode<synchronous>, transform_indices = @transform_11, window_bounds = array<i64: 1, 32>}, {pipeline_mode = #tpu.pipeline_mode<synchronous>, transform_indices = @transform_12, window_bounds = array<i64: 32, 32>}, {pipeline_mode = #tpu.pipeline_mode<synchronous>, transform_indices = @transform_13, window_bounds = array<i64: 32, 32>}, {pipeline_mode = #tpu.pipeline_mode<synchronous>, transform_indices = @transform_14, window_bounds = array<i64: 1, 32>}, {pipeline_mode = #tpu.pipeline_mode<synchronous>, transform_indices = @transform_15, window_bounds = array<i64: 64, 32>}, {pipeline_mode = #tpu.pipeline_mode<synchronous>, transform_indices = @transform_16, window_bounds = array<i64: 1, 32>}, {pipeline_mode = #tpu.pipeline_mode<synchronous>, transform_indices = @transform_17, window_bounds = array<i64: 32, 12>}, {pipeline_mode = #tpu.pipeline_mode<synchronous>, transform_indices = @transform_18, window_bounds = array<i64: 1, 12>}, {pipeline_mode = #tpu.pipeline_mode<synchronous>, transform_indices = @transform_19, window_bounds = array<i64: 12, 48>}, {pipeline_mode = #tpu.pipeline_mode<synchronous>, transform_indices = @transform_20, window_bounds = array<i64: 1, 48>}, {pipeline_mode = #tpu.pipeline_mode<synchronous>, transform_indices = @transform_21, window_bounds = array<i64: 16, 48>}, {pipeline_mode = #tpu.pipeline_mode<synchronous>, transform_indices = @transform_22, window_bounds = array<i64: 1, 16>}, {pipeline_mode = #tpu.pipeline_mode<synchronous>, transform_indices = @transform_23, window_bounds = array<i64: 16, 4>}, {pipeline_mode = #tpu.pipeline_mode<synchronous>, transform_indices = @transform_24, window_bounds = array<i64: 1, 4>}, {transform_indices = @transform_25, window_bounds = array<i64: 16, 2, 4>}]} {
    %c0 = arith.constant 0 : index
    %c0_0 = arith.constant 0 : index
    %c0_1 = arith.constant 0 : index
    %0 = vector.load %arg1[%c0, %c0_0, %c0_1] : memref<16x2x8xf32, #tpu.memory_space<vmem>>, vector<16x2x8xf32>
    %1 = vector.shape_cast %0 : vector<16x2x8xf32> to vector<32x8xf32>
    %c2_i32 = arith.constant 2 : i32
    %2 = tpu.dynamic_rotate %1 by %c2_i32 dim 0 : vector<32x8xf32>, i32 -> vector<32x8xf32>
    %3 = tpu.iota {dimensions = array<i32: 0>} : vector<32x8xi32>
    %c2_i32_2 = arith.constant 2 : i32
    %4 = vector.broadcast %c2_i32_2 : i32 to vector<32x8xi32>
    %5 = arith.cmpi sge, %3, %4 : vector<32x8xi32>
    %cst = arith.constant 0.000000e+00 : f32
    %6 = vector.broadcast %cst : f32 to vector<32x8xf32>
    %7 = arith.select %5, %2, %6 : vector<32x8xi1>, vector<32x8xf32>
    %c0_3 = arith.constant 0 : index
    %c0_4 = arith.constant 0 : index
    %8 = vector.load %arg2[%c0_3, %c0_4] : memref<8x64xbf16, #tpu.memory_space<vmem>>, vector<8x64xbf16>
    %9 = arith.truncf %7 : vector<32x8xf32> to vector<32x8xbf16>
    %cst_5 = arith.constant dense<0.000000e+00> : vector<32x64xf32>
    %10 = tpu.matmul %9, %8, %cst_5 {dimension_numbers = #tpu.dot_dimension_numbers<[1], [0], [0], [1], [0, 0, 1, 1], [], []>} : vector<32x8xbf16>, vector<8x64xbf16>, vector<32x64xf32> -> vector<32x64xf32>
    %c0_6 = arith.constant 0 : index
    %c0_7 = arith.constant 0 : index
    %11 = vector.load %arg3[%c0_6, %c0_7] : memref<8x64xbf16, #tpu.memory_space<vmem>>, vector<8x64xbf16>
    %12 = arith.truncf %1 : vector<32x8xf32> to vector<32x8xbf16>
    %cst_8 = arith.constant dense<0.000000e+00> : vector<32x64xf32>
    %13 = tpu.matmul %12, %11, %cst_8 {dimension_numbers = #tpu.dot_dimension_numbers<[1], [0], [0], [1], [0, 0, 1, 1], [], []>} : vector<32x8xbf16>, vector<8x64xbf16>, vector<32x64xf32> -> vector<32x64xf32>
    %14 = arith.addf %10, %13 : vector<32x64xf32>
    %c0_9 = arith.constant 0 : index
    %c0_10 = arith.constant 0 : index
    %15 = vector.load %arg4[%c0_9, %c0_10] : memref<1x64xf32, #tpu.memory_space<vmem>>, vector<1x64xf32>
    %16 = vector.broadcast %15 : vector<1x64xf32> to vector<32x64xf32>
    %17 = arith.addf %14, %16 : vector<32x64xf32>
    %cst_11 = arith.constant 0.000000e+00 : f32
    %18 = vector.broadcast %cst_11 : f32 to vector<32x64xf32>
    %19 = arith.maximumf %17, %18 : vector<32x64xf32>
    %c2_i32_12 = arith.constant 2 : i32
    %20 = tpu.dynamic_rotate %19 by %c2_i32_12 dim 0 : vector<32x64xf32>, i32 -> vector<32x64xf32>
    %21 = tpu.iota {dimensions = array<i32: 0>} : vector<32x64xi32>
    %c2_i32_13 = arith.constant 2 : i32
    %22 = vector.broadcast %c2_i32_13 : i32 to vector<32x64xi32>
    %23 = arith.cmpi sge, %21, %22 : vector<32x64xi32>
    %cst_14 = arith.constant 0.000000e+00 : f32
    %24 = vector.broadcast %cst_14 : f32 to vector<32x64xf32>
    %25 = arith.select %23, %20, %24 : vector<32x64xi1>, vector<32x64xf32>
    %c0_15 = arith.constant 0 : index
    %c0_16 = arith.constant 0 : index
    %26 = vector.load %arg5[%c0_15, %c0_16] : memref<64x64xbf16, #tpu.memory_space<vmem>>, vector<64x64xbf16>
    %27 = arith.truncf %25 : vector<32x64xf32> to vector<32x64xbf16>
    %cst_17 = arith.constant dense<0.000000e+00> : vector<32x64xf32>
    %28 = tpu.matmul %27, %26, %cst_17 {dimension_numbers = #tpu.dot_dimension_numbers<[1], [0], [0], [1], [0, 0, 1, 1], [], []>} : vector<32x64xbf16>, vector<64x64xbf16>, vector<32x64xf32> -> vector<32x64xf32>
    %c0_18 = arith.constant 0 : index
    %c0_19 = arith.constant 0 : index
    %29 = vector.load %arg6[%c0_18, %c0_19] : memref<64x64xbf16, #tpu.memory_space<vmem>>, vector<64x64xbf16>
    %30 = arith.truncf %19 : vector<32x64xf32> to vector<32x64xbf16>
    %cst_20 = arith.constant dense<0.000000e+00> : vector<32x64xf32>
    %31 = tpu.matmul %30, %29, %cst_20 {dimension_numbers = #tpu.dot_dimension_numbers<[1], [0], [0], [1], [0, 0, 1, 1], [], []>} : vector<32x64xbf16>, vector<64x64xbf16>, vector<32x64xf32> -> vector<32x64xf32>
    %32 = arith.addf %28, %31 : vector<32x64xf32>
    %c0_21 = arith.constant 0 : index
    %c0_22 = arith.constant 0 : index
    %33 = vector.load %arg7[%c0_21, %c0_22] : memref<1x64xf32, #tpu.memory_space<vmem>>, vector<1x64xf32>
    %34 = vector.broadcast %33 : vector<1x64xf32> to vector<32x64xf32>
    %35 = arith.addf %32, %34 : vector<32x64xf32>
    %cst_23 = arith.constant 0.000000e+00 : f32
    %36 = vector.broadcast %cst_23 : f32 to vector<32x64xf32>
    %37 = arith.maximumf %35, %36 : vector<32x64xf32>
    %c0_24 = arith.constant 0 : index
    %c0_25 = arith.constant 0 : index
    %38 = vector.load %arg8[%c0_24, %c0_25] : memref<8x64xbf16, #tpu.memory_space<vmem>>, vector<8x64xbf16>
    %39 = arith.truncf %1 : vector<32x8xf32> to vector<32x8xbf16>
    %cst_26 = arith.constant dense<0.000000e+00> : vector<32x64xf32>
    %40 = tpu.matmul %39, %38, %cst_26 {dimension_numbers = #tpu.dot_dimension_numbers<[1], [0], [0], [1], [0, 0, 1, 1], [], []>} : vector<32x8xbf16>, vector<8x64xbf16>, vector<32x64xf32> -> vector<32x64xf32>
    %c0_27 = arith.constant 0 : index
    %c0_28 = arith.constant 0 : index
    %41 = vector.load %arg9[%c0_27, %c0_28] : memref<1x64xf32, #tpu.memory_space<vmem>>, vector<1x64xf32>
    %42 = vector.broadcast %41 : vector<1x64xf32> to vector<32x64xf32>
    %43 = arith.addf %40, %42 : vector<32x64xf32>
    %44 = arith.addf %37, %43 : vector<32x64xf32>
    %cst_29 = arith.constant 0.000000e+00 : f32
    %45 = vector.broadcast %cst_29 : f32 to vector<32x64xf32>
    %46 = arith.maximumf %44, %45 : vector<32x64xf32>
    %c4_i32 = arith.constant 4 : i32
    %47 = tpu.dynamic_rotate %46 by %c4_i32 dim 0 : vector<32x64xf32>, i32 -> vector<32x64xf32>
    %48 = tpu.iota {dimensions = array<i32: 0>} : vector<32x64xi32>
    %c4_i32_30 = arith.constant 4 : i32
    %49 = vector.broadcast %c4_i32_30 : i32 to vector<32x64xi32>
    %50 = arith.cmpi sge, %48, %49 : vector<32x64xi32>
    %cst_31 = arith.constant 0.000000e+00 : f32
    %51 = vector.broadcast %cst_31 : f32 to vector<32x64xf32>
    %52 = arith.select %50, %47, %51 : vector<32x64xi1>, vector<32x64xf32>
    %c0_32 = arith.constant 0 : index
    %c0_33 = arith.constant 0 : index
    %53 = vector.load %arg10[%c0_32, %c0_33] : memref<64x32xbf16, #tpu.memory_space<vmem>>, vector<64x32xbf16>
    %54 = arith.truncf %52 : vector<32x64xf32> to vector<32x64xbf16>
    %cst_34 = arith.constant dense<0.000000e+00> : vector<32x32xf32>
    %55 = tpu.matmul %54, %53, %cst_34 {dimension_numbers = #tpu.dot_dimension_numbers<[1], [0], [0], [1], [0, 0, 1, 1], [], []>} : vector<32x64xbf16>, vector<64x32xbf16>, vector<32x32xf32> -> vector<32x32xf32>
    %c0_35 = arith.constant 0 : index
    %c0_36 = arith.constant 0 : index
    %56 = vector.load %arg11[%c0_35, %c0_36] : memref<64x32xbf16, #tpu.memory_space<vmem>>, vector<64x32xbf16>
    %57 = arith.truncf %46 : vector<32x64xf32> to vector<32x64xbf16>
    %cst_37 = arith.constant dense<0.000000e+00> : vector<32x32xf32>
    %58 = tpu.matmul %57, %56, %cst_37 {dimension_numbers = #tpu.dot_dimension_numbers<[1], [0], [0], [1], [0, 0, 1, 1], [], []>} : vector<32x64xbf16>, vector<64x32xbf16>, vector<32x32xf32> -> vector<32x32xf32>
    %59 = arith.addf %55, %58 : vector<32x32xf32>
    %c0_38 = arith.constant 0 : index
    %c0_39 = arith.constant 0 : index
    %60 = vector.load %arg12[%c0_38, %c0_39] : memref<1x32xf32, #tpu.memory_space<vmem>>, vector<1x32xf32>
    %61 = vector.broadcast %60 : vector<1x32xf32> to vector<32x32xf32>
    %62 = arith.addf %59, %61 : vector<32x32xf32>
    %cst_40 = arith.constant 0.000000e+00 : f32
    %63 = vector.broadcast %cst_40 : f32 to vector<32x32xf32>
    %64 = arith.maximumf %62, %63 : vector<32x32xf32>
    %c4_i32_41 = arith.constant 4 : i32
    %65 = tpu.dynamic_rotate %64 by %c4_i32_41 dim 0 : vector<32x32xf32>, i32 -> vector<32x32xf32>
    %66 = tpu.iota {dimensions = array<i32: 0>} : vector<32x32xi32>
    %c4_i32_42 = arith.constant 4 : i32
    %67 = vector.broadcast %c4_i32_42 : i32 to vector<32x32xi32>
    %68 = arith.cmpi sge, %66, %67 : vector<32x32xi32>
    %cst_43 = arith.constant 0.000000e+00 : f32
    %69 = vector.broadcast %cst_43 : f32 to vector<32x32xf32>
    %70 = arith.select %68, %65, %69 : vector<32x32xi1>, vector<32x32xf32>
    %c0_44 = arith.constant 0 : index
    %c0_45 = arith.constant 0 : index
    %71 = vector.load %arg13[%c0_44, %c0_45] : memref<32x32xbf16, #tpu.memory_space<vmem>>, vector<32x32xbf16>
    %72 = arith.truncf %70 : vector<32x32xf32> to vector<32x32xbf16>
    %cst_46 = arith.constant dense<0.000000e+00> : vector<32x32xf32>
    %73 = tpu.matmul %72, %71, %cst_46 {dimension_numbers = #tpu.dot_dimension_numbers<[1], [0], [0], [1], [0, 0, 1, 1], [], []>} : vector<32x32xbf16>, vector<32x32xbf16>, vector<32x32xf32> -> vector<32x32xf32>
    %c0_47 = arith.constant 0 : index
    %c0_48 = arith.constant 0 : index
    %74 = vector.load %arg14[%c0_47, %c0_48] : memref<32x32xbf16, #tpu.memory_space<vmem>>, vector<32x32xbf16>
    %75 = arith.truncf %64 : vector<32x32xf32> to vector<32x32xbf16>
    %cst_49 = arith.constant dense<0.000000e+00> : vector<32x32xf32>
    %76 = tpu.matmul %75, %74, %cst_49 {dimension_numbers = #tpu.dot_dimension_numbers<[1], [0], [0], [1], [0, 0, 1, 1], [], []>} : vector<32x32xbf16>, vector<32x32xbf16>, vector<32x32xf32> -> vector<32x32xf32>
    %77 = arith.addf %73, %76 : vector<32x32xf32>
    %c0_50 = arith.constant 0 : index
    %c0_51 = arith.constant 0 : index
    %78 = vector.load %arg15[%c0_50, %c0_51] : memref<1x32xf32, #tpu.memory_space<vmem>>, vector<1x32xf32>
    %79 = vector.broadcast %78 : vector<1x32xf32> to vector<32x32xf32>
    %80 = arith.addf %77, %79 : vector<32x32xf32>
    %cst_52 = arith.constant 0.000000e+00 : f32
    %81 = vector.broadcast %cst_52 : f32 to vector<32x32xf32>
    %82 = arith.maximumf %80, %81 : vector<32x32xf32>
    %c0_53 = arith.constant 0 : index
    %c0_54 = arith.constant 0 : index
    %83 = vector.load %arg16[%c0_53, %c0_54] : memref<64x32xbf16, #tpu.memory_space<vmem>>, vector<64x32xbf16>
    %84 = arith.truncf %46 : vector<32x64xf32> to vector<32x64xbf16>
    %cst_55 = arith.constant dense<0.000000e+00> : vector<32x32xf32>
    %85 = tpu.matmul %84, %83, %cst_55 {dimension_numbers = #tpu.dot_dimension_numbers<[1], [0], [0], [1], [0, 0, 1, 1], [], []>} : vector<32x64xbf16>, vector<64x32xbf16>, vector<32x32xf32> -> vector<32x32xf32>
    %c0_56 = arith.constant 0 : index
    %c0_57 = arith.constant 0 : index
    %86 = vector.load %arg17[%c0_56, %c0_57] : memref<1x32xf32, #tpu.memory_space<vmem>>, vector<1x32xf32>
    %87 = vector.broadcast %86 : vector<1x32xf32> to vector<32x32xf32>
    %88 = arith.addf %85, %87 : vector<32x32xf32>
    %89 = arith.addf %82, %88 : vector<32x32xf32>
    %cst_58 = arith.constant 0.000000e+00 : f32
    %90 = vector.broadcast %cst_58 : f32 to vector<32x32xf32>
    %91 = arith.maximumf %89, %90 : vector<32x32xf32>
    %c0_59 = arith.constant 0 : index
    %c0_60 = arith.constant 0 : index
    %92 = vector.load %arg18[%c0_59, %c0_60] : memref<32x12xbf16, #tpu.memory_space<vmem>>, vector<32x12xbf16>
    %93 = arith.truncf %91 : vector<32x32xf32> to vector<32x32xbf16>
    %cst_61 = arith.constant dense<0.000000e+00> : vector<32x12xf32>
    %94 = tpu.matmul %93, %92, %cst_61 {dimension_numbers = #tpu.dot_dimension_numbers<[1], [0], [0], [1], [0, 0, 1, 1], [], []>} : vector<32x32xbf16>, vector<32x12xbf16>, vector<32x12xf32> -> vector<32x12xf32>
    %c0_62 = arith.constant 0 : index
    %c0_63 = arith.constant 0 : index
    %95 = vector.load %arg19[%c0_62, %c0_63] : memref<1x12xf32, #tpu.memory_space<vmem>>, vector<1x12xf32>
    %96 = vector.broadcast %95 : vector<1x12xf32> to vector<32x12xf32>
    %97 = arith.addf %94, %96 : vector<32x12xf32>
    %c0_64 = arith.constant 0 : index
    %c0_65 = arith.constant 0 : index
    %98 = vector.load %arg20[%c0_64, %c0_65] : memref<12x48xbf16, #tpu.memory_space<vmem>>, vector<12x48xbf16>
    %99 = arith.truncf %97 : vector<32x12xf32> to vector<32x12xbf16>
    %cst_66 = arith.constant dense<0.000000e+00> : vector<32x48xf32>
    %100 = tpu.matmul %99, %98, %cst_66 {dimension_numbers = #tpu.dot_dimension_numbers<[1], [0], [0], [1], [0, 0, 1, 1], [], []>} : vector<32x12xbf16>, vector<12x48xbf16>, vector<32x48xf32> -> vector<32x48xf32>
    %c0_67 = arith.constant 0 : index
    %c0_68 = arith.constant 0 : index
    %101 = vector.load %arg21[%c0_67, %c0_68] : memref<1x48xf32, #tpu.memory_space<vmem>>, vector<1x48xf32>
    %102 = vector.broadcast %101 : vector<1x48xf32> to vector<32x48xf32>
    %103 = arith.addf %100, %102 : vector<32x48xf32>
    %104 = vector.shape_cast %103 : vector<32x48xf32> to vector<16x2x48xf32>
    %c0_69 = arith.constant 0 : index
    %c0_70 = arith.constant 0 : index
    %c0_71 = arith.constant 0 : index
    %105 = vector.load %arg27[%c0_69, %c0_70, %c0_71] : memref<16x2x48xf32, #tpu.memory_space<vmem>>, vector<16x2x48xf32>
    tpu.vector_store %arg27[%c0_69, %c0_70, %c0_71], %104 {strides = array<i32>} : memref<16x2x48xf32, #tpu.memory_space<vmem>>, vector<16x2x48xf32>,
    %c0_72 = arith.constant 0 : index
    %c0_73 = arith.constant 0 : index
    %106 = vector.load %arg22[%c0_72, %c0_73] : memref<16x48xf32, #tpu.memory_space<vmem>>, vector<16x48xf32>
    %c0_74 = arith.constant 0 : index
    %c0_75 = arith.constant 0 : index
    %107 = vector.load %arg23[%c0_74, %c0_75] : memref<1x16xf32, #tpu.memory_space<vmem>>, vector<1x16xf32>
    %108 = vector.shape_cast %107 : vector<1x16xf32> to vector<1x16xf32>
    %109 = vector.broadcast %108 : vector<1x16xf32> to vector<2x16xf32>
    %cst_76 = arith.constant 0.000000e+00 : f32
    %110 = vector.broadcast %cst_76 : f32 to vector<2x16xf32>
    %c0_i32 = arith.constant 0 : i32
    %111 = arith.index_cast %c0_i32 : i32 to index
    %c0_77 = arith.constant 0 : index
    %c0_78 = arith.constant 0 : index
    %112 = vector.load %arg27[%111, %c0_77, %c0_78] : memref<16x2x48xf32, #tpu.memory_space<vmem>>, vector<1x2x48xf32>
    %113 = vector.shape_cast %112 : vector<1x2x48xf32> to vector<2x48xf32>
    %cst_79 = arith.constant dense<0.000000e+00> : vector<2x48xf32>
    %114 = tpu.matmul %110, %106, %cst_79 {dimension_numbers = #tpu.dot_dimension_numbers<[1], [0], [0], [1], [0, 0, 1, 1], [], []>} : vector<2x16xf32>, vector<16x48xf32>, vector<2x48xf32> -> vector<2x48xf32>
    %115 = vector.extract_strided_slice %113 {offsets = [0, 0], sizes = [2, 16], strides = [1, 1]} : vector<2x48xf32> to vector<2x16xf32>
    %116 = vector.extract_strided_slice %114 {offsets = [0, 0], sizes = [2, 16], strides = [1, 1]} : vector<2x48xf32> to vector<2x16xf32>
    %117 = arith.addf %115, %116 : vector<2x16xf32>
    %118 = arith.negf %117 : vector<2x16xf32>
    %119 = math.exp %118 : vector<2x16xf32>
    %cst_80 = arith.constant 1.000000e+00 : f32
    %120 = vector.broadcast %cst_80 : f32 to vector<2x16xf32>
    %121 = arith.addf %120, %119 : vector<2x16xf32>
    %122 = arith.divf %120, %121 : vector<2x16xf32>
    %123 = vector.extract_strided_slice %113 {offsets = [0, 16], sizes = [2, 16], strides = [1, 1]} : vector<2x48xf32> to vector<2x16xf32>
    %124 = vector.extract_strided_slice %114 {offsets = [0, 16], sizes = [2, 16], strides = [1, 1]} : vector<2x48xf32> to vector<2x16xf32>
    %125 = arith.addf %123, %124 : vector<2x16xf32>
    %126 = arith.negf %125 : vector<2x16xf32>
    %127 = math.exp %126 : vector<2x16xf32>
    %cst_81 = arith.constant 1.000000e+00 : f32
    %128 = vector.broadcast %cst_81 : f32 to vector<2x16xf32>
    %129 = arith.addf %128, %127 : vector<2x16xf32>
    %130 = arith.divf %128, %129 : vector<2x16xf32>
    %131 = vector.extract_strided_slice %113 {offsets = [0, 32], sizes = [2, 16], strides = [1, 1]} : vector<2x48xf32> to vector<2x16xf32>
    %132 = vector.extract_strided_slice %114 {offsets = [0, 32], sizes = [2, 16], strides = [1, 1]} : vector<2x48xf32> to vector<2x16xf32>
    %133 = arith.addf %132, %109 : vector<2x16xf32>
    %134 = arith.mulf %122, %133 : vector<2x16xf32>
    %135 = arith.addf %131, %134 : vector<2x16xf32>
    %136 = math.tanh %135 : vector<2x16xf32>
    %cst_82 = arith.constant 1.000000e+00 : f32
    %137 = vector.broadcast %cst_82 : f32 to vector<2x16xf32>
    %138 = arith.subf %137, %130 : vector<2x16xf32>
    %139 = arith.mulf %138, %136 : vector<2x16xf32>
    %140 = arith.mulf %130, %110 : vector<2x16xf32>
    %141 = arith.addf %139, %140 : vector<2x16xf32>
    %cst_83 = arith.constant 0.000000e+00 : f32
    %142 = vector.broadcast %cst_83 : f32 to vector<2x16xf32>
    %143 = arith.maximumf %141, %142 : vector<2x16xf32>
    %144 = arith.index_cast %c0_i32 : i32 to index
    %c0_84 = arith.constant 0 : index
    %c0_85 = arith.constant 0 : index
    %145 = vector.load %arg28[%144, %c0_84, %c0_85] : memref<16x2x16xf32, #tpu.memory_space<vmem>>, vector<1x2x16xf32>
    %146 = vector.shape_cast %145 : vector<1x2x16xf32> to vector<2x16xf32>
    %147 = vector.shape_cast %143 : vector<2x16xf32> to vector<1x2x16xf32>
    tpu.vector_store %arg28[%144, %c0_84, %c0_85], %147 {strides = array<i32>} : memref<16x2x16xf32, #tpu.memory_space<vmem>>, vector<1x2x16xf32>,
    %c1_i32 = arith.constant 1 : i32
    %148 = arith.index_cast %c1_i32 : i32 to index
    %c0_86 = arith.constant 0 : index
    %c0_87 = arith.constant 0 : index
    %149 = vector.load %arg27[%148, %c0_86, %c0_87] : memref<16x2x48xf32, #tpu.memory_space<vmem>>, vector<1x2x48xf32>
    %150 = vector.shape_cast %149 : vector<1x2x48xf32> to vector<2x48xf32>
    %cst_88 = arith.constant dense<0.000000e+00> : vector<2x48xf32>
    %151 = tpu.matmul %141, %106, %cst_88 {dimension_numbers = #tpu.dot_dimension_numbers<[1], [0], [0], [1], [0, 0, 1, 1], [], []>} : vector<2x16xf32>, vector<16x48xf32>, vector<2x48xf32> -> vector<2x48xf32>
    %152 = vector.extract_strided_slice %150 {offsets = [0, 0], sizes = [2, 16], strides = [1, 1]} : vector<2x48xf32> to vector<2x16xf32>
    %153 = vector.extract_strided_slice %151 {offsets = [0, 0], sizes = [2, 16], strides = [1, 1]} : vector<2x48xf32> to vector<2x16xf32>
    %154 = arith.addf %152, %153 : vector<2x16xf32>
    %155 = arith.negf %154 : vector<2x16xf32>
    %156 = math.exp %155 : vector<2x16xf32>
    %cst_89 = arith.constant 1.000000e+00 : f32
    %157 = vector.broadcast %cst_89 : f32 to vector<2x16xf32>
    %158 = arith.addf %157, %156 : vector<2x16xf32>
    %159 = arith.divf %157, %158 : vector<2x16xf32>
    %160 = vector.extract_strided_slice %150 {offsets = [0, 16], sizes = [2, 16], strides = [1, 1]} : vector<2x48xf32> to vector<2x16xf32>
    %161 = vector.extract_strided_slice %151 {offsets = [0, 16], sizes = [2, 16], strides = [1, 1]} : vector<2x48xf32> to vector<2x16xf32>
    %162 = arith.addf %160, %161 : vector<2x16xf32>
    %163 = arith.negf %162 : vector<2x16xf32>
    %164 = math.exp %163 : vector<2x16xf32>
    %cst_90 = arith.constant 1.000000e+00 : f32
    %165 = vector.broadcast %cst_90 : f32 to vector<2x16xf32>
    %166 = arith.addf %165, %164 : vector<2x16xf32>
    %167 = arith.divf %165, %166 : vector<2x16xf32>
    %168 = vector.extract_strided_slice %150 {offsets = [0, 32], sizes = [2, 16], strides = [1, 1]} : vector<2x48xf32> to vector<2x16xf32>
    %169 = vector.extract_strided_slice %151 {offsets = [0, 32], sizes = [2, 16], strides = [1, 1]} : vector<2x48xf32> to vector<2x16xf32>
    %170 = arith.addf %169, %109 : vector<2x16xf32>
    %171 = arith.mulf %159, %170 : vector<2x16xf32>
    %172 = arith.addf %168, %171 : vector<2x16xf32>
    %173 = math.tanh %172 : vector<2x16xf32>
    %cst_91 = arith.constant 1.000000e+00 : f32
    %174 = vector.broadcast %cst_91 : f32 to vector<2x16xf32>
    %175 = arith.subf %174, %167 : vector<2x16xf32>
    %176 = arith.mulf %175, %173 : vector<2x16xf32>
    %177 = arith.mulf %167, %141 : vector<2x16xf32>
    %178 = arith.addf %176, %177 : vector<2x16xf32>
    %cst_92 = arith.constant 0.000000e+00 : f32
    %179 = vector.broadcast %cst_92 : f32 to vector<2x16xf32>
    %180 = arith.maximumf %178, %179 : vector<2x16xf32>
    %181 = arith.index_cast %c1_i32 : i32 to index
    %c0_93 = arith.constant 0 : index
    %c0_94 = arith.constant 0 : index
    %182 = vector.load %arg28[%181, %c0_93, %c0_94] : memref<16x2x16xf32, #tpu.memory_space<vmem>>, vector<1x2x16xf32>
    %183 = vector.shape_cast %182 : vector<1x2x16xf32> to vector<2x16xf32>
    %184 = vector.shape_cast %180 : vector<2x16xf32> to vector<1x2x16xf32>
    tpu.vector_store %arg28[%181, %c0_93, %c0_94], %184 {strides = array<i32>} : memref<16x2x16xf32, #tpu.memory_space<vmem>>, vector<1x2x16xf32>,
    %c2_i32_95 = arith.constant 2 : i32
    %185 = arith.index_cast %c2_i32_95 : i32 to index
    %c0_96 = arith.constant 0 : index
    %c0_97 = arith.constant 0 : index
    %186 = vector.load %arg27[%185, %c0_96, %c0_97] : memref<16x2x48xf32, #tpu.memory_space<vmem>>, vector<1x2x48xf32>
    %187 = vector.shape_cast %186 : vector<1x2x48xf32> to vector<2x48xf32>
    %cst_98 = arith.constant dense<0.000000e+00> : vector<2x48xf32>
    %188 = tpu.matmul %178, %106, %cst_98 {dimension_numbers = #tpu.dot_dimension_numbers<[1], [0], [0], [1], [0, 0, 1, 1], [], []>} : vector<2x16xf32>, vector<16x48xf32>, vector<2x48xf32> -> vector<2x48xf32>
    %189 = vector.extract_strided_slice %187 {offsets = [0, 0], sizes = [2, 16], strides = [1, 1]} : vector<2x48xf32> to vector<2x16xf32>
    %190 = vector.extract_strided_slice %188 {offsets = [0, 0], sizes = [2, 16], strides = [1, 1]} : vector<2x48xf32> to vector<2x16xf32>
    %191 = arith.addf %189, %190 : vector<2x16xf32>
    %192 = arith.negf %191 : vector<2x16xf32>
    %193 = math.exp %192 : vector<2x16xf32>
    %cst_99 = arith.constant 1.000000e+00 : f32
    %194 = vector.broadcast %cst_99 : f32 to vector<2x16xf32>
    %195 = arith.addf %194, %193 : vector<2x16xf32>
    %196 = arith.divf %194, %195 : vector<2x16xf32>
    %197 = vector.extract_strided_slice %187 {offsets = [0, 16], sizes = [2, 16], strides = [1, 1]} : vector<2x48xf32> to vector<2x16xf32>
    %198 = vector.extract_strided_slice %188 {offsets = [0, 16], sizes = [2, 16], strides = [1, 1]} : vector<2x48xf32> to vector<2x16xf32>
    %199 = arith.addf %197, %198 : vector<2x16xf32>
    %200 = arith.negf %199 : vector<2x16xf32>
    %201 = math.exp %200 : vector<2x16xf32>
    %cst_100 = arith.constant 1.000000e+00 : f32
    %202 = vector.broadcast %cst_100 : f32 to vector<2x16xf32>
    %203 = arith.addf %202, %201 : vector<2x16xf32>
    %204 = arith.divf %202, %203 : vector<2x16xf32>
    %205 = vector.extract_strided_slice %187 {offsets = [0, 32], sizes = [2, 16], strides = [1, 1]} : vector<2x48xf32> to vector<2x16xf32>
    %206 = vector.extract_strided_slice %188 {offsets = [0, 32], sizes = [2, 16], strides = [1, 1]} : vector<2x48xf32> to vector<2x16xf32>
    %207 = arith.addf %206, %109 : vector<2x16xf32>
    %208 = arith.mulf %196, %207 : vector<2x16xf32>
    %209 = arith.addf %205, %208 : vector<2x16xf32>
    %210 = math.tanh %209 : vector<2x16xf32>
    %cst_101 = arith.constant 1.000000e+00 : f32
    %211 = vector.broadcast %cst_101 : f32 to vector<2x16xf32>
    %212 = arith.subf %211, %204 : vector<2x16xf32>
    %213 = arith.mulf %212, %210 : vector<2x16xf32>
    %214 = arith.mulf %204, %178 : vector<2x16xf32>
    %215 = arith.addf %213, %214 : vector<2x16xf32>
    %cst_102 = arith.constant 0.000000e+00 : f32
    %216 = vector.broadcast %cst_102 : f32 to vector<2x16xf32>
    %217 = arith.maximumf %215, %216 : vector<2x16xf32>
    %218 = arith.index_cast %c2_i32_95 : i32 to index
    %c0_103 = arith.constant 0 : index
    %c0_104 = arith.constant 0 : index
    %219 = vector.load %arg28[%218, %c0_103, %c0_104] : memref<16x2x16xf32, #tpu.memory_space<vmem>>, vector<1x2x16xf32>
    %220 = vector.shape_cast %219 : vector<1x2x16xf32> to vector<2x16xf32>
    %221 = vector.shape_cast %217 : vector<2x16xf32> to vector<1x2x16xf32>
    tpu.vector_store %arg28[%218, %c0_103, %c0_104], %221 {strides = array<i32>} : memref<16x2x16xf32, #tpu.memory_space<vmem>>, vector<1x2x16xf32>,
    %c3_i32 = arith.constant 3 : i32
    %222 = arith.index_cast %c3_i32 : i32 to index
    %c0_105 = arith.constant 0 : index
    %c0_106 = arith.constant 0 : index
    %223 = vector.load %arg27[%222, %c0_105, %c0_106] : memref<16x2x48xf32, #tpu.memory_space<vmem>>, vector<1x2x48xf32>
    %224 = vector.shape_cast %223 : vector<1x2x48xf32> to vector<2x48xf32>
    %cst_107 = arith.constant dense<0.000000e+00> : vector<2x48xf32>
    %225 = tpu.matmul %215, %106, %cst_107 {dimension_numbers = #tpu.dot_dimension_numbers<[1], [0], [0], [1], [0, 0, 1, 1], [], []>} : vector<2x16xf32>, vector<16x48xf32>, vector<2x48xf32> -> vector<2x48xf32>
    %226 = vector.extract_strided_slice %224 {offsets = [0, 0], sizes = [2, 16], strides = [1, 1]} : vector<2x48xf32> to vector<2x16xf32>
    %227 = vector.extract_strided_slice %225 {offsets = [0, 0], sizes = [2, 16], strides = [1, 1]} : vector<2x48xf32> to vector<2x16xf32>
    %228 = arith.addf %226, %227 : vector<2x16xf32>
    %229 = arith.negf %228 : vector<2x16xf32>
    %230 = math.exp %229 : vector<2x16xf32>
    %cst_108 = arith.constant 1.000000e+00 : f32
    %231 = vector.broadcast %cst_108 : f32 to vector<2x16xf32>
    %232 = arith.addf %231, %230 : vector<2x16xf32>
    %233 = arith.divf %231, %232 : vector<2x16xf32>
    %234 = vector.extract_strided_slice %224 {offsets = [0, 16], sizes = [2, 16], strides = [1, 1]} : vector<2x48xf32> to vector<2x16xf32>
    %235 = vector.extract_strided_slice %225 {offsets = [0, 16], sizes = [2, 16], strides = [1, 1]} : vector<2x48xf32> to vector<2x16xf32>
    %236 = arith.addf %234, %235 : vector<2x16xf32>
    %237 = arith.negf %236 : vector<2x16xf32>
    %238 = math.exp %237 : vector<2x16xf32>
    %cst_109 = arith.constant 1.000000e+00 : f32
    %239 = vector.broadcast %cst_109 : f32 to vector<2x16xf32>
    %240 = arith.addf %239, %238 : vector<2x16xf32>
    %241 = arith.divf %239, %240 : vector<2x16xf32>
    %242 = vector.extract_strided_slice %224 {offsets = [0, 32], sizes = [2, 16], strides = [1, 1]} : vector<2x48xf32> to vector<2x16xf32>
    %243 = vector.extract_strided_slice %225 {offsets = [0, 32], sizes = [2, 16], strides = [1, 1]} : vector<2x48xf32> to vector<2x16xf32>
    %244 = arith.addf %243, %109 : vector<2x16xf32>
    %245 = arith.mulf %233, %244 : vector<2x16xf32>
    %246 = arith.addf %242, %245 : vector<2x16xf32>
    %247 = math.tanh %246 : vector<2x16xf32>
    %cst_110 = arith.constant 1.000000e+00 : f32
    %248 = vector.broadcast %cst_110 : f32 to vector<2x16xf32>
    %249 = arith.subf %248, %241 : vector<2x16xf32>
    %250 = arith.mulf %249, %247 : vector<2x16xf32>
    %251 = arith.mulf %241, %215 : vector<2x16xf32>
    %252 = arith.addf %250, %251 : vector<2x16xf32>
    %cst_111 = arith.constant 0.000000e+00 : f32
    %253 = vector.broadcast %cst_111 : f32 to vector<2x16xf32>
    %254 = arith.maximumf %252, %253 : vector<2x16xf32>
    %255 = arith.index_cast %c3_i32 : i32 to index
    %c0_112 = arith.constant 0 : index
    %c0_113 = arith.constant 0 : index
    %256 = vector.load %arg28[%255, %c0_112, %c0_113] : memref<16x2x16xf32, #tpu.memory_space<vmem>>, vector<1x2x16xf32>
    %257 = vector.shape_cast %256 : vector<1x2x16xf32> to vector<2x16xf32>
    %258 = vector.shape_cast %254 : vector<2x16xf32> to vector<1x2x16xf32>
    tpu.vector_store %arg28[%255, %c0_112, %c0_113], %258 {strides = array<i32>} : memref<16x2x16xf32, #tpu.memory_space<vmem>>, vector<1x2x16xf32>,
    %c4_i32_114 = arith.constant 4 : i32
    %259 = arith.index_cast %c4_i32_114 : i32 to index
    %c0_115 = arith.constant 0 : index
    %c0_116 = arith.constant 0 : index
    %260 = vector.load %arg27[%259, %c0_115, %c0_116] : memref<16x2x48xf32, #tpu.memory_space<vmem>>, vector<1x2x48xf32>
    %261 = vector.shape_cast %260 : vector<1x2x48xf32> to vector<2x48xf32>
    %cst_117 = arith.constant dense<0.000000e+00> : vector<2x48xf32>
    %262 = tpu.matmul %252, %106, %cst_117 {dimension_numbers = #tpu.dot_dimension_numbers<[1], [0], [0], [1], [0, 0, 1, 1], [], []>} : vector<2x16xf32>, vector<16x48xf32>, vector<2x48xf32> -> vector<2x48xf32>
    %263 = vector.extract_strided_slice %261 {offsets = [0, 0], sizes = [2, 16], strides = [1, 1]} : vector<2x48xf32> to vector<2x16xf32>
    %264 = vector.extract_strided_slice %262 {offsets = [0, 0], sizes = [2, 16], strides = [1, 1]} : vector<2x48xf32> to vector<2x16xf32>
    %265 = arith.addf %263, %264 : vector<2x16xf32>
    %266 = arith.negf %265 : vector<2x16xf32>
    %267 = math.exp %266 : vector<2x16xf32>
    %cst_118 = arith.constant 1.000000e+00 : f32
    %268 = vector.broadcast %cst_118 : f32 to vector<2x16xf32>
    %269 = arith.addf %268, %267 : vector<2x16xf32>
    %270 = arith.divf %268, %269 : vector<2x16xf32>
    %271 = vector.extract_strided_slice %261 {offsets = [0, 16], sizes = [2, 16], strides = [1, 1]} : vector<2x48xf32> to vector<2x16xf32>
    %272 = vector.extract_strided_slice %262 {offsets = [0, 16], sizes = [2, 16], strides = [1, 1]} : vector<2x48xf32> to vector<2x16xf32>
    %273 = arith.addf %271, %272 : vector<2x16xf32>
    %274 = arith.negf %273 : vector<2x16xf32>
    %275 = math.exp %274 : vector<2x16xf32>
    %cst_119 = arith.constant 1.000000e+00 : f32
    %276 = vector.broadcast %cst_119 : f32 to vector<2x16xf32>
    %277 = arith.addf %276, %275 : vector<2x16xf32>
    %278 = arith.divf %276, %277 : vector<2x16xf32>
    %279 = vector.extract_strided_slice %261 {offsets = [0, 32], sizes = [2, 16], strides = [1, 1]} : vector<2x48xf32> to vector<2x16xf32>
    %280 = vector.extract_strided_slice %262 {offsets = [0, 32], sizes = [2, 16], strides = [1, 1]} : vector<2x48xf32> to vector<2x16xf32>
    %281 = arith.addf %280, %109 : vector<2x16xf32>
    %282 = arith.mulf %270, %281 : vector<2x16xf32>
    %283 = arith.addf %279, %282 : vector<2x16xf32>
    %284 = math.tanh %283 : vector<2x16xf32>
    %cst_120 = arith.constant 1.000000e+00 : f32
    %285 = vector.broadcast %cst_120 : f32 to vector<2x16xf32>
    %286 = arith.subf %285, %278 : vector<2x16xf32>
    %287 = arith.mulf %286, %284 : vector<2x16xf32>
    %288 = arith.mulf %278, %252 : vector<2x16xf32>
    %289 = arith.addf %287, %288 : vector<2x16xf32>
    %cst_121 = arith.constant 0.000000e+00 : f32
    %290 = vector.broadcast %cst_121 : f32 to vector<2x16xf32>
    %291 = arith.maximumf %289, %290 : vector<2x16xf32>
    %292 = arith.index_cast %c4_i32_114 : i32 to index
    %c0_122 = arith.constant 0 : index
    %c0_123 = arith.constant 0 : index
    %293 = vector.load %arg28[%292, %c0_122, %c0_123] : memref<16x2x16xf32, #tpu.memory_space<vmem>>, vector<1x2x16xf32>
    %294 = vector.shape_cast %293 : vector<1x2x16xf32> to vector<2x16xf32>
    %295 = vector.shape_cast %291 : vector<2x16xf32> to vector<1x2x16xf32>
    tpu.vector_store %arg28[%292, %c0_122, %c0_123], %295 {strides = array<i32>} : memref<16x2x16xf32, #tpu.memory_space<vmem>>, vector<1x2x16xf32>,
    %c5_i32 = arith.constant 5 : i32
    %296 = arith.index_cast %c5_i32 : i32 to index
    %c0_124 = arith.constant 0 : index
    %c0_125 = arith.constant 0 : index
    %297 = vector.load %arg27[%296, %c0_124, %c0_125] : memref<16x2x48xf32, #tpu.memory_space<vmem>>, vector<1x2x48xf32>
    %298 = vector.shape_cast %297 : vector<1x2x48xf32> to vector<2x48xf32>
    %cst_126 = arith.constant dense<0.000000e+00> : vector<2x48xf32>
    %299 = tpu.matmul %289, %106, %cst_126 {dimension_numbers = #tpu.dot_dimension_numbers<[1], [0], [0], [1], [0, 0, 1, 1], [], []>} : vector<2x16xf32>, vector<16x48xf32>, vector<2x48xf32> -> vector<2x48xf32>
    %300 = vector.extract_strided_slice %298 {offsets = [0, 0], sizes = [2, 16], strides = [1, 1]} : vector<2x48xf32> to vector<2x16xf32>
    %301 = vector.extract_strided_slice %299 {offsets = [0, 0], sizes = [2, 16], strides = [1, 1]} : vector<2x48xf32> to vector<2x16xf32>
    %302 = arith.addf %300, %301 : vector<2x16xf32>
    %303 = arith.negf %302 : vector<2x16xf32>
    %304 = math.exp %303 : vector<2x16xf32>
    %cst_127 = arith.constant 1.000000e+00 : f32
    %305 = vector.broadcast %cst_127 : f32 to vector<2x16xf32>
    %306 = arith.addf %305, %304 : vector<2x16xf32>
    %307 = arith.divf %305, %306 : vector<2x16xf32>
    %308 = vector.extract_strided_slice %298 {offsets = [0, 16], sizes = [2, 16], strides = [1, 1]} : vector<2x48xf32> to vector<2x16xf32>
    %309 = vector.extract_strided_slice %299 {offsets = [0, 16], sizes = [2, 16], strides = [1, 1]} : vector<2x48xf32> to vector<2x16xf32>
    %310 = arith.addf %308, %309 : vector<2x16xf32>
    %311 = arith.negf %310 : vector<2x16xf32>
    %312 = math.exp %311 : vector<2x16xf32>
    %cst_128 = arith.constant 1.000000e+00 : f32
    %313 = vector.broadcast %cst_128 : f32 to vector<2x16xf32>
    %314 = arith.addf %313, %312 : vector<2x16xf32>
    %315 = arith.divf %313, %314 : vector<2x16xf32>
    %316 = vector.extract_strided_slice %298 {offsets = [0, 32], sizes = [2, 16], strides = [1, 1]} : vector<2x48xf32> to vector<2x16xf32>
    %317 = vector.extract_strided_slice %299 {offsets = [0, 32], sizes = [2, 16], strides = [1, 1]} : vector<2x48xf32> to vector<2x16xf32>
    %318 = arith.addf %317, %109 : vector<2x16xf32>
    %319 = arith.mulf %307, %318 : vector<2x16xf32>
    %320 = arith.addf %316, %319 : vector<2x16xf32>
    %321 = math.tanh %320 : vector<2x16xf32>
    %cst_129 = arith.constant 1.000000e+00 : f32
    %322 = vector.broadcast %cst_129 : f32 to vector<2x16xf32>
    %323 = arith.subf %322, %315 : vector<2x16xf32>
    %324 = arith.mulf %323, %321 : vector<2x16xf32>
    %325 = arith.mulf %315, %289 : vector<2x16xf32>
    %326 = arith.addf %324, %325 : vector<2x16xf32>
    %cst_130 = arith.constant 0.000000e+00 : f32
    %327 = vector.broadcast %cst_130 : f32 to vector<2x16xf32>
    %328 = arith.maximumf %326, %327 : vector<2x16xf32>
    %329 = arith.index_cast %c5_i32 : i32 to index
    %c0_131 = arith.constant 0 : index
    %c0_132 = arith.constant 0 : index
    %330 = vector.load %arg28[%329, %c0_131, %c0_132] : memref<16x2x16xf32, #tpu.memory_space<vmem>>, vector<1x2x16xf32>
    %331 = vector.shape_cast %330 : vector<1x2x16xf32> to vector<2x16xf32>
    %332 = vector.shape_cast %328 : vector<2x16xf32> to vector<1x2x16xf32>
    tpu.vector_store %arg28[%329, %c0_131, %c0_132], %332 {strides = array<i32>} : memref<16x2x16xf32, #tpu.memory_space<vmem>>, vector<1x2x16xf32>,
    %c6_i32 = arith.constant 6 : i32
    %333 = arith.index_cast %c6_i32 : i32 to index
    %c0_133 = arith.constant 0 : index
    %c0_134 = arith.constant 0 : index
    %334 = vector.load %arg27[%333, %c0_133, %c0_134] : memref<16x2x48xf32, #tpu.memory_space<vmem>>, vector<1x2x48xf32>
    %335 = vector.shape_cast %334 : vector<1x2x48xf32> to vector<2x48xf32>
    %cst_135 = arith.constant dense<0.000000e+00> : vector<2x48xf32>
    %336 = tpu.matmul %326, %106, %cst_135 {dimension_numbers = #tpu.dot_dimension_numbers<[1], [0], [0], [1], [0, 0, 1, 1], [], []>} : vector<2x16xf32>, vector<16x48xf32>, vector<2x48xf32> -> vector<2x48xf32>
    %337 = vector.extract_strided_slice %335 {offsets = [0, 0], sizes = [2, 16], strides = [1, 1]} : vector<2x48xf32> to vector<2x16xf32>
    %338 = vector.extract_strided_slice %336 {offsets = [0, 0], sizes = [2, 16], strides = [1, 1]} : vector<2x48xf32> to vector<2x16xf32>
    %339 = arith.addf %337, %338 : vector<2x16xf32>
    %340 = arith.negf %339 : vector<2x16xf32>
    %341 = math.exp %340 : vector<2x16xf32>
    %cst_136 = arith.constant 1.000000e+00 : f32
    %342 = vector.broadcast %cst_136 : f32 to vector<2x16xf32>
    %343 = arith.addf %342, %341 : vector<2x16xf32>
    %344 = arith.divf %342, %343 : vector<2x16xf32>
    %345 = vector.extract_strided_slice %335 {offsets = [0, 16], sizes = [2, 16], strides = [1, 1]} : vector<2x48xf32> to vector<2x16xf32>
    %346 = vector.extract_strided_slice %336 {offsets = [0, 16], sizes = [2, 16], strides = [1, 1]} : vector<2x48xf32> to vector<2x16xf32>
    %347 = arith.addf %345, %346 : vector<2x16xf32>
    %348 = arith.negf %347 : vector<2x16xf32>
    %349 = math.exp %348 : vector<2x16xf32>
    %cst_137 = arith.constant 1.000000e+00 : f32
    %350 = vector.broadcast %cst_137 : f32 to vector<2x16xf32>
    %351 = arith.addf %350, %349 : vector<2x16xf32>
    %352 = arith.divf %350, %351 : vector<2x16xf32>
    %353 = vector.extract_strided_slice %335 {offsets = [0, 32], sizes = [2, 16], strides = [1, 1]} : vector<2x48xf32> to vector<2x16xf32>
    %354 = vector.extract_strided_slice %336 {offsets = [0, 32], sizes = [2, 16], strides = [1, 1]} : vector<2x48xf32> to vector<2x16xf32>
    %355 = arith.addf %354, %109 : vector<2x16xf32>
    %356 = arith.mulf %344, %355 : vector<2x16xf32>
    %357 = arith.addf %353, %356 : vector<2x16xf32>
    %358 = math.tanh %357 : vector<2x16xf32>
    %cst_138 = arith.constant 1.000000e+00 : f32
    %359 = vector.broadcast %cst_138 : f32 to vector<2x16xf32>
    %360 = arith.subf %359, %352 : vector<2x16xf32>
    %361 = arith.mulf %360, %358 : vector<2x16xf32>
    %362 = arith.mulf %352, %326 : vector<2x16xf32>
    %363 = arith.addf %361, %362 : vector<2x16xf32>
    %cst_139 = arith.constant 0.000000e+00 : f32
    %364 = vector.broadcast %cst_139 : f32 to vector<2x16xf32>
    %365 = arith.maximumf %363, %364 : vector<2x16xf32>
    %366 = arith.index_cast %c6_i32 : i32 to index
    %c0_140 = arith.constant 0 : index
    %c0_141 = arith.constant 0 : index
    %367 = vector.load %arg28[%366, %c0_140, %c0_141] : memref<16x2x16xf32, #tpu.memory_space<vmem>>, vector<1x2x16xf32>
    %368 = vector.shape_cast %367 : vector<1x2x16xf32> to vector<2x16xf32>
    %369 = vector.shape_cast %365 : vector<2x16xf32> to vector<1x2x16xf32>
    tpu.vector_store %arg28[%366, %c0_140, %c0_141], %369 {strides = array<i32>} : memref<16x2x16xf32, #tpu.memory_space<vmem>>, vector<1x2x16xf32>,
    %c7_i32 = arith.constant 7 : i32
    %370 = arith.index_cast %c7_i32 : i32 to index
    %c0_142 = arith.constant 0 : index
    %c0_143 = arith.constant 0 : index
    %371 = vector.load %arg27[%370, %c0_142, %c0_143] : memref<16x2x48xf32, #tpu.memory_space<vmem>>, vector<1x2x48xf32>
    %372 = vector.shape_cast %371 : vector<1x2x48xf32> to vector<2x48xf32>
    %cst_144 = arith.constant dense<0.000000e+00> : vector<2x48xf32>
    %373 = tpu.matmul %363, %106, %cst_144 {dimension_numbers = #tpu.dot_dimension_numbers<[1], [0], [0], [1], [0, 0, 1, 1], [], []>} : vector<2x16xf32>, vector<16x48xf32>, vector<2x48xf32> -> vector<2x48xf32>
    %374 = vector.extract_strided_slice %372 {offsets = [0, 0], sizes = [2, 16], strides = [1, 1]} : vector<2x48xf32> to vector<2x16xf32>
    %375 = vector.extract_strided_slice %373 {offsets = [0, 0], sizes = [2, 16], strides = [1, 1]} : vector<2x48xf32> to vector<2x16xf32>
    %376 = arith.addf %374, %375 : vector<2x16xf32>
    %377 = arith.negf %376 : vector<2x16xf32>
    %378 = math.exp %377 : vector<2x16xf32>
    %cst_145 = arith.constant 1.000000e+00 : f32
    %379 = vector.broadcast %cst_145 : f32 to vector<2x16xf32>
    %380 = arith.addf %379, %378 : vector<2x16xf32>
    %381 = arith.divf %379, %380 : vector<2x16xf32>
    %382 = vector.extract_strided_slice %372 {offsets = [0, 16], sizes = [2, 16], strides = [1, 1]} : vector<2x48xf32> to vector<2x16xf32>
    %383 = vector.extract_strided_slice %373 {offsets = [0, 16], sizes = [2, 16], strides = [1, 1]} : vector<2x48xf32> to vector<2x16xf32>
    %384 = arith.addf %382, %383 : vector<2x16xf32>
    %385 = arith.negf %384 : vector<2x16xf32>
    %386 = math.exp %385 : vector<2x16xf32>
    %cst_146 = arith.constant 1.000000e+00 : f32
    %387 = vector.broadcast %cst_146 : f32 to vector<2x16xf32>
    %388 = arith.addf %387, %386 : vector<2x16xf32>
    %389 = arith.divf %387, %388 : vector<2x16xf32>
    %390 = vector.extract_strided_slice %372 {offsets = [0, 32], sizes = [2, 16], strides = [1, 1]} : vector<2x48xf32> to vector<2x16xf32>
    %391 = vector.extract_strided_slice %373 {offsets = [0, 32], sizes = [2, 16], strides = [1, 1]} : vector<2x48xf32> to vector<2x16xf32>
    %392 = arith.addf %391, %109 : vector<2x16xf32>
    %393 = arith.mulf %381, %392 : vector<2x16xf32>
    %394 = arith.addf %390, %393 : vector<2x16xf32>
    %395 = math.tanh %394 : vector<2x16xf32>
    %cst_147 = arith.constant 1.000000e+00 : f32
    %396 = vector.broadcast %cst_147 : f32 to vector<2x16xf32>
    %397 = arith.subf %396, %389 : vector<2x16xf32>
    %398 = arith.mulf %397, %395 : vector<2x16xf32>
    %399 = arith.mulf %389, %363 : vector<2x16xf32>
    %400 = arith.addf %398, %399 : vector<2x16xf32>
    %cst_148 = arith.constant 0.000000e+00 : f32
    %401 = vector.broadcast %cst_148 : f32 to vector<2x16xf32>
    %402 = arith.maximumf %400, %401 : vector<2x16xf32>
    %403 = arith.index_cast %c7_i32 : i32 to index
    %c0_149 = arith.constant 0 : index
    %c0_150 = arith.constant 0 : index
    %404 = vector.load %arg28[%403, %c0_149, %c0_150] : memref<16x2x16xf32, #tpu.memory_space<vmem>>, vector<1x2x16xf32>
    %405 = vector.shape_cast %404 : vector<1x2x16xf32> to vector<2x16xf32>
    %406 = vector.shape_cast %402 : vector<2x16xf32> to vector<1x2x16xf32>
    tpu.vector_store %arg28[%403, %c0_149, %c0_150], %406 {strides = array<i32>} : memref<16x2x16xf32, #tpu.memory_space<vmem>>, vector<1x2x16xf32>,
    %c8_i32 = arith.constant 8 : i32
    %407 = arith.index_cast %c8_i32 : i32 to index
    %c0_151 = arith.constant 0 : index
    %c0_152 = arith.constant 0 : index
    %408 = vector.load %arg27[%407, %c0_151, %c0_152] : memref<16x2x48xf32, #tpu.memory_space<vmem>>, vector<1x2x48xf32>
    %409 = vector.shape_cast %408 : vector<1x2x48xf32> to vector<2x48xf32>
    %cst_153 = arith.constant dense<0.000000e+00> : vector<2x48xf32>
    %410 = tpu.matmul %400, %106, %cst_153 {dimension_numbers = #tpu.dot_dimension_numbers<[1], [0], [0], [1], [0, 0, 1, 1], [], []>} : vector<2x16xf32>, vector<16x48xf32>, vector<2x48xf32> -> vector<2x48xf32>
    %411 = vector.extract_strided_slice %409 {offsets = [0, 0], sizes = [2, 16], strides = [1, 1]} : vector<2x48xf32> to vector<2x16xf32>
    %412 = vector.extract_strided_slice %410 {offsets = [0, 0], sizes = [2, 16], strides = [1, 1]} : vector<2x48xf32> to vector<2x16xf32>
    %413 = arith.addf %411, %412 : vector<2x16xf32>
    %414 = arith.negf %413 : vector<2x16xf32>
    %415 = math.exp %414 : vector<2x16xf32>
    %cst_154 = arith.constant 1.000000e+00 : f32
    %416 = vector.broadcast %cst_154 : f32 to vector<2x16xf32>
    %417 = arith.addf %416, %415 : vector<2x16xf32>
    %418 = arith.divf %416, %417 : vector<2x16xf32>
    %419 = vector.extract_strided_slice %409 {offsets = [0, 16], sizes = [2, 16], strides = [1, 1]} : vector<2x48xf32> to vector<2x16xf32>
    %420 = vector.extract_strided_slice %410 {offsets = [0, 16], sizes = [2, 16], strides = [1, 1]} : vector<2x48xf32> to vector<2x16xf32>
    %421 = arith.addf %419, %420 : vector<2x16xf32>
    %422 = arith.negf %421 : vector<2x16xf32>
    %423 = math.exp %422 : vector<2x16xf32>
    %cst_155 = arith.constant 1.000000e+00 : f32
    %424 = vector.broadcast %cst_155 : f32 to vector<2x16xf32>
    %425 = arith.addf %424, %423 : vector<2x16xf32>
    %426 = arith.divf %424, %425 : vector<2x16xf32>
    %427 = vector.extract_strided_slice %409 {offsets = [0, 32], sizes = [2, 16], strides = [1, 1]} : vector<2x48xf32> to vector<2x16xf32>
    %428 = vector.extract_strided_slice %410 {offsets = [0, 32], sizes = [2, 16], strides = [1, 1]} : vector<2x48xf32> to vector<2x16xf32>
    %429 = arith.addf %428, %109 : vector<2x16xf32>
    %430 = arith.mulf %418, %429 : vector<2x16xf32>
    %431 = arith.addf %427, %430 : vector<2x16xf32>
    %432 = math.tanh %431 : vector<2x16xf32>
    %cst_156 = arith.constant 1.000000e+00 : f32
    %433 = vector.broadcast %cst_156 : f32 to vector<2x16xf32>
    %434 = arith.subf %433, %426 : vector<2x16xf32>
    %435 = arith.mulf %434, %432 : vector<2x16xf32>
    %436 = arith.mulf %426, %400 : vector<2x16xf32>
    %437 = arith.addf %435, %436 : vector<2x16xf32>
    %cst_157 = arith.constant 0.000000e+00 : f32
    %438 = vector.broadcast %cst_157 : f32 to vector<2x16xf32>
    %439 = arith.maximumf %437, %438 : vector<2x16xf32>
    %440 = arith.index_cast %c8_i32 : i32 to index
    %c0_158 = arith.constant 0 : index
    %c0_159 = arith.constant 0 : index
    %441 = vector.load %arg28[%440, %c0_158, %c0_159] : memref<16x2x16xf32, #tpu.memory_space<vmem>>, vector<1x2x16xf32>
    %442 = vector.shape_cast %441 : vector<1x2x16xf32> to vector<2x16xf32>
    %443 = vector.shape_cast %439 : vector<2x16xf32> to vector<1x2x16xf32>
    tpu.vector_store %arg28[%440, %c0_158, %c0_159], %443 {strides = array<i32>} : memref<16x2x16xf32, #tpu.memory_space<vmem>>, vector<1x2x16xf32>,
    %c9_i32 = arith.constant 9 : i32
    %444 = arith.index_cast %c9_i32 : i32 to index
    %c0_160 = arith.constant 0 : index
    %c0_161 = arith.constant 0 : index
    %445 = vector.load %arg27[%444, %c0_160, %c0_161] : memref<16x2x48xf32, #tpu.memory_space<vmem>>, vector<1x2x48xf32>
    %446 = vector.shape_cast %445 : vector<1x2x48xf32> to vector<2x48xf32>
    %cst_162 = arith.constant dense<0.000000e+00> : vector<2x48xf32>
    %447 = tpu.matmul %437, %106, %cst_162 {dimension_numbers = #tpu.dot_dimension_numbers<[1], [0], [0], [1], [0, 0, 1, 1], [], []>} : vector<2x16xf32>, vector<16x48xf32>, vector<2x48xf32> -> vector<2x48xf32>
    %448 = vector.extract_strided_slice %446 {offsets = [0, 0], sizes = [2, 16], strides = [1, 1]} : vector<2x48xf32> to vector<2x16xf32>
    %449 = vector.extract_strided_slice %447 {offsets = [0, 0], sizes = [2, 16], strides = [1, 1]} : vector<2x48xf32> to vector<2x16xf32>
    %450 = arith.addf %448, %449 : vector<2x16xf32>
    %451 = arith.negf %450 : vector<2x16xf32>
    %452 = math.exp %451 : vector<2x16xf32>
    %cst_163 = arith.constant 1.000000e+00 : f32
    %453 = vector.broadcast %cst_163 : f32 to vector<2x16xf32>
    %454 = arith.addf %453, %452 : vector<2x16xf32>
    %455 = arith.divf %453, %454 : vector<2x16xf32>
    %456 = vector.extract_strided_slice %446 {offsets = [0, 16], sizes = [2, 16], strides = [1, 1]} : vector<2x48xf32> to vector<2x16xf32>
    %457 = vector.extract_strided_slice %447 {offsets = [0, 16], sizes = [2, 16], strides = [1, 1]} : vector<2x48xf32> to vector<2x16xf32>
    %458 = arith.addf %456, %457 : vector<2x16xf32>
    %459 = arith.negf %458 : vector<2x16xf32>
    %460 = math.exp %459 : vector<2x16xf32>
    %cst_164 = arith.constant 1.000000e+00 : f32
    %461 = vector.broadcast %cst_164 : f32 to vector<2x16xf32>
    %462 = arith.addf %461, %460 : vector<2x16xf32>
    %463 = arith.divf %461, %462 : vector<2x16xf32>
    %464 = vector.extract_strided_slice %446 {offsets = [0, 32], sizes = [2, 16], strides = [1, 1]} : vector<2x48xf32> to vector<2x16xf32>
    %465 = vector.extract_strided_slice %447 {offsets = [0, 32], sizes = [2, 16], strides = [1, 1]} : vector<2x48xf32> to vector<2x16xf32>
    %466 = arith.addf %465, %109 : vector<2x16xf32>
    %467 = arith.mulf %455, %466 : vector<2x16xf32>
    %468 = arith.addf %464, %467 : vector<2x16xf32>
    %469 = math.tanh %468 : vector<2x16xf32>
    %cst_165 = arith.constant 1.000000e+00 : f32
    %470 = vector.broadcast %cst_165 : f32 to vector<2x16xf32>
    %471 = arith.subf %470, %463 : vector<2x16xf32>
    %472 = arith.mulf %471, %469 : vector<2x16xf32>
    %473 = arith.mulf %463, %437 : vector<2x16xf32>
    %474 = arith.addf %472, %473 : vector<2x16xf32>
    %cst_166 = arith.constant 0.000000e+00 : f32
    %475 = vector.broadcast %cst_166 : f32 to vector<2x16xf32>
    %476 = arith.maximumf %474, %475 : vector<2x16xf32>
    %477 = arith.index_cast %c9_i32 : i32 to index
    %c0_167 = arith.constant 0 : index
    %c0_168 = arith.constant 0 : index
    %478 = vector.load %arg28[%477, %c0_167, %c0_168] : memref<16x2x16xf32, #tpu.memory_space<vmem>>, vector<1x2x16xf32>
    %479 = vector.shape_cast %478 : vector<1x2x16xf32> to vector<2x16xf32>
    %480 = vector.shape_cast %476 : vector<2x16xf32> to vector<1x2x16xf32>
    tpu.vector_store %arg28[%477, %c0_167, %c0_168], %480 {strides = array<i32>} : memref<16x2x16xf32, #tpu.memory_space<vmem>>, vector<1x2x16xf32>,
    %c10_i32 = arith.constant 10 : i32
    %481 = arith.index_cast %c10_i32 : i32 to index
    %c0_169 = arith.constant 0 : index
    %c0_170 = arith.constant 0 : index
    %482 = vector.load %arg27[%481, %c0_169, %c0_170] : memref<16x2x48xf32, #tpu.memory_space<vmem>>, vector<1x2x48xf32>
    %483 = vector.shape_cast %482 : vector<1x2x48xf32> to vector<2x48xf32>
    %cst_171 = arith.constant dense<0.000000e+00> : vector<2x48xf32>
    %484 = tpu.matmul %474, %106, %cst_171 {dimension_numbers = #tpu.dot_dimension_numbers<[1], [0], [0], [1], [0, 0, 1, 1], [], []>} : vector<2x16xf32>, vector<16x48xf32>, vector<2x48xf32> -> vector<2x48xf32>
    %485 = vector.extract_strided_slice %483 {offsets = [0, 0], sizes = [2, 16], strides = [1, 1]} : vector<2x48xf32> to vector<2x16xf32>
    %486 = vector.extract_strided_slice %484 {offsets = [0, 0], sizes = [2, 16], strides = [1, 1]} : vector<2x48xf32> to vector<2x16xf32>
    %487 = arith.addf %485, %486 : vector<2x16xf32>
    %488 = arith.negf %487 : vector<2x16xf32>
    %489 = math.exp %488 : vector<2x16xf32>
    %cst_172 = arith.constant 1.000000e+00 : f32
    %490 = vector.broadcast %cst_172 : f32 to vector<2x16xf32>
    %491 = arith.addf %490, %489 : vector<2x16xf32>
    %492 = arith.divf %490, %491 : vector<2x16xf32>
    %493 = vector.extract_strided_slice %483 {offsets = [0, 16], sizes = [2, 16], strides = [1, 1]} : vector<2x48xf32> to vector<2x16xf32>
    %494 = vector.extract_strided_slice %484 {offsets = [0, 16], sizes = [2, 16], strides = [1, 1]} : vector<2x48xf32> to vector<2x16xf32>
    %495 = arith.addf %493, %494 : vector<2x16xf32>
    %496 = arith.negf %495 : vector<2x16xf32>
    %497 = math.exp %496 : vector<2x16xf32>
    %cst_173 = arith.constant 1.000000e+00 : f32
    %498 = vector.broadcast %cst_173 : f32 to vector<2x16xf32>
    %499 = arith.addf %498, %497 : vector<2x16xf32>
    %500 = arith.divf %498, %499 : vector<2x16xf32>
    %501 = vector.extract_strided_slice %483 {offsets = [0, 32], sizes = [2, 16], strides = [1, 1]} : vector<2x48xf32> to vector<2x16xf32>
    %502 = vector.extract_strided_slice %484 {offsets = [0, 32], sizes = [2, 16], strides = [1, 1]} : vector<2x48xf32> to vector<2x16xf32>
    %503 = arith.addf %502, %109 : vector<2x16xf32>
    %504 = arith.mulf %492, %503 : vector<2x16xf32>
    %505 = arith.addf %501, %504 : vector<2x16xf32>
    %506 = math.tanh %505 : vector<2x16xf32>
    %cst_174 = arith.constant 1.000000e+00 : f32
    %507 = vector.broadcast %cst_174 : f32 to vector<2x16xf32>
    %508 = arith.subf %507, %500 : vector<2x16xf32>
    %509 = arith.mulf %508, %506 : vector<2x16xf32>
    %510 = arith.mulf %500, %474 : vector<2x16xf32>
    %511 = arith.addf %509, %510 : vector<2x16xf32>
    %cst_175 = arith.constant 0.000000e+00 : f32
    %512 = vector.broadcast %cst_175 : f32 to vector<2x16xf32>
    %513 = arith.maximumf %511, %512 : vector<2x16xf32>
    %514 = arith.index_cast %c10_i32 : i32 to index
    %c0_176 = arith.constant 0 : index
    %c0_177 = arith.constant 0 : index
    %515 = vector.load %arg28[%514, %c0_176, %c0_177] : memref<16x2x16xf32, #tpu.memory_space<vmem>>, vector<1x2x16xf32>
    %516 = vector.shape_cast %515 : vector<1x2x16xf32> to vector<2x16xf32>
    %517 = vector.shape_cast %513 : vector<2x16xf32> to vector<1x2x16xf32>
    tpu.vector_store %arg28[%514, %c0_176, %c0_177], %517 {strides = array<i32>} : memref<16x2x16xf32, #tpu.memory_space<vmem>>, vector<1x2x16xf32>,
    %c11_i32 = arith.constant 11 : i32
    %518 = arith.index_cast %c11_i32 : i32 to index
    %c0_178 = arith.constant 0 : index
    %c0_179 = arith.constant 0 : index
    %519 = vector.load %arg27[%518, %c0_178, %c0_179] : memref<16x2x48xf32, #tpu.memory_space<vmem>>, vector<1x2x48xf32>
    %520 = vector.shape_cast %519 : vector<1x2x48xf32> to vector<2x48xf32>
    %cst_180 = arith.constant dense<0.000000e+00> : vector<2x48xf32>
    %521 = tpu.matmul %511, %106, %cst_180 {dimension_numbers = #tpu.dot_dimension_numbers<[1], [0], [0], [1], [0, 0, 1, 1], [], []>} : vector<2x16xf32>, vector<16x48xf32>, vector<2x48xf32> -> vector<2x48xf32>
    %522 = vector.extract_strided_slice %520 {offsets = [0, 0], sizes = [2, 16], strides = [1, 1]} : vector<2x48xf32> to vector<2x16xf32>
    %523 = vector.extract_strided_slice %521 {offsets = [0, 0], sizes = [2, 16], strides = [1, 1]} : vector<2x48xf32> to vector<2x16xf32>
    %524 = arith.addf %522, %523 : vector<2x16xf32>
    %525 = arith.negf %524 : vector<2x16xf32>
    %526 = math.exp %525 : vector<2x16xf32>
    %cst_181 = arith.constant 1.000000e+00 : f32
    %527 = vector.broadcast %cst_181 : f32 to vector<2x16xf32>
    %528 = arith.addf %527, %526 : vector<2x16xf32>
    %529 = arith.divf %527, %528 : vector<2x16xf32>
    %530 = vector.extract_strided_slice %520 {offsets = [0, 16], sizes = [2, 16], strides = [1, 1]} : vector<2x48xf32> to vector<2x16xf32>
    %531 = vector.extract_strided_slice %521 {offsets = [0, 16], sizes = [2, 16], strides = [1, 1]} : vector<2x48xf32> to vector<2x16xf32>
    %532 = arith.addf %530, %531 : vector<2x16xf32>
    %533 = arith.negf %532 : vector<2x16xf32>
    %534 = math.exp %533 : vector<2x16xf32>
    %cst_182 = arith.constant 1.000000e+00 : f32
    %535 = vector.broadcast %cst_182 : f32 to vector<2x16xf32>
    %536 = arith.addf %535, %534 : vector<2x16xf32>
    %537 = arith.divf %535, %536 : vector<2x16xf32>
    %538 = vector.extract_strided_slice %520 {offsets = [0, 32], sizes = [2, 16], strides = [1, 1]} : vector<2x48xf32> to vector<2x16xf32>
    %539 = vector.extract_strided_slice %521 {offsets = [0, 32], sizes = [2, 16], strides = [1, 1]} : vector<2x48xf32> to vector<2x16xf32>
    %540 = arith.addf %539, %109 : vector<2x16xf32>
    %541 = arith.mulf %529, %540 : vector<2x16xf32>
    %542 = arith.addf %538, %541 : vector<2x16xf32>
    %543 = math.tanh %542 : vector<2x16xf32>
    %cst_183 = arith.constant 1.000000e+00 : f32
    %544 = vector.broadcast %cst_183 : f32 to vector<2x16xf32>
    %545 = arith.subf %544, %537 : vector<2x16xf32>
    %546 = arith.mulf %545, %543 : vector<2x16xf32>
    %547 = arith.mulf %537, %511 : vector<2x16xf32>
    %548 = arith.addf %546, %547 : vector<2x16xf32>
    %cst_184 = arith.constant 0.000000e+00 : f32
    %549 = vector.broadcast %cst_184 : f32 to vector<2x16xf32>
    %550 = arith.maximumf %548, %549 : vector<2x16xf32>
    %551 = arith.index_cast %c11_i32 : i32 to index
    %c0_185 = arith.constant 0 : index
    %c0_186 = arith.constant 0 : index
    %552 = vector.load %arg28[%551, %c0_185, %c0_186] : memref<16x2x16xf32, #tpu.memory_space<vmem>>, vector<1x2x16xf32>
    %553 = vector.shape_cast %552 : vector<1x2x16xf32> to vector<2x16xf32>
    %554 = vector.shape_cast %550 : vector<2x16xf32> to vector<1x2x16xf32>
    tpu.vector_store %arg28[%551, %c0_185, %c0_186], %554 {strides = array<i32>} : memref<16x2x16xf32, #tpu.memory_space<vmem>>, vector<1x2x16xf32>,
    %c12_i32 = arith.constant 12 : i32
    %555 = arith.index_cast %c12_i32 : i32 to index
    %c0_187 = arith.constant 0 : index
    %c0_188 = arith.constant 0 : index
    %556 = vector.load %arg27[%555, %c0_187, %c0_188] : memref<16x2x48xf32, #tpu.memory_space<vmem>>, vector<1x2x48xf32>
    %557 = vector.shape_cast %556 : vector<1x2x48xf32> to vector<2x48xf32>
    %cst_189 = arith.constant dense<0.000000e+00> : vector<2x48xf32>
    %558 = tpu.matmul %548, %106, %cst_189 {dimension_numbers = #tpu.dot_dimension_numbers<[1], [0], [0], [1], [0, 0, 1, 1], [], []>} : vector<2x16xf32>, vector<16x48xf32>, vector<2x48xf32> -> vector<2x48xf32>
    %559 = vector.extract_strided_slice %557 {offsets = [0, 0], sizes = [2, 16], strides = [1, 1]} : vector<2x48xf32> to vector<2x16xf32>
    %560 = vector.extract_strided_slice %558 {offsets = [0, 0], sizes = [2, 16], strides = [1, 1]} : vector<2x48xf32> to vector<2x16xf32>
    %561 = arith.addf %559, %560 : vector<2x16xf32>
    %562 = arith.negf %561 : vector<2x16xf32>
    %563 = math.exp %562 : vector<2x16xf32>
    %cst_190 = arith.constant 1.000000e+00 : f32
    %564 = vector.broadcast %cst_190 : f32 to vector<2x16xf32>
    %565 = arith.addf %564, %563 : vector<2x16xf32>
    %566 = arith.divf %564, %565 : vector<2x16xf32>
    %567 = vector.extract_strided_slice %557 {offsets = [0, 16], sizes = [2, 16], strides = [1, 1]} : vector<2x48xf32> to vector<2x16xf32>
    %568 = vector.extract_strided_slice %558 {offsets = [0, 16], sizes = [2, 16], strides = [1, 1]} : vector<2x48xf32> to vector<2x16xf32>
    %569 = arith.addf %567, %568 : vector<2x16xf32>
    %570 = arith.negf %569 : vector<2x16xf32>
    %571 = math.exp %570 : vector<2x16xf32>
    %cst_191 = arith.constant 1.000000e+00 : f32
    %572 = vector.broadcast %cst_191 : f32 to vector<2x16xf32>
    %573 = arith.addf %572, %571 : vector<2x16xf32>
    %574 = arith.divf %572, %573 : vector<2x16xf32>
    %575 = vector.extract_strided_slice %557 {offsets = [0, 32], sizes = [2, 16], strides = [1, 1]} : vector<2x48xf32> to vector<2x16xf32>
    %576 = vector.extract_strided_slice %558 {offsets = [0, 32], sizes = [2, 16], strides = [1, 1]} : vector<2x48xf32> to vector<2x16xf32>
    %577 = arith.addf %576, %109 : vector<2x16xf32>
    %578 = arith.mulf %566, %577 : vector<2x16xf32>
    %579 = arith.addf %575, %578 : vector<2x16xf32>
    %580 = math.tanh %579 : vector<2x16xf32>
    %cst_192 = arith.constant 1.000000e+00 : f32
    %581 = vector.broadcast %cst_192 : f32 to vector<2x16xf32>
    %582 = arith.subf %581, %574 : vector<2x16xf32>
    %583 = arith.mulf %582, %580 : vector<2x16xf32>
    %584 = arith.mulf %574, %548 : vector<2x16xf32>
    %585 = arith.addf %583, %584 : vector<2x16xf32>
    %cst_193 = arith.constant 0.000000e+00 : f32
    %586 = vector.broadcast %cst_193 : f32 to vector<2x16xf32>
    %587 = arith.maximumf %585, %586 : vector<2x16xf32>
    %588 = arith.index_cast %c12_i32 : i32 to index
    %c0_194 = arith.constant 0 : index
    %c0_195 = arith.constant 0 : index
    %589 = vector.load %arg28[%588, %c0_194, %c0_195] : memref<16x2x16xf32, #tpu.memory_space<vmem>>, vector<1x2x16xf32>
    %590 = vector.shape_cast %589 : vector<1x2x16xf32> to vector<2x16xf32>
    %591 = vector.shape_cast %587 : vector<2x16xf32> to vector<1x2x16xf32>
    tpu.vector_store %arg28[%588, %c0_194, %c0_195], %591 {strides = array<i32>} : memref<16x2x16xf32, #tpu.memory_space<vmem>>, vector<1x2x16xf32>,
    %c13_i32 = arith.constant 13 : i32
    %592 = arith.index_cast %c13_i32 : i32 to index
    %c0_196 = arith.constant 0 : index
    %c0_197 = arith.constant 0 : index
    %593 = vector.load %arg27[%592, %c0_196, %c0_197] : memref<16x2x48xf32, #tpu.memory_space<vmem>>, vector<1x2x48xf32>
    %594 = vector.shape_cast %593 : vector<1x2x48xf32> to vector<2x48xf32>
    %cst_198 = arith.constant dense<0.000000e+00> : vector<2x48xf32>
    %595 = tpu.matmul %585, %106, %cst_198 {dimension_numbers = #tpu.dot_dimension_numbers<[1], [0], [0], [1], [0, 0, 1, 1], [], []>} : vector<2x16xf32>, vector<16x48xf32>, vector<2x48xf32> -> vector<2x48xf32>
    %596 = vector.extract_strided_slice %594 {offsets = [0, 0], sizes = [2, 16], strides = [1, 1]} : vector<2x48xf32> to vector<2x16xf32>
    %597 = vector.extract_strided_slice %595 {offsets = [0, 0], sizes = [2, 16], strides = [1, 1]} : vector<2x48xf32> to vector<2x16xf32>
    %598 = arith.addf %596, %597 : vector<2x16xf32>
    %599 = arith.negf %598 : vector<2x16xf32>
    %600 = math.exp %599 : vector<2x16xf32>
    %cst_199 = arith.constant 1.000000e+00 : f32
    %601 = vector.broadcast %cst_199 : f32 to vector<2x16xf32>
    %602 = arith.addf %601, %600 : vector<2x16xf32>
    %603 = arith.divf %601, %602 : vector<2x16xf32>
    %604 = vector.extract_strided_slice %594 {offsets = [0, 16], sizes = [2, 16], strides = [1, 1]} : vector<2x48xf32> to vector<2x16xf32>
    %605 = vector.extract_strided_slice %595 {offsets = [0, 16], sizes = [2, 16], strides = [1, 1]} : vector<2x48xf32> to vector<2x16xf32>
    %606 = arith.addf %604, %605 : vector<2x16xf32>
    %607 = arith.negf %606 : vector<2x16xf32>
    %608 = math.exp %607 : vector<2x16xf32>
    %cst_200 = arith.constant 1.000000e+00 : f32
    %609 = vector.broadcast %cst_200 : f32 to vector<2x16xf32>
    %610 = arith.addf %609, %608 : vector<2x16xf32>
    %611 = arith.divf %609, %610 : vector<2x16xf32>
    %612 = vector.extract_strided_slice %594 {offsets = [0, 32], sizes = [2, 16], strides = [1, 1]} : vector<2x48xf32> to vector<2x16xf32>
    %613 = vector.extract_strided_slice %595 {offsets = [0, 32], sizes = [2, 16], strides = [1, 1]} : vector<2x48xf32> to vector<2x16xf32>
    %614 = arith.addf %613, %109 : vector<2x16xf32>
    %615 = arith.mulf %603, %614 : vector<2x16xf32>
    %616 = arith.addf %612, %615 : vector<2x16xf32>
    %617 = math.tanh %616 : vector<2x16xf32>
    %cst_201 = arith.constant 1.000000e+00 : f32
    %618 = vector.broadcast %cst_201 : f32 to vector<2x16xf32>
    %619 = arith.subf %618, %611 : vector<2x16xf32>
    %620 = arith.mulf %619, %617 : vector<2x16xf32>
    %621 = arith.mulf %611, %585 : vector<2x16xf32>
    %622 = arith.addf %620, %621 : vector<2x16xf32>
    %cst_202 = arith.constant 0.000000e+00 : f32
    %623 = vector.broadcast %cst_202 : f32 to vector<2x16xf32>
    %624 = arith.maximumf %622, %623 : vector<2x16xf32>
    %625 = arith.index_cast %c13_i32 : i32 to index
    %c0_203 = arith.constant 0 : index
    %c0_204 = arith.constant 0 : index
    %626 = vector.load %arg28[%625, %c0_203, %c0_204] : memref<16x2x16xf32, #tpu.memory_space<vmem>>, vector<1x2x16xf32>
    %627 = vector.shape_cast %626 : vector<1x2x16xf32> to vector<2x16xf32>
    %628 = vector.shape_cast %624 : vector<2x16xf32> to vector<1x2x16xf32>
    tpu.vector_store %arg28[%625, %c0_203, %c0_204], %628 {strides = array<i32>} : memref<16x2x16xf32, #tpu.memory_space<vmem>>, vector<1x2x16xf32>,
    %c14_i32 = arith.constant 14 : i32
    %629 = arith.index_cast %c14_i32 : i32 to index
    %c0_205 = arith.constant 0 : index
    %c0_206 = arith.constant 0 : index
    %630 = vector.load %arg27[%629, %c0_205, %c0_206] : memref<16x2x48xf32, #tpu.memory_space<vmem>>, vector<1x2x48xf32>
    %631 = vector.shape_cast %630 : vector<1x2x48xf32> to vector<2x48xf32>
    %cst_207 = arith.constant dense<0.000000e+00> : vector<2x48xf32>
    %632 = tpu.matmul %622, %106, %cst_207 {dimension_numbers = #tpu.dot_dimension_numbers<[1], [0], [0], [1], [0, 0, 1, 1], [], []>} : vector<2x16xf32>, vector<16x48xf32>, vector<2x48xf32> -> vector<2x48xf32>
    %633 = vector.extract_strided_slice %631 {offsets = [0, 0], sizes = [2, 16], strides = [1, 1]} : vector<2x48xf32> to vector<2x16xf32>
    %634 = vector.extract_strided_slice %632 {offsets = [0, 0], sizes = [2, 16], strides = [1, 1]} : vector<2x48xf32> to vector<2x16xf32>
    %635 = arith.addf %633, %634 : vector<2x16xf32>
    %636 = arith.negf %635 : vector<2x16xf32>
    %637 = math.exp %636 : vector<2x16xf32>
    %cst_208 = arith.constant 1.000000e+00 : f32
    %638 = vector.broadcast %cst_208 : f32 to vector<2x16xf32>
    %639 = arith.addf %638, %637 : vector<2x16xf32>
    %640 = arith.divf %638, %639 : vector<2x16xf32>
    %641 = vector.extract_strided_slice %631 {offsets = [0, 16], sizes = [2, 16], strides = [1, 1]} : vector<2x48xf32> to vector<2x16xf32>
    %642 = vector.extract_strided_slice %632 {offsets = [0, 16], sizes = [2, 16], strides = [1, 1]} : vector<2x48xf32> to vector<2x16xf32>
    %643 = arith.addf %641, %642 : vector<2x16xf32>
    %644 = arith.negf %643 : vector<2x16xf32>
    %645 = math.exp %644 : vector<2x16xf32>
    %cst_209 = arith.constant 1.000000e+00 : f32
    %646 = vector.broadcast %cst_209 : f32 to vector<2x16xf32>
    %647 = arith.addf %646, %645 : vector<2x16xf32>
    %648 = arith.divf %646, %647 : vector<2x16xf32>
    %649 = vector.extract_strided_slice %631 {offsets = [0, 32], sizes = [2, 16], strides = [1, 1]} : vector<2x48xf32> to vector<2x16xf32>
    %650 = vector.extract_strided_slice %632 {offsets = [0, 32], sizes = [2, 16], strides = [1, 1]} : vector<2x48xf32> to vector<2x16xf32>
    %651 = arith.addf %650, %109 : vector<2x16xf32>
    %652 = arith.mulf %640, %651 : vector<2x16xf32>
    %653 = arith.addf %649, %652 : vector<2x16xf32>
    %654 = math.tanh %653 : vector<2x16xf32>
    %cst_210 = arith.constant 1.000000e+00 : f32
    %655 = vector.broadcast %cst_210 : f32 to vector<2x16xf32>
    %656 = arith.subf %655, %648 : vector<2x16xf32>
    %657 = arith.mulf %656, %654 : vector<2x16xf32>
    %658 = arith.mulf %648, %622 : vector<2x16xf32>
    %659 = arith.addf %657, %658 : vector<2x16xf32>
    %cst_211 = arith.constant 0.000000e+00 : f32
    %660 = vector.broadcast %cst_211 : f32 to vector<2x16xf32>
    %661 = arith.maximumf %659, %660 : vector<2x16xf32>
    %662 = arith.index_cast %c14_i32 : i32 to index
    %c0_212 = arith.constant 0 : index
    %c0_213 = arith.constant 0 : index
    %663 = vector.load %arg28[%662, %c0_212, %c0_213] : memref<16x2x16xf32, #tpu.memory_space<vmem>>, vector<1x2x16xf32>
    %664 = vector.shape_cast %663 : vector<1x2x16xf32> to vector<2x16xf32>
    %665 = vector.shape_cast %661 : vector<2x16xf32> to vector<1x2x16xf32>
    tpu.vector_store %arg28[%662, %c0_212, %c0_213], %665 {strides = array<i32>} : memref<16x2x16xf32, #tpu.memory_space<vmem>>, vector<1x2x16xf32>,
    %c15_i32 = arith.constant 15 : i32
    %666 = arith.index_cast %c15_i32 : i32 to index
    %c0_214 = arith.constant 0 : index
    %c0_215 = arith.constant 0 : index
    %667 = vector.load %arg27[%666, %c0_214, %c0_215] : memref<16x2x48xf32, #tpu.memory_space<vmem>>, vector<1x2x48xf32>
    %668 = vector.shape_cast %667 : vector<1x2x48xf32> to vector<2x48xf32>
    %cst_216 = arith.constant dense<0.000000e+00> : vector<2x48xf32>
    %669 = tpu.matmul %659, %106, %cst_216 {dimension_numbers = #tpu.dot_dimension_numbers<[1], [0], [0], [1], [0, 0, 1, 1], [], []>} : vector<2x16xf32>, vector<16x48xf32>, vector<2x48xf32> -> vector<2x48xf32>
    %670 = vector.extract_strided_slice %668 {offsets = [0, 0], sizes = [2, 16], strides = [1, 1]} : vector<2x48xf32> to vector<2x16xf32>
    %671 = vector.extract_strided_slice %669 {offsets = [0, 0], sizes = [2, 16], strides = [1, 1]} : vector<2x48xf32> to vector<2x16xf32>
    %672 = arith.addf %670, %671 : vector<2x16xf32>
    %673 = arith.negf %672 : vector<2x16xf32>
    %674 = math.exp %673 : vector<2x16xf32>
    %cst_217 = arith.constant 1.000000e+00 : f32
    %675 = vector.broadcast %cst_217 : f32 to vector<2x16xf32>
    %676 = arith.addf %675, %674 : vector<2x16xf32>
    %677 = arith.divf %675, %676 : vector<2x16xf32>
    %678 = vector.extract_strided_slice %668 {offsets = [0, 16], sizes = [2, 16], strides = [1, 1]} : vector<2x48xf32> to vector<2x16xf32>
    %679 = vector.extract_strided_slice %669 {offsets = [0, 16], sizes = [2, 16], strides = [1, 1]} : vector<2x48xf32> to vector<2x16xf32>
    %680 = arith.addf %678, %679 : vector<2x16xf32>
    %681 = arith.negf %680 : vector<2x16xf32>
    %682 = math.exp %681 : vector<2x16xf32>
    %cst_218 = arith.constant 1.000000e+00 : f32
    %683 = vector.broadcast %cst_218 : f32 to vector<2x16xf32>
    %684 = arith.addf %683, %682 : vector<2x16xf32>
    %685 = arith.divf %683, %684 : vector<2x16xf32>
    %686 = vector.extract_strided_slice %668 {offsets = [0, 32], sizes = [2, 16], strides = [1, 1]} : vector<2x48xf32> to vector<2x16xf32>
    %687 = vector.extract_strided_slice %669 {offsets = [0, 32], sizes = [2, 16], strides = [1, 1]} : vector<2x48xf32> to vector<2x16xf32>
    %688 = arith.addf %687, %109 : vector<2x16xf32>
    %689 = arith.mulf %677, %688 : vector<2x16xf32>
    %690 = arith.addf %686, %689 : vector<2x16xf32>
    %691 = math.tanh %690 : vector<2x16xf32>
    %cst_219 = arith.constant 1.000000e+00 : f32
    %692 = vector.broadcast %cst_219 : f32 to vector<2x16xf32>
    %693 = arith.subf %692, %685 : vector<2x16xf32>
    %694 = arith.mulf %693, %691 : vector<2x16xf32>
    %695 = arith.mulf %685, %659 : vector<2x16xf32>
    %696 = arith.addf %694, %695 : vector<2x16xf32>
    %cst_220 = arith.constant 0.000000e+00 : f32
    %697 = vector.broadcast %cst_220 : f32 to vector<2x16xf32>
    %698 = arith.maximumf %696, %697 : vector<2x16xf32>
    %699 = arith.index_cast %c15_i32 : i32 to index
    %c0_221 = arith.constant 0 : index
    %c0_222 = arith.constant 0 : index
    %700 = vector.load %arg28[%699, %c0_221, %c0_222] : memref<16x2x16xf32, #tpu.memory_space<vmem>>, vector<1x2x16xf32>
    %701 = vector.shape_cast %700 : vector<1x2x16xf32> to vector<2x16xf32>
    %702 = vector.shape_cast %698 : vector<2x16xf32> to vector<1x2x16xf32>
    tpu.vector_store %arg28[%699, %c0_221, %c0_222], %702 {strides = array<i32>} : memref<16x2x16xf32, #tpu.memory_space<vmem>>, vector<1x2x16xf32>,
    %c16_i32 = arith.constant 16 : i32
    %c0_223 = arith.constant 0 : index
    %c0_224 = arith.constant 0 : index
    %c0_225 = arith.constant 0 : index
    %703 = vector.load %arg28[%c0_223, %c0_224, %c0_225] : memref<16x2x16xf32, #tpu.memory_space<vmem>>, vector<16x2x16xf32>
    %704 = vector.shape_cast %703 : vector<16x2x16xf32> to vector<32x16xf32>
    %c0_226 = arith.constant 0 : index
    %c0_227 = arith.constant 0 : index
    %705 = vector.load %arg24[%c0_226, %c0_227] : memref<16x4xbf16, #tpu.memory_space<vmem>>, vector<16x4xbf16>
    %706 = arith.truncf %704 : vector<32x16xf32> to vector<32x16xbf16>
    %cst_228 = arith.constant dense<0.000000e+00> : vector<32x4xf32>
    %707 = tpu.matmul %706, %705, %cst_228 {dimension_numbers = #tpu.dot_dimension_numbers<[1], [0], [0], [1], [0, 0, 1, 1], [], []>} : vector<32x16xbf16>, vector<16x4xbf16>, vector<32x4xf32> -> vector<32x4xf32>
    %c0_229 = arith.constant 0 : index
    %c0_230 = arith.constant 0 : index
    %708 = vector.load %arg25[%c0_229, %c0_230] : memref<1x4xf32, #tpu.memory_space<vmem>>, vector<1x4xf32>
    %709 = vector.broadcast %708 : vector<1x4xf32> to vector<32x4xf32>
    %710 = arith.addf %707, %709 : vector<32x4xf32>
    %711 = vector.shape_cast %710 : vector<32x4xf32> to vector<16x2x4xf32>
    %c0_231 = arith.constant 0 : index
    %c0_232 = arith.constant 0 : index
    %c0_233 = arith.constant 0 : index
    %712 = vector.load %arg26[%c0_231, %c0_232, %c0_233] : memref<16x2x4xf32, #tpu.memory_space<vmem>>, vector<16x2x4xf32>
    tpu.vector_store %arg26[%c0_231, %c0_232, %c0_233], %711 {strides = array<i32>} : memref<16x2x4xf32, #tpu.memory_space<vmem>>, vector<16x2x4xf32>,
    return
  }
  func.func @transform_0(%arg0: i32) -> (i32, i32, i32) {
    %c0_i32 = arith.constant 0 : i32
    %c0_i32_0 = arith.constant 0 : i32
    %c0_i32_1 = arith.constant 0 : i32
    return %c0_i32, %arg0, %c0_i32_0 : i32, i32, i32
  }
  func.func @transform_1(%arg0: i32) -> (i32, i32) {
    %c0_i32 = arith.constant 0 : i32
    %c0_i32_0 = arith.constant 0 : i32
    %c0_i32_1 = arith.constant 0 : i32
    return %c0_i32, %c0_i32_0 : i32, i32
  }
  func.func @transform_2(%arg0: i32) -> (i32, i32) {
    %c0_i32 = arith.constant 0 : i32
    %c0_i32_0 = arith.constant 0 : i32
    %c0_i32_1 = arith.constant 0 : i32
    return %c0_i32, %c0_i32_0 : i32, i32
  }
  func.func @transform_3(%arg0: i32) -> (i32, i32) {
    %c0_i32 = arith.constant 0 : i32
    %c0_i32_0 = arith.constant 0 : i32
    %c0_i32_1 = arith.constant 0 : i32
    return %c0_i32, %c0_i32_0 : i32, i32
  }
  func.func @transform_4(%arg0: i32) -> (i32, i32) {
    %c0_i32 = arith.constant 0 : i32
    %c0_i32_0 = arith.constant 0 : i32
    %c0_i32_1 = arith.constant 0 : i32
    return %c0_i32, %c0_i32_0 : i32, i32
  }
  func.func @transform_5(%arg0: i32) -> (i32, i32) {
    %c0_i32 = arith.constant 0 : i32
    %c0_i32_0 = arith.constant 0 : i32
    %c0_i32_1 = arith.constant 0 : i32
    return %c0_i32, %c0_i32_0 : i32, i32
  }
  func.func @transform_6(%arg0: i32) -> (i32, i32) {
    %c0_i32 = arith.constant 0 : i32
    %c0_i32_0 = arith.constant 0 : i32
    %c0_i32_1 = arith.constant 0 : i32
    return %c0_i32, %c0_i32_0 : i32, i32
  }
  func.func @transform_7(%arg0: i32) -> (i32, i32) {
    %c0_i32 = arith.constant 0 : i32
    %c0_i32_0 = arith.constant 0 : i32
    %c0_i32_1 = arith.constant 0 : i32
    return %c0_i32, %c0_i32_0 : i32, i32
  }
  func.func @transform_8(%arg0: i32) -> (i32, i32) {
    %c0_i32 = arith.constant 0 : i32
    %c0_i32_0 = arith.constant 0 : i32
    %c0_i32_1 = arith.constant 0 : i32
    return %c0_i32, %c0_i32_0 : i32, i32
  }
  func.func @transform_9(%arg0: i32) -> (i32, i32) {
    %c0_i32 = arith.constant 0 : i32
    %c0_i32_0 = arith.constant 0 : i32
    %c0_i32_1 = arith.constant 0 : i32
    return %c0_i32, %c0_i32_0 : i32, i32
  }
  func.func @transform_10(%arg0: i32) -> (i32, i32) {
    %c0_i32 = arith.constant 0 : i32
    %c0_i32_0 = arith.constant 0 : i32
    %c0_i32_1 = arith.constant 0 : i32
    return %c0_i32, %c0_i32_0 : i32, i32
  }
  func.func @transform_11(%arg0: i32) -> (i32, i32) {
    %c0_i32 = arith.constant 0 : i32
    %c0_i32_0 = arith.constant 0 : i32
    %c0_i32_1 = arith.constant 0 : i32
    return %c0_i32, %c0_i32_0 : i32, i32
  }
  func.func @transform_12(%arg0: i32) -> (i32, i32) {
    %c0_i32 = arith.constant 0 : i32
    %c0_i32_0 = arith.constant 0 : i32
    %c0_i32_1 = arith.constant 0 : i32
    return %c0_i32, %c0_i32_0 : i32, i32
  }
  func.func @transform_13(%arg0: i32) -> (i32, i32) {
    %c0_i32 = arith.constant 0 : i32
    %c0_i32_0 = arith.constant 0 : i32
    %c0_i32_1 = arith.constant 0 : i32
    return %c0_i32, %c0_i32_0 : i32, i32
  }
  func.func @transform_14(%arg0: i32) -> (i32, i32) {
    %c0_i32 = arith.constant 0 : i32
    %c0_i32_0 = arith.constant 0 : i32
    %c0_i32_1 = arith.constant 0 : i32
    return %c0_i32, %c0_i32_0 : i32, i32
  }
  func.func @transform_15(%arg0: i32) -> (i32, i32) {
    %c0_i32 = arith.constant 0 : i32
    %c0_i32_0 = arith.constant 0 : i32
    %c0_i32_1 = arith.constant 0 : i32
    return %c0_i32, %c0_i32_0 : i32, i32
  }
  func.func @transform_16(%arg0: i32) -> (i32, i32) {
    %c0_i32 = arith.constant 0 : i32
    %c0_i32_0 = arith.constant 0 : i32
    %c0_i32_1 = arith.constant 0 : i32
    return %c0_i32, %c0_i32_0 : i32, i32
  }
  func.func @transform_17(%arg0: i32) -> (i32, i32) {
    %c0_i32 = arith.constant 0 : i32
    %c0_i32_0 = arith.constant 0 : i32
    %c0_i32_1 = arith.constant 0 : i32
    return %c0_i32, %c0_i32_0 : i32, i32
  }
  func.func @transform_18(%arg0: i32) -> (i32, i32) {
    %c0_i32 = arith.constant 0 : i32
    %c0_i32_0 = arith.constant 0 : i32
    %c0_i32_1 = arith.constant 0 : i32
    return %c0_i32, %c0_i32_0 : i32, i32
  }
  func.func @transform_19(%arg0: i32) -> (i32, i32) {
    %c0_i32 = arith.constant 0 : i32
    %c0_i32_0 = arith.constant 0 : i32
    %c0_i32_1 = arith.constant 0 : i32
    return %c0_i32, %c0_i32_0 : i32, i32
  }
  func.func @transform_20(%arg0: i32) -> (i32, i32) {
    %c0_i32 = arith.constant 0 : i32
    %c0_i32_0 = arith.constant 0 : i32
    %c0_i32_1 = arith.constant 0 : i32
    return %c0_i32, %c0_i32_0 : i32, i32
  }
  func.func @transform_21(%arg0: i32) -> (i32, i32) {
    %c0_i32 = arith.constant 0 : i32
    %c0_i32_0 = arith.constant 0 : i32
    %c0_i32_1 = arith.constant 0 : i32
    return %c0_i32, %c0_i32_0 : i32, i32
  }
  func.func @transform_22(%arg0: i32) -> (i32, i32) {
    %c0_i32 = arith.constant 0 : i32
    %c0_i32_0 = arith.constant 0 : i32
    %c0_i32_1 = arith.constant 0 : i32
    return %c0_i32, %c0_i32_0 : i32, i32
  }
  func.func @transform_23(%arg0: i32) -> (i32, i32) {
    %c0_i32 = arith.constant 0 : i32
    %c0_i32_0 = arith.constant 0 : i32
    %c0_i32_1 = arith.constant 0 : i32
    return %c0_i32, %c0_i32_0 : i32, i32
  }
  func.func @transform_24(%arg0: i32) -> (i32, i32) {
    %c0_i32 = arith.constant 0 : i32
    %c0_i32_0 = arith.constant 0 : i32
    %c0_i32_1 = arith.constant 0 : i32
    return %c0_i32, %c0_i32_0 : i32, i32
  }
  func.func @transform_25(%arg0: i32) -> (i32, i32, i32) {
    %c0_i32 = arith.constant 0 : i32
    %c0_i32_0 = arith.constant 0 : i32
    %c0_i32_1 = arith.constant 0 : i32
    return %c0_i32, %arg0, %c0_i32_0 : i32, i32, i32
  }
}

</mosaic_0001>

<llo_original>
// kernel: astcg_no_spatial_forward.1
$region0: #{astcg_no_spatial_forward.1}
  #allocation0 [shape = 'u32[]', space=smem, size = 0x4, offset = 0x4, fixed_abs, tag = 'smem constant byte address 0x4 - core index']
  #allocation1 [shape = 'u32[144,128]{1,0:T(1,128)}', space=vmem, size = 0x12000, scoped, tag = 'internal scratch']
  #allocation2 [shape = 'f32[16,2,48]{2,1,0:T(2,128)}', space=vmem, size = 0x4000, scoped, tag = 'scratch operand']
  #allocation3 [shape = 'f32[16,2,16]{2,1,0:T(2,128)}', space=vmem, size = 0x4000, scoped, tag = 'scratch operand']
  %s0 = inlined_call_operand.vmem [shape: f32[16,2,8], index: 0, kind: input, shape index: {}]
  %s1 = inlined_call_operand.vmem [shape: bf16[8,64], index: 1, kind: input, shape index: {}]
  %s2 = inlined_call_operand.vmem [shape: bf16[8,64], index: 2, kind: input, shape index: {}]
  %s3 = inlined_call_operand.vmem [shape: f32[1,64], index: 3, kind: input, shape index: {}]
  %s4 = inlined_call_operand.vmem [shape: bf16[64,64], index: 4, kind: input, shape index: {}]
  %s5 = inlined_call_operand.vmem [shape: bf16[64,64], index: 5, kind: input, shape index: {}]
  %s6 = inlined_call_operand.vmem [shape: f32[1,64], index: 6, kind: input, shape index: {}]
  %s7 = inlined_call_operand.vmem [shape: bf16[8,64], index: 7, kind: input, shape index: {}]
  %s8 = inlined_call_operand.vmem [shape: f32[1,64], index: 8, kind: input, shape index: {}]
  %s9 = inlined_call_operand.vmem [shape: bf16[64,32], index: 9, kind: input, shape index: {}]
  %s10 = inlined_call_operand.vmem [shape: bf16[64,32], index: 10, kind: input, shape index: {}]
  %s11 = inlined_call_operand.vmem [shape: f32[1,32], index: 11, kind: input, shape index: {}]
  %s12 = inlined_call_operand.vmem [shape: bf16[32,32], index: 12, kind: input, shape index: {}]
  %s13 = inlined_call_operand.vmem [shape: bf16[32,32], index: 13, kind: input, shape index: {}]
  %s14 = inlined_call_operand.vmem [shape: f32[1,32], index: 14, kind: input, shape index: {}]
  %s15 = inlined_call_operand.vmem [shape: bf16[64,32], index: 15, kind: input, shape index: {}]
  %s16 = inlined_call_operand.vmem [shape: f32[1,32], index: 16, kind: input, shape index: {}]
  %s17 = inlined_call_operand.vmem [shape: bf16[32,12], index: 17, kind: input, shape index: {}]
  %s18 = inlined_call_operand.vmem [shape: f32[1,12], index: 18, kind: input, shape index: {}]
  %s19 = inlined_call_operand.vmem [shape: bf16[12,48], index: 19, kind: input, shape index: {}]
  %s20 = inlined_call_operand.vmem [shape: f32[1,48], index: 20, kind: input, shape index: {}]
  %s21 = inlined_call_operand.vmem [shape: f32[16,48], index: 21, kind: input, shape index: {}]
  %s22 = inlined_call_operand.vmem [shape: f32[1,16], index: 22, kind: input, shape index: {}]
  %s23 = inlined_call_operand.vmem [shape: bf16[16,4], index: 23, kind: input, shape index: {}]
  %s24 = inlined_call_operand.vmem [shape: f32[1,4], index: 24, kind: input, shape index: {}]
  %s25 = inlined_call_operand.vmem [shape: f32[16,2,4], index: 25, kind: output, shape index: {}]
  %s26 = sld [smem:[#allocation0]]
  $region110: #{astcg_no_spatial_forward.1} parent=0
    _
  %s28 = ssub.s32 1, %s26
  %s29 = scalar_select 0, %s28, %s26
  // Predicated region
  $region2: #{astcg_no_spatial_forward.1} parent=0 // pred_check
    _
  $region3: #{astcg_no_spatial_forward.1} parent=0 // pred_check_branch
    %31 = sbr.rel (0) target = $region5
  $region4: #{astcg_no_spatial_forward.1} parent=0 // pred_region
    _
  $region5: #{astcg_no_spatial_forward.1} parent=0 // pred_fallthru
    _
  // Predicated region
  $region6: #{astcg_no_spatial_forward.1} parent=0 // pred_check
    _
  $region7: #{astcg_no_spatial_forward.1} parent=0 // pred_check_branch
    %33 = sbr.rel (0) target = $region9
  $region8: #{astcg_no_spatial_forward.1} parent=0 // pred_region
    _
  $region9: #{astcg_no_spatial_forward.1} parent=0 // pred_fallthru
    _
  // Predicated region
  $region10: #{astcg_no_spatial_forward.1} parent=0 // pred_check
    _
  $region11: #{astcg_no_spatial_forward.1} parent=0 // pred_check_branch
    %35 = sbr.rel (0) target = $region13
  $region12: #{astcg_no_spatial_forward.1} parent=0 // pred_region
    _
  $region13: #{astcg_no_spatial_forward.1} parent=0 // pred_fallthru
    _
  // Predicated region
  $region14: #{astcg_no_spatial_forward.1} parent=0 // pred_check
    _
  $region15: #{astcg_no_spatial_forward.1} parent=0 // pred_check_branch
    %37 = sbr.rel (0) target = $region17
  $region16: #{astcg_no_spatial_forward.1} parent=0 // pred_region
    _
  $region17: #{astcg_no_spatial_forward.1} parent=0 // pred_fallthru
    _
  // Predicated region
  $region18: #{astcg_no_spatial_forward.1} parent=0 // pred_check
    _
  $region19: #{astcg_no_spatial_forward.1} parent=0 // pred_check_branch
    %39 = sbr.rel (0) target = $region21
  $region20: #{astcg_no_spatial_forward.1} parent=0 // pred_region
    _
  $region21: #{astcg_no_spatial_forward.1} parent=0 // pred_fallthru
    _
  // Predicated region
  $region22: #{astcg_no_spatial_forward.1} parent=0 // pred_check
    _
  $region23: #{astcg_no_spatial_forward.1} parent=0 // pred_check_branch
    %41 = sbr.rel (0) target = $region25
  $region24: #{astcg_no_spatial_forward.1} parent=0 // pred_region
    _
  $region25: #{astcg_no_spatial_forward.1} parent=0 // pred_fallthru
    _
  // Predicated region
  $region26: #{astcg_no_spatial_forward.1} parent=0 // pred_check
    _
  $region27: #{astcg_no_spatial_forward.1} parent=0 // pred_check_branch
    %43 = sbr.rel (0) target = $region29
  $region28: #{astcg_no_spatial_forward.1} parent=0 // pred_region
    _
  $region29: #{astcg_no_spatial_forward.1} parent=0 // pred_fallthru
    _
  // Predicated region
  $region30: #{astcg_no_spatial_forward.1} parent=0 // pred_check
    _
  $region31: #{astcg_no_spatial_forward.1} parent=0 // pred_check_branch
    %45 = sbr.rel (0) target = $region33
  $region32: #{astcg_no_spatial_forward.1} parent=0 // pred_region
    _
  $region33: #{astcg_no_spatial_forward.1} parent=0 // pred_fallthru
    _
  // Predicated region
  $region34: #{astcg_no_spatial_forward.1} parent=0 // pred_check
    _
  $region35: #{astcg_no_spatial_forward.1} parent=0 // pred_check_branch
    %47 = sbr.rel (0) target = $region37
  $region36: #{astcg_no_spatial_forward.1} parent=0 // pred_region
    _
  $region37: #{astcg_no_spatial_forward.1} parent=0 // pred_fallthru
    _
  // Predicated region
  $region38: #{astcg_no_spatial_forward.1} parent=0 // pred_check
    _
  $region39: #{astcg_no_spatial_forward.1} parent=0 // pred_check_branch
    %49 = sbr.rel (0) target = $region41
  $region40: #{astcg_no_spatial_forward.1} parent=0 // pred_region
    _
  $region41: #{astcg_no_spatial_forward.1} parent=0 // pred_fallthru
    _
  // Predicated region
  $region42: #{astcg_no_spatial_forward.1} parent=0 // pred_check
    _
  $region43: #{astcg_no_spatial_forward.1} parent=0 // pred_check_branch
    %51 = sbr.rel (0) target = $region45
  $region44: #{astcg_no_spatial_forward.1} parent=0 // pred_region
    _
  $region45: #{astcg_no_spatial_forward.1} parent=0 // pred_fallthru
    _
  // Predicated region
  $region46: #{astcg_no_spatial_forward.1} parent=0 // pred_check
    _
  $region47: #{astcg_no_spatial_forward.1} parent=0 // pred_check_branch
    %53 = sbr.rel (0) target = $region49
  $region48: #{astcg_no_spatial_forward.1} parent=0 // pred_region
    _
  $region49: #{astcg_no_spatial_forward.1} parent=0 // pred_fallthru
    _
  // Predicated region
  $region50: #{astcg_no_spatial_forward.1} parent=0 // pred_check
    _
  $region51: #{astcg_no_spatial_forward.1} parent=0 // pred_check_branch
    %55 = sbr.rel (0) target = $region53
  $region52: #{astcg_no_spatial_forward.1} parent=0 // pred_region
    _
  $region53: #{astcg_no_spatial_forward.1} parent=0 // pred_fallthru
    _
  // Predicated region
  $region54: #{astcg_no_spatial_forward.1} parent=0 // pred_check
    _
  $region55: #{astcg_no_spatial_forward.1} parent=0 // pred_check_branch
    %57 = sbr.rel (0) target = $region57
  $region56: #{astcg_no_spatial_forward.1} parent=0 // pred_region
    _
  $region57: #{astcg_no_spatial_forward.1} parent=0 // pred_fallthru
    _
  // Predicated region
  $region58: #{astcg_no_spatial_forward.1} parent=0 // pred_check
    _
  $region59: #{astcg_no_spatial_forward.1} parent=0 // pred_check_branch
    %59 = sbr.rel (0) target = $region61
  $region60: #{astcg_no_spatial_forward.1} parent=0 // pred_region
    _
  $region61: #{astcg_no_spatial_forward.1} parent=0 // pred_fallthru
    _
  // Predicated region
  $region62: #{astcg_no_spatial_forward.1} parent=0 // pred_check
    _
  $region63: #{astcg_no_spatial_forward.1} parent=0 // pred_check_branch
    %61 = sbr.rel (0) target = $region65
  $region64: #{astcg_no_spatial_forward.1} parent=0 // pred_region
    _
  $region65: #{astcg_no_spatial_forward.1} parent=0 // pred_fallthru
    _
  // Predicated region
  $region66: #{astcg_no_spatial_forward.1} parent=0 // pred_check
    _
  $region67: #{astcg_no_spatial_forward.1} parent=0 // pred_check_branch
    %63 = sbr.rel (0) target = $region69
  $region68: #{astcg_no_spatial_forward.1} parent=0 // pred_region
    _
  $region69: #{astcg_no_spatial_forward.1} parent=0 // pred_fallthru
    _
  // Predicated region
  $region70: #{astcg_no_spatial_forward.1} parent=0 // pred_check
    _
  $region71: #{astcg_no_spatial_forward.1} parent=0 // pred_check_branch
    %65 = sbr.rel (0) target = $region73
  $region72: #{astcg_no_spatial_forward.1} parent=0 // pred_region
    _
  $region73: #{astcg_no_spatial_forward.1} parent=0 // pred_fallthru
    _
  // Predicated region
  $region74: #{astcg_no_spatial_forward.1} parent=0 // pred_check
    _
  $region75: #{astcg_no_spatial_forward.1} parent=0 // pred_check_branch
    %67 = sbr.rel (0) target = $region77
  $region76: #{astcg_no_spatial_forward.1} parent=0 // pred_region
    _
  $region77: #{astcg_no_spatial_forward.1} parent=0 // pred_fallthru
    _
  // Predicated region
  $region78: #{astcg_no_spatial_forward.1} parent=0 // pred_check
    _
  $region79: #{astcg_no_spatial_forward.1} parent=0 // pred_check_branch
    %69 = sbr.rel (0) target = $region81
  $region80: #{astcg_no_spatial_forward.1} parent=0 // pred_region
    _
  $region81: #{astcg_no_spatial_forward.1} parent=0 // pred_fallthru
    _
  // Predicated region
  $region82: #{astcg_no_spatial_forward.1} parent=0 // pred_check
    _
  $region83: #{astcg_no_spatial_forward.1} parent=0 // pred_check_branch
    %71 = sbr.rel (0) target = $region85
  $region84: #{astcg_no_spatial_forward.1} parent=0 // pred_region
    _
  $region85: #{astcg_no_spatial_forward.1} parent=0 // pred_fallthru
    _
  // Predicated region
  $region86: #{astcg_no_spatial_forward.1} parent=0 // pred_check
    _
  $region87: #{astcg_no_spatial_forward.1} parent=0 // pred_check_branch
    %73 = sbr.rel (0) target = $region89
  $region88: #{astcg_no_spatial_forward.1} parent=0 // pred_region
    _
  $region89: #{astcg_no_spatial_forward.1} parent=0 // pred_fallthru
    _
  // Predicated region
  $region90: #{astcg_no_spatial_forward.1} parent=0 // pred_check
    _
  $region91: #{astcg_no_spatial_forward.1} parent=0 // pred_check_branch
    %75 = sbr.rel (0) target = $region93
  $region92: #{astcg_no_spatial_forward.1} parent=0 // pred_region
    _
  $region93: #{astcg_no_spatial_forward.1} parent=0 // pred_fallthru
    _
  // Predicated region
  $region94: #{astcg_no_spatial_forward.1} parent=0 // pred_check
    _
  $region95: #{astcg_no_spatial_forward.1} parent=0 // pred_check_branch
    %77 = sbr.rel (0) target = $region97
  $region96: #{astcg_no_spatial_forward.1} parent=0 // pred_region
    _
  $region97: #{astcg_no_spatial_forward.1} parent=0 // pred_fallthru
    _
  // Predicated region
  $region98: #{astcg_no_spatial_forward.1} parent=0 // pred_check
    _
  $region99: #{astcg_no_spatial_forward.1} parent=0 // pred_check_branch
    %79 = sbr.rel (0) target = $region101
  $region100: #{astcg_no_spatial_forward.1} parent=0 // pred_region
    _
  $region101: #{astcg_no_spatial_forward.1} parent=0 // pred_fallthru
    _
  %v81 = vld [vmem:[%s0] sm:$0x3]
  %v82 = vld [vmem:[%s0 + $0x2] sm:$0x3]
  %v83 = vld [vmem:[%s0 + $0x4] sm:$0x3]
  %v84 = vld [vmem:[%s0 + $0x6] sm:$0x3]
  %v85 = vld [vmem:[%s0 + $0x8] sm:$0x3]
  %v86 = vld [vmem:[%s0 + $0xa] sm:$0x3]
  %v87 = vld [vmem:[%s0 + $0xc] sm:$0x3]
  %v88 = vld [vmem:[%s0 + $0xe] sm:$0x3]
  %v89 = vld [vmem:[%s0 + $0x10] sm:$0x3]
  %v90 = vld [vmem:[%s0 + $0x12] sm:$0x3]
  %v91 = vld [vmem:[%s0 + $0x14] sm:$0x3]
  %v92 = vld [vmem:[%s0 + $0x16] sm:$0x3]
  %v93 = vld [vmem:[%s0 + $0x18] sm:$0x3]
  %v94 = vld [vmem:[%s0 + $0x1a] sm:$0x3]
  %v95 = vld [vmem:[%s0 + $0x1c] sm:$0x3]
  %v96 = vld [vmem:[%s0 + $0x1e] sm:$0x3]
  %v113 = vcombine.low %v81, %v82
  %v114 = vcombine.low %v83, %v84
  %v116 = vunpack.c.l.s4 1983009808
  %v117 = vunpack.c.0.s8 %v116
  %v118 = vlaneseq
  %v119 = vshrl.u32 %v118, 7
  %v120 = vsub.s32 %v117, %v119
  %v121 = vrot.slane %v113, %v120
  %v123 = vunpack.c.l.s4 1983009808
  %v124 = vunpack.c.0.s8 %v123
  %v125 = vlaneseq
  %v126 = vshrl.u32 %v125, 7
  %v127 = vsub.s32 %v124, %v126
  %v128 = vrot.slane %v114, %v127
  %v129 = vcombine.low %v121, %v128
  %v130 = vcombine.low %v85, %v86
  %v131 = vcombine.low %v87, %v88
  %v133 = vunpack.c.l.s4 1983009808
  %v134 = vunpack.c.0.s8 %v133
  %v135 = vlaneseq
  %v136 = vshrl.u32 %v135, 7
  %v137 = vsub.s32 %v134, %v136
  %v138 = vrot.slane %v130, %v137
  %v140 = vunpack.c.l.s4 1983009808
  %v141 = vunpack.c.0.s8 %v140
  %v142 = vlaneseq
  %v143 = vshrl.u32 %v142, 7
  %v144 = vsub.s32 %v141, %v143
  %v145 = vrot.slane %v131, %v144
  %v146 = vcombine.low %v138, %v145
  %v147 = vcombine.low %v89, %v90
  %v148 = vcombine.low %v91, %v92
  %v150 = vunpack.c.l.s4 1983009808
  %v151 = vunpack.c.0.s8 %v150
  %v152 = vlaneseq
  %v153 = vshrl.u32 %v152, 7
  %v154 = vsub.s32 %v151, %v153
  %v155 = vrot.slane %v147, %v154
  %v157 = vunpack.c.l.s4 1983009808
  %v158 = vunpack.c.0.s8 %v157
  %v159 = vlaneseq
  %v160 = vshrl.u32 %v159, 7
  %v161 = vsub.s32 %v158, %v160
  %v162 = vrot.slane %v148, %v161
  %v163 = vcombine.low %v155, %v162
  %v164 = vcombine.low %v93, %v94
  %v165 = vcombine.low %v95, %v96
  %v167 = vunpack.c.l.s4 1983009808
  %v168 = vunpack.c.0.s8 %v167
  %v169 = vlaneseq
  %v170 = vshrl.u32 %v169, 7
  %v171 = vsub.s32 %v168, %v170
  %v172 = vrot.slane %v164, %v171
  %v174 = vunpack.c.l.s4 1983009808
  %v175 = vunpack.c.0.s8 %v174
  %v176 = vlaneseq
  %v177 = vshrl.u32 %v176, 7
  %v178 = vsub.s32 %v175, %v177
  %v179 = vrot.slane %v165, %v178
  %v180 = vcombine.low %v172, %v179
  %v185 = vrot.slane %v129, 6
  %v186 = vrot.slane %v146, 6
  %v187 = vrot.slane %v163, 6
  %v188 = vrot.slane %v180, 6
  %v189 = vlaneseq
  %v190 = vshrl.u32 %v189, 7
  %vm191 = vcmp.lt.s32.totalorder %v190, 2
  %v192 = vsel %vm191, %v187, %v188
  %v193 = vsel %vm191, %v186, %v187
  %v194 = vsel %vm191, %v185, %v186
  %v195 = vsel %vm191, %v188, %v185
  %v196 = vadd.s32 %v190, 8
  %v197 = vadd.s32 %v190, 16
  %v198 = vadd.s32 %v190, 24
  %vm199 = vcmp.ge.s32.totalorder %v190, 2
  %vm200 = vcmp.ge.s32.totalorder %v196, 2
  %vm201 = vcmp.ge.s32.totalorder %v197, 2
  %vm202 = vcmp.ge.s32.totalorder %v198, 2
  %v203 = vsel %vm199, %v195, 0.0
  %v204 = vsel %vm200, %v194, 0.0
  %v205 = vsel %vm201, %v193, 0.0
  %v206 = vsel %vm202, %v192, 0.0
  %v207 = vld [vmem:[%s1] sm:$0xf]
  %v208 = vpack.c.bf16 %v204, %v203
  %v209 = vpack.c.bf16 %v206, %v205
  %v210 = vld [vmem:[%s2] sm:$0xf]
  %v211 = vpack.c.bf16 %v146, %v129
  %v212 = vpack.c.bf16 %v180, %v163
  %vm213 = vcmask 64512
  %v215 = vsel %vm213, %v211, 0
  %v218 = vsel %vm213, %v212, 0
  %vm220 = vcmask 1043456
  %v222 = vsel %vm220, %v210, 0
  %224 = vmatprep.subr.bf16.mxu0 0
  %225 = vmatpush1.bf16.msra.mxu0 %v222
  %226 = vmatprep.subr.bf16.mxu0 0
  %227 = vmatpush1.bf16.msra.mxu0 0
  %228 = vmatprep.subr.bf16.mxu0 0
  %229 = vmatpush1.bf16.msra.mxu0 0
  %230 = vmatprep.subr.bf16.mxu0 0
  %231 = vmatpush1.bf16.msra.mxu0 0
  %232 = vmatprep.subr.bf16.mxu0 0
  %233 = vmatpush1.bf16.msra.mxu0 0
  %234 = vmatprep.subr.bf16.mxu0 0
  %235 = vmatpush1.bf16.msra.mxu0 0
  %236 = vmatprep.subr.bf16.mxu0 0
  %237 = vmatpush1.bf16.msra.mxu0 0
  %238 = vmatprep.subr.bf16.mxu0 0
  %239 = vmatpush1.bf16.msra.mxu0 0
  %240 = vmatprep.subr.bf16.mxu0 0
  %241 = vmatpush1.bf16.msra.mxu0 0
  %242 = vmatprep.subr.bf16.mxu0 0
  %243 = vmatpush1.bf16.msra.mxu0 0
  %244 = vmatprep.subr.bf16.mxu0 0
  %245 = vmatpush1.bf16.msra.mxu0 0
  %246 = vmatprep.subr.bf16.mxu0 0
  %247 = vmatpush1.bf16.msra.mxu0 0
  %248 = vmatprep.subr.bf16.mxu0 0
  %249 = vmatpush1.bf16.msra.mxu0 0
  %250 = vmatprep.subr.bf16.mxu0 0
  %251 = vmatpush1.bf16.msra.mxu0 0
  %252 = vmatprep.subr.bf16.mxu0 0
  %253 = vmatpush1.bf16.msra.mxu0 0
  %254 = vmatprep.subr.bf16.mxu0 0
  %255 = vmatpush1.bf16.msra.mxu0 0
  %256 = vmatprep.mubr.bf16.mxu0 0
  %257 = vmatmul.mubr.bf16.gmra.mrb[0].mxu0 %v215
  %v258 = vpop.f32.mrb[0].mxu0
  %v259 = vadd.f32 0.0, %v258
  %v260 = vpop.f32.mrb[0].mxu0
  %v261 = vpop.f32.mrb[0].mxu0
  %v262 = vadd.f32 0.0, %v261
  %v263 = vpop.f32.mrb[0].mxu0
  %264 = vmatprep.mubr.bf16.mxu0 0
  %265 = vmatmul.mubr.bf16.gmra.mrb[0].mxu0 %v218
  %v266 = vpop.f32.mrb[0].mxu0
  %v267 = vadd.f32 0.0, %v266
  %v268 = vpop.f32.mrb[0].mxu0
  %v269 = vpop.f32.mrb[0].mxu0
  %v270 = vadd.f32 0.0, %v269
  %v271 = vpop.f32.mrb[0].mxu0
  %272 = vdwg.mxu0
  %v274 = vsel %vm213, %v208, 0
  %v277 = vsel %vm213, %v209, 0
  %v280 = vsel %vm220, %v207, 0
  %282 = vmatprep.subr.bf16.mxu0 0
  %283 = vmatpush1.bf16.msra.mxu0 %v280
  %284 = vmatprep.subr.bf16.mxu0 0
  %285 = vmatpush1.bf16.msra.mxu0 0
  %286 = vmatprep.subr.bf16.mxu0 0
  %287 = vmatpush1.bf16.msra.mxu0 0
  %288 = vmatprep.subr.bf16.mxu0 0
  %289 = vmatpush1.bf16.msra.mxu0 0
  %290 = vmatprep.subr.bf16.mxu0 0
  %291 = vmatpush1.bf16.msra.mxu0 0
  %292 = vmatprep.subr.bf16.mxu0 0
  %293 = vmatpush1.bf16.msra.mxu0 0
  %294 = vmatprep.subr.bf16.mxu0 0
  %295 = vmatpush1.bf16.msra.mxu0 0
  %296 = vmatprep.subr.bf16.mxu0 0
  %297 = vmatpush1.bf16.msra.mxu0 0
  %298 = vmatprep.subr.bf16.mxu0 0
  %299 = vmatpush1.bf16.msra.mxu0 0
  %300 = vmatprep.subr.bf16.mxu0 0
  %301 = vmatpush1.bf16.msra.mxu0 0
  %302 = vmatprep.subr.bf16.mxu0 0
  %303 = vmatpush1.bf16.msra.mxu0 0
  %304 = vmatprep.subr.bf16.mxu0 0
  %305 = vmatpush1.bf16.msra.mxu0 0
  %306 = vmatprep.subr.bf16.mxu0 0
  %307 = vmatpush1.bf16.msra.mxu0 0
  %308 = vmatprep.subr.bf16.mxu0 0
  %309 = vmatpush1.bf16.msra.mxu0 0
  %310 = vmatprep.subr.bf16.mxu0 0
  %311 = vmatpush1.bf16.msra.mxu0 0
  %312 = vmatprep.subr.bf16.mxu0 0
  %313 = vmatpush1.bf16.msra.mxu0 0
  %314 = vmatprep.mubr.bf16.mxu0 0
  %315 = vmatmul.mubr.bf16.gmra.mrb[0].mxu0 %v274
  %v316 = vpop.f32.mrb[0].mxu0
  %v317 = vadd.f32 %v259, %v316
  %v318 = vpop.f32.mrb[0].mxu0
  %v319 = vpop.f32.mrb[0].mxu0
  %v320 = vadd.f32 %v262, %v319
  %v321 = vpop.f32.mrb[0].mxu0
  %322 = vmatprep.mubr.bf16.mxu0 0
  %323 = vmatmul.mubr.bf16.gmra.mrb[0].mxu0 %v277
  %v324 = vpop.f32.mrb[0].mxu0
  %v325 = vadd.f32 %v267, %v324
  %v326 = vpop.f32.mrb[0].mxu0
  %v327 = vpop.f32.mrb[0].mxu0
  %v328 = vadd.f32 %v270, %v327
  %v329 = vpop.f32.mrb[0].mxu0
  %330 = vdwg.mxu0
  %v331 = vld [vmem:[%s3] sm:$0x1]
  %v333 = vlaneseq
  %v334 = vshrl.u32 %v333, 7
  %v335 = vsub.s32 0, %v334
  %v336 = vrot.slane %v331, %v335
  %v338 = vadd.f32 %v317, %v336
  %v339 = vadd.f32 %v320, %v336
  %v340 = vadd.f32 %v325, %v336
  %v341 = vadd.f32 %v328, %v336
  %v342 = vmax.f32 %v338, 0.0
  %v343 = vmax.f32 %v339, 0.0
  %v344 = vmax.f32 %v340, 0.0
  %v345 = vmax.f32 %v341, 0.0
  %v346 = vrot.slane %v342, 6
  %v347 = vrot.slane %v343, 6
  %v348 = vrot.slane %v344, 6
  %v349 = vrot.slane %v345, 6
  %v350 = vsel %vm191, %v348, %v349
  %v351 = vsel %vm191, %v347, %v348
  %v352 = vsel %vm191, %v346, %v347
  %v353 = vsel %vm191, %v349, %v346
  %v354 = vsel %vm199, %v353, 0.0
  %v355 = vsel %vm200, %v352, 0.0
  %v356 = vsel %vm201, %v351, 0.0
  %v357 = vsel %vm202, %v350, 0.0
  %v358 = vld [vmem:[%s4] sm:$0xf]
  %v359 = vld [vmem:[%s4 + $0x4] sm:$0xf]
  %v360 = vld [vmem:[%s4 + $0x8] sm:$0xf]
  %v361 = vld [vmem:[%s4 + $0xc] sm:$0xf]
  %v362 = vld [vmem:[%s4 + $0x10] sm:$0xf]
  %v363 = vld [vmem:[%s4 + $0x14] sm:$0xf]
  %v364 = vld [vmem:[%s4 + $0x18] sm:$0xf]
  %v365 = vld [vmem:[%s4 + $0x1c] sm:$0xf]
  %v366 = vpack.c.bf16 %v355, %v354
  %v367 = vpack.c.bf16 %v357, %v356
  %v368 = vld [vmem:[%s5] sm:$0xf]
  %v369 = vld [vmem:[%s5 + $0x4] sm:$0xf]
  %v370 = vld [vmem:[%s5 + $0x8] sm:$0xf]
  %v371 = vld [vmem:[%s5 + $0xc] sm:$0xf]
  %v372 = vld [vmem:[%s5 + $0x10] sm:$0xf]
  %v373 = vld [vmem:[%s5 + $0x14] sm:$0xf]
  %v374 = vld [vmem:[%s5 + $0x18] sm:$0xf]
  %v375 = vld [vmem:[%s5 + $0x1c] sm:$0xf]
  %v376 = vpack.c.bf16 %v343, %v342
  %v377 = vpack.c.bf16 %v345, %v344
  %v386 = vunpack.c.l.b16 %v368
  %v387 = vunpack.c.l.b16 %v369
  %v388 = vunpack.c.l.b16 %v370
  %v389 = vunpack.c.l.b16 %v371
  %v390 = vunpack.c.l.b16 %v372
  %v391 = vunpack.c.l.b16 %v373
  %v392 = vunpack.c.l.b16 %v374
  %v393 = vunpack.c.l.b16 %v375
  %v394 = vpack.c.b16 %v387, %v386
  %v395 = vpack.c.b16 %v389, %v388
  %v396 = vpack.c.b16 %v391, %v390
  %v397 = vpack.c.b16 %v393, %v392
  %vm402 = vcmask 523264
  %v404 = vsel %vm402, %v376, 0
  %v407 = vsel %vm402, %v377, 0
  %409 = vmatprep.subr.bf16.mxu0 0
  %410 = vmatpush1.bf16.msra.mxu0 %v394
  %411 = vmatprep.subr.bf16.mxu0 0
  %412 = vmatpush1.bf16.msra.mxu0 %v395
  %413 = vmatprep.subr.bf16.mxu0 0
  %414 = vmatpush1.bf16.msra.mxu0 %v396
  %415 = vmatprep.subr.bf16.mxu0 0
  %416 = vmatpush1.bf16.msra.mxu0 %v397
  %417 = vmatprep.subr.bf16.mxu0 0
  %418 = vmatpush1.bf16.msra.mxu0 0
  %419 = vmatprep.subr.bf16.mxu0 0
  %420 = vmatpush1.bf16.msra.mxu0 0
  %421 = vmatprep.subr.bf16.mxu0 0
  %422 = vmatpush1.bf16.msra.mxu0 0
  %423 = vmatprep.subr.bf16.mxu0 0
  %424 = vmatpush1.bf16.msra.mxu0 0
  %425 = vmatprep.subr.bf16.mxu0 0
  %426 = vmatpush1.bf16.msra.mxu0 0
  %427 = vmatprep.subr.bf16.mxu0 0
  %428 = vmatpush1.bf16.msra.mxu0 0
  %429 = vmatprep.subr.bf16.mxu0 0
  %430 = vmatpush1.bf16.msra.mxu0 0
  %431 = vmatprep.subr.bf16.mxu0 0
  %432 = vmatpush1.bf16.msra.mxu0 0
  %433 = vmatprep.subr.bf16.mxu0 0
  %434 = vmatpush1.bf16.msra.mxu0 0
  %435 = vmatprep.subr.bf16.mxu0 0
  %436 = vmatpush1.bf16.msra.mxu0 0
  %437 = vmatprep.subr.bf16.mxu0 0
  %438 = vmatpush1.bf16.msra.mxu0 0
  %439 = vmatprep.subr.bf16.mxu0 0
  %440 = vmatpush1.bf16.msra.mxu0 0
  %441 = vmatprep.mubr.bf16.mxu0 0
  %442 = vmatmul.mubr.bf16.gmra.mrb[0].mxu0 %v404
  %v443 = vpop.f32.mrb[0].mxu0
  %v444 = vadd.f32 0.0, %v443
  %v445 = vpop.f32.mrb[0].mxu0
  %v446 = vpop.f32.mrb[0].mxu0
  %v447 = vadd.f32 0.0, %v446
  %v448 = vpop.f32.mrb[0].mxu0
  %449 = vmatprep.mubr.bf16.mxu0 0
  %450 = vmatmul.mubr.bf16.gmra.mrb[0].mxu0 %v407
  %v451 = vpop.f32.mrb[0].mxu0
  %v452 = vadd.f32 0.0, %v451
  %v453 = vpop.f32.mrb[0].mxu0
  %v454 = vpop.f32.mrb[0].mxu0
  %v455 = vadd.f32 0.0, %v454
  %v456 = vpop.f32.mrb[0].mxu0
  %457 = vdwg.mxu0
  %v466 = vunpack.c.l.b16 %v358
  %v467 = vunpack.c.l.b16 %v359
  %v468 = vunpack.c.l.b16 %v360
  %v469 = vunpack.c.l.b16 %v361
  %v470 = vunpack.c.l.b16 %v362
  %v471 = vunpack.c.l.b16 %v363
  %v472 = vunpack.c.l.b16 %v364
  %v473 = vunpack.c.l.b16 %v365
  %v474 = vpack.c.b16 %v467, %v466
  %v475 = vpack.c.b16 %v469, %v468
  %v476 = vpack.c.b16 %v471, %v470
  %v477 = vpack.c.b16 %v473, %v472
  %v483 = vsel %vm402, %v366, 0
  %v486 = vsel %vm402, %v367, 0
  %488 = vmatprep.subr.bf16.mxu0 0
  %489 = vmatpush1.bf16.msra.mxu0 %v474
  %490 = vmatprep.subr.bf16.mxu0 0
  %491 = vmatpush1.bf16.msra.mxu0 %v475
  %492 = vmatprep.subr.bf16.mxu0 0
  %493 = vmatpush1.bf16.msra.mxu0 %v476
  %494 = vmatprep.subr.bf16.mxu0 0
  %495 = vmatpush1.bf16.msra.mxu0 %v477
  %496 = vmatprep.subr.bf16.mxu0 0
  %497 = vmatpush1.bf16.msra.mxu0 0
  %498 = vmatprep.subr.bf16.mxu0 0
  %499 = vmatpush1.bf16.msra.mxu0 0
  %500 = vmatprep.subr.bf16.mxu0 0
  %501 = vmatpush1.bf16.msra.mxu0 0
  %502 = vmatprep.subr.bf16.mxu0 0
  %503 = vmatpush1.bf16.msra.mxu0 0
  %504 = vmatprep.subr.bf16.mxu0 0
  %505 = vmatpush1.bf16.msra.mxu0 0
  %506 = vmatprep.subr.bf16.mxu0 0
  %507 = vmatpush1.bf16.msra.mxu0 0
  %508 = vmatprep.subr.bf16.mxu0 0
  %509 = vmatpush1.bf16.msra.mxu0 0
  %510 = vmatprep.subr.bf16.mxu0 0
  %511 = vmatpush1.bf16.msra.mxu0 0
  %512 = vmatprep.subr.bf16.mxu0 0
  %513 = vmatpush1.bf16.msra.mxu0 0
  %514 = vmatprep.subr.bf16.mxu0 0
  %515 = vmatpush1.bf16.msra.mxu0 0
  %516 = vmatprep.subr.bf16.mxu0 0
  %517 = vmatpush1.bf16.msra.mxu0 0
  %518 = vmatprep.subr.bf16.mxu0 0
  %519 = vmatpush1.bf16.msra.mxu0 0
  %520 = vmatprep.mubr.bf16.mxu0 0
  %521 = vmatmul.mubr.bf16.gmra.mrb[0].mxu0 %v483
  %v522 = vpop.f32.mrb[0].mxu0
  %v523 = vadd.f32 %v444, %v522
  %v524 = vpop.f32.mrb[0].mxu0
  %v525 = vpop.f32.mrb[0].mxu0
  %v526 = vadd.f32 %v447, %v525
  %v527 = vpop.f32.mrb[0].mxu0
  %528 = vmatprep.mubr.bf16.mxu0 0
  %529 = vmatmul.mubr.bf16.gmra.mrb[0].mxu0 %v486
  %v530 = vpop.f32.mrb[0].mxu0
  %v531 = vadd.f32 %v452, %v530
  %v532 = vpop.f32.mrb[0].mxu0
  %v533 = vpop.f32.mrb[0].mxu0
  %v534 = vadd.f32 %v455, %v533
  %v535 = vpop.f32.mrb[0].mxu0
  %536 = vdwg.mxu0
  %v537 = vld [vmem:[%s6] sm:$0x1]
  %v539 = vlaneseq
  %v540 = vshrl.u32 %v539, 7
  %v541 = vsub.s32 0, %v540
  %v542 = vrot.slane %v537, %v541
  %v544 = vadd.f32 %v523, %v542
  %v545 = vadd.f32 %v526, %v542
  %v546 = vadd.f32 %v531, %v542
  %v547 = vadd.f32 %v534, %v542
  %v548 = vmax.f32 %v544, 0.0
  %v549 = vmax.f32 %v545, 0.0
  %v550 = vmax.f32 %v546, 0.0
  %v551 = vmax.f32 %v547, 0.0
  %v552 = vld [vmem:[%s7] sm:$0xf]
  %v553 = vld [vmem:[%s8] sm:$0x1]
  %v555 = vlaneseq
  %v556 = vshrl.u32 %v555, 7
  %v557 = vsub.s32 0, %v556
  %v558 = vrot.slane %v553, %v557
  %v561 = vsel %vm220, %v552, 0
  %563 = vmatprep.subr.bf16.mxu0 0
  %564 = vmatpush1.bf16.msra.mxu0 %v561
  %565 = vmatprep.subr.bf16.mxu0 0
  %566 = vmatpush1.bf16.msra.mxu0 0
  %567 = vmatprep.subr.bf16.mxu0 0
  %568 = vmatpush1.bf16.msra.mxu0 0
  %569 = vmatprep.subr.bf16.mxu0 0
  %570 = vmatpush1.bf16.msra.mxu0 0
  %571 = vmatprep.subr.bf16.mxu0 0
  %572 = vmatpush1.bf16.msra.mxu0 0
  %573 = vmatprep.subr.bf16.mxu0 0
  %574 = vmatpush1.bf16.msra.mxu0 0
  %575 = vmatprep.subr.bf16.mxu0 0
  %576 = vmatpush1.bf16.msra.mxu0 0
  %577 = vmatprep.subr.bf16.mxu0 0
  %578 = vmatpush1.bf16.msra.mxu0 0
  %579 = vmatprep.subr.bf16.mxu0 0
  %580 = vmatpush1.bf16.msra.mxu0 0
  %581 = vmatprep.subr.bf16.mxu0 0
  %582 = vmatpush1.bf16.msra.mxu0 0
  %583 = vmatprep.subr.bf16.mxu0 0
  %584 = vmatpush1.bf16.msra.mxu0 0
  %585 = vmatprep.subr.bf16.mxu0 0
  %586 = vmatpush1.bf16.msra.mxu0 0
  %587 = vmatprep.subr.bf16.mxu0 0
  %588 = vmatpush1.bf16.msra.mxu0 0
  %589 = vmatprep.subr.bf16.mxu0 0
  %590 = vmatpush1.bf16.msra.mxu0 0
  %591 = vmatprep.subr.bf16.mxu0 0
  %592 = vmatpush1.bf16.msra.mxu0 0
  %593 = vmatprep.subr.bf16.mxu0 0
  %594 = vmatpush1.bf16.msra.mxu0 0
  %595 = vmatprep.mubr.bf16.mxu0 0
  %596 = vmatmul.mubr.bf16.gmra.mrb[0].mxu0 %v215
  %v597 = vpop.f32.mrb[0].mxu0
  %v598 = vadd.f32 %v558, %v597
  %v599 = vpop.f32.mrb[0].mxu0
  %v600 = vpop.f32.mrb[0].mxu0
  %v601 = vadd.f32 %v558, %v600
  %v602 = vpop.f32.mrb[0].mxu0
  %603 = vmatprep.mubr.bf16.mxu0 0
  %604 = vmatmul.mubr.bf16.gmra.mrb[0].mxu0 %v218
  %v605 = vpop.f32.mrb[0].mxu0
  %v606 = vadd.f32 %v558, %v605
  %v607 = vpop.f32.mrb[0].mxu0
  %v608 = vpop.f32.mrb[0].mxu0
  %v609 = vadd.f32 %v558, %v608
  %v610 = vpop.f32.mrb[0].mxu0
  %611 = vdwg.mxu0
  %v612 = vadd.f32 %v548, %v598
  %v613 = vadd.f32 %v549, %v601
  %v614 = vadd.f32 %v550, %v606
  %v615 = vadd.f32 %v551, %v609
  %v616 = vmax.f32 %v612, 0.0
  %v617 = vmax.f32 %v613, 0.0
  %v618 = vmax.f32 %v614, 0.0
  %v619 = vmax.f32 %v615, 0.0
  %v620 = vrot.slane %v616, 4
  %v621 = vrot.slane %v617, 4
  %v622 = vrot.slane %v618, 4
  %v623 = vrot.slane %v619, 4
  %vm624 = vcmp.lt.s32.totalorder %v190, 4
  %v625 = vsel %vm624, %v622, %v623
  %v626 = vsel %vm624, %v621, %v622
  %v627 = vsel %vm624, %v620, %v621
  %v628 = vsel %vm624, %v623, %v620
  %vm629 = vcmp.ge.s32.totalorder %v190, 4
  %vm630 = vcmp.ge.s32.totalorder %v196, 4
  %vm631 = vcmp.ge.s32.totalorder %v197, 4
  %vm632 = vcmp.ge.s32.totalorder %v198, 4
  %v633 = vsel %vm629, %v628, 0.0
  %v634 = vsel %vm630, %v627, 0.0
  %v635 = vsel %vm631, %v626, 0.0
  %v636 = vsel %vm632, %v625, 0.0
  %v637 = vld [vmem:[%s9] sm:$0xf]
  %v638 = vld [vmem:[%s9 + $0x4] sm:$0xf]
  %v639 = vld [vmem:[%s9 + $0x8] sm:$0xf]
  %v640 = vld [vmem:[%s9 + $0xc] sm:$0xf]
  %v641 = vld [vmem:[%s9 + $0x10] sm:$0xf]
  %v642 = vld [vmem:[%s9 + $0x14] sm:$0xf]
  %v643 = vld [vmem:[%s9 + $0x18] sm:$0xf]
  %v644 = vld [vmem:[%s9 + $0x1c] sm:$0xf]
  %v645 = vpack.c.bf16 %v634, %v633
  %v646 = vpack.c.bf16 %v636, %v635
  %v647 = vld [vmem:[%s10] sm:$0xf]
  %v648 = vld [vmem:[%s10 + $0x4] sm:$0xf]
  %v649 = vld [vmem:[%s10 + $0x8] sm:$0xf]
  %v650 = vld [vmem:[%s10 + $0xc] sm:$0xf]
  %v651 = vld [vmem:[%s10 + $0x10] sm:$0xf]
  %v652 = vld [vmem:[%s10 + $0x14] sm:$0xf]
  %v653 = vld [vmem:[%s10 + $0x18] sm:$0xf]
  %v654 = vld [vmem:[%s10 + $0x1c] sm:$0xf]
  %v655 = vpack.c.bf16 %v617, %v616
  %v656 = vpack.c.bf16 %v619, %v618
  %v665 = vunpack.c.l.b16 %v647
  %v666 = vunpack.c.l.b16 %v648
  %v667 = vunpack.c.l.b16 %v649
  %v668 = vunpack.c.l.b16 %v650
  %v669 = vunpack.c.l.b16 %v651
  %v670 = vunpack.c.l.b16 %v652
  %v671 = vunpack.c.l.b16 %v653
  %v672 = vunpack.c.l.b16 %v654
  %v673 = vpack.c.b16 %v666, %v665
  %v674 = vpack.c.b16 %v668, %v667
  %v675 = vpack.c.b16 %v670, %v669
  %v676 = vpack.c.b16 %v672, %v671
  %v682 = vsel %vm402, %v655, 0
  %v685 = vsel %vm402, %v656, 0
  %687 = vmatprep.subr.bf16.mxu0 0
  %688 = vmatpush1.bf16.msra.mxu0 %v673
  %689 = vmatprep.subr.bf16.mxu0 0
  %690 = vmatpush1.bf16.msra.mxu0 %v674
  %691 = vmatprep.subr.bf16.mxu0 0
  %692 = vmatpush1.bf16.msra.mxu0 %v675
  %693 = vmatprep.subr.bf16.mxu0 0
  %694 = vmatpush1.bf16.msra.mxu0 %v676
  %695 = vmatprep.subr.bf16.mxu0 0
  %696 = vmatpush1.bf16.msra.mxu0 0
  %697 = vmatprep.subr.bf16.mxu0 0
  %698 = vmatpush1.bf16.msra.mxu0 0
  %699 = vmatprep.subr.bf16.mxu0 0
  %700 = vmatpush1.bf16.msra.mxu0 0
  %701 = vmatprep.subr.bf16.mxu0 0
  %702 = vmatpush1.bf16.msra.mxu0 0
  %703 = vmatprep.subr.bf16.mxu0 0
  %704 = vmatpush1.bf16.msra.mxu0 0
  %705 = vmatprep.subr.bf16.mxu0 0
  %706 = vmatpush1.bf16.msra.mxu0 0
  %707 = vmatprep.subr.bf16.mxu0 0
  %708 = vmatpush1.bf16.msra.mxu0 0
  %709 = vmatprep.subr.bf16.mxu0 0
  %710 = vmatpush1.bf16.msra.mxu0 0
  %711 = vmatprep.subr.bf16.mxu0 0
  %712 = vmatpush1.bf16.msra.mxu0 0
  %713 = vmatprep.subr.bf16.mxu0 0
  %714 = vmatpush1.bf16.msra.mxu0 0
  %715 = vmatprep.subr.bf16.mxu0 0
  %716 = vmatpush1.bf16.msra.mxu0 0
  %717 = vmatprep.subr.bf16.mxu0 0
  %718 = vmatpush1.bf16.msra.mxu0 0
  %719 = vmatprep.mubr.bf16.mxu0 0
  %720 = vmatmul.mubr.bf16.gmra.mrb[0].mxu0 %v682
  %v721 = vpop.f32.mrb[0].mxu0
  %v722 = vadd.f32 0.0, %v721
  %v723 = vpop.f32.mrb[0].mxu0
  %v724 = vpop.f32.mrb[0].mxu0
  %v725 = vadd.f32 0.0, %v724
  %v726 = vpop.f32.mrb[0].mxu0
  %727 = vmatprep.mubr.bf16.mxu0 0
  %728 = vmatmul.mubr.bf16.gmra.mrb[0].mxu0 %v685
  %v729 = vpop.f32.mrb[0].mxu0
  %v730 = vadd.f32 0.0, %v729
  %v731 = vpop.f32.mrb[0].mxu0
  %v732 = vpop.f32.mrb[0].mxu0
  %v733 = vadd.f32 0.0, %v732
  %v734 = vpop.f32.mrb[0].mxu0
  %735 = vdwg.mxu0
  %v744 = vunpack.c.l.b16 %v637
  %v745 = vunpack.c.l.b16 %v638
  %v746 = vunpack.c.l.b16 %v639
  %v747 = vunpack.c.l.b16 %v640
  %v748 = vunpack.c.l.b16 %v641
  %v749 = vunpack.c.l.b16 %v642
  %v750 = vunpack.c.l.b16 %v643
  %v751 = vunpack.c.l.b16 %v644
  %v752 = vpack.c.b16 %v745, %v744
  %v753 = vpack.c.b16 %v747, %v746
  %v754 = vpack.c.b16 %v749, %v748
  %v755 = vpack.c.b16 %v751, %v750
  %v761 = vsel %vm402, %v645, 0
  %v764 = vsel %vm402, %v646, 0
  %766 = vmatprep.subr.bf16.mxu0 0
  %767 = vmatpush1.bf16.msra.mxu0 %v752
  %768 = vmatprep.subr.bf16.mxu0 0
  %769 = vmatpush1.bf16.msra.mxu0 %v753
  %770 = vmatprep.subr.bf16.mxu0 0
  %771 = vmatpush1.bf16.msra.mxu0 %v754
  %772 = vmatprep.subr.bf16.mxu0 0
  %773 = vmatpush1.bf16.msra.mxu0 %v755
  %774 = vmatprep.subr.bf16.mxu0 0
  %775 = vmatpush1.bf16.msra.mxu0 0
  %776 = vmatprep.subr.bf16.mxu0 0
  %777 = vmatpush1.bf16.msra.mxu0 0
  %778 = vmatprep.subr.bf16.mxu0 0
  %779 = vmatpush1.bf16.msra.mxu0 0
  %780 = vmatprep.subr.bf16.mxu0 0
  %781 = vmatpush1.bf16.msra.mxu0 0
  %782 = vmatprep.subr.bf16.mxu0 0
  %783 = vmatpush1.bf16.msra.mxu0 0
  %784 = vmatprep.subr.bf16.mxu0 0
  %785 = vmatpush1.bf16.msra.mxu0 0
  %786 = vmatprep.subr.bf16.mxu0 0
  %787 = vmatpush1.bf16.msra.mxu0 0
  %788 = vmatprep.subr.bf16.mxu0 0
  %789 = vmatpush1.bf16.msra.mxu0 0
  %790 = vmatprep.subr.bf16.mxu0 0
  %791 = vmatpush1.bf16.msra.mxu0 0
  %792 = vmatprep.subr.bf16.mxu0 0
  %793 = vmatpush1.bf16.msra.mxu0 0
  %794 = vmatprep.subr.bf16.mxu0 0
  %795 = vmatpush1.bf16.msra.mxu0 0
  %796 = vmatprep.subr.bf16.mxu0 0
  %797 = vmatpush1.bf16.msra.mxu0 0
  %798 = vmatprep.mubr.bf16.mxu0 0
  %799 = vmatmul.mubr.bf16.gmra.mrb[0].mxu0 %v761
  %v800 = vpop.f32.mrb[0].mxu0
  %v801 = vadd.f32 %v722, %v800
  %v802 = vpop.f32.mrb[0].mxu0
  %v803 = vpop.f32.mrb[0].mxu0
  %v804 = vadd.f32 %v725, %v803
  %v805 = vpop.f32.mrb[0].mxu0
  %806 = vmatprep.mubr.bf16.mxu0 0
  %807 = vmatmul.mubr.bf16.gmra.mrb[0].mxu0 %v764
  %v808 = vpop.f32.mrb[0].mxu0
  %v809 = vadd.f32 %v730, %v808
  %v810 = vpop.f32.mrb[0].mxu0
  %v811 = vpop.f32.mrb[0].mxu0
  %v812 = vadd.f32 %v733, %v811
  %v813 = vpop.f32.mrb[0].mxu0
  %814 = vdwg.mxu0
  %v815 = vld [vmem:[%s11] sm:$0x1]
  %v817 = vlaneseq
  %v818 = vshrl.u32 %v817, 7
  %v819 = vsub.s32 0, %v818
  %v820 = vrot.slane %v815, %v819
  %v822 = vadd.f32 %v801, %v820
  %v823 = vadd.f32 %v804, %v820
  %v824 = vadd.f32 %v809, %v820
  %v825 = vadd.f32 %v812, %v820
  %v826 = vmax.f32 %v822, 0.0
  %v827 = vmax.f32 %v823, 0.0
  %v828 = vmax.f32 %v824, 0.0
  %v829 = vmax.f32 %v825, 0.0
  %v830 = vrot.slane %v826, 4
  %v831 = vrot.slane %v827, 4
  %v832 = vrot.slane %v828, 4
  %v833 = vrot.slane %v829, 4
  %v834 = vsel %vm624, %v832, %v833
  %v835 = vsel %vm624, %v831, %v832
  %v836 = vsel %vm624, %v830, %v831
  %v837 = vsel %vm624, %v833, %v830
  %v838 = vsel %vm629, %v837, 0.0
  %v839 = vsel %vm630, %v836, 0.0
  %v840 = vsel %vm631, %v835, 0.0
  %v841 = vsel %vm632, %v834, 0.0
  %v842 = vld [vmem:[%s12] sm:$0xf]
  %v843 = vld [vmem:[%s12 + $0x4] sm:$0xf]
  %v844 = vld [vmem:[%s12 + $0x8] sm:$0xf]
  %v845 = vld [vmem:[%s12 + $0xc] sm:$0xf]
  %v846 = vpack.c.bf16 %v839, %v838
  %v847 = vpack.c.bf16 %v841, %v840
  %v848 = vld [vmem:[%s13] sm:$0xf]
  %v849 = vld [vmem:[%s13 + $0x4] sm:$0xf]
  %v850 = vld [vmem:[%s13 + $0x8] sm:$0xf]
  %v851 = vld [vmem:[%s13 + $0xc] sm:$0xf]
  %v852 = vpack.c.bf16 %v827, %v826
  %v853 = vpack.c.bf16 %v829, %v828
  %v858 = vunpack.c.l.b16 %v848
  %v859 = vunpack.c.l.b16 %v849
  %v860 = vunpack.c.l.b16 %v850
  %v861 = vunpack.c.l.b16 %v851
  %v862 = vpack.c.b16 %v859, %v858
  %v863 = vpack.c.b16 %v861, %v860
  %vm866 = vcmask 261120
  %v868 = vsel %vm866, %v852, 0
  %v871 = vsel %vm866, %v853, 0
  %873 = vmatprep.subr.bf16.mxu0 0
  %874 = vmatpush1.bf16.msra.mxu0 %v862
  %875 = vmatprep.subr.bf16.mxu0 0
  %876 = vmatpush1.bf16.msra.mxu0 %v863
  %877 = vmatprep.subr.bf16.mxu0 0
  %878 = vmatpush1.bf16.msra.mxu0 0
  %879 = vmatprep.subr.bf16.mxu0 0
  %880 = vmatpush1.bf16.msra.mxu0 0
  %881 = vmatprep.subr.bf16.mxu0 0
  %882 = vmatpush1.bf16.msra.mxu0 0
  %883 = vmatprep.subr.bf16.mxu0 0
  %884 = vmatpush1.bf16.msra.mxu0 0
  %885 = vmatprep.subr.bf16.mxu0 0
  %886 = vmatpush1.bf16.msra.mxu0 0
  %887 = vmatprep.subr.bf16.mxu0 0
  %888 = vmatpush1.bf16.msra.mxu0 0
  %889 = vmatprep.subr.bf16.mxu0 0
  %890 = vmatpush1.bf16.msra.mxu0 0
  %891 = vmatprep.subr.bf16.mxu0 0
  %892 = vmatpush1.bf16.msra.mxu0 0
  %893 = vmatprep.subr.bf16.mxu0 0
  %894 = vmatpush1.bf16.msra.mxu0 0
  %895 = vmatprep.subr.bf16.mxu0 0
  %896 = vmatpush1.bf16.msra.mxu0 0
  %897 = vmatprep.subr.bf16.mxu0 0
  %898 = vmatpush1.bf16.msra.mxu0 0
  %899 = vmatprep.subr.bf16.mxu0 0
  %900 = vmatpush1.bf16.msra.mxu0 0
  %901 = vmatprep.subr.bf16.mxu0 0
  %902 = vmatpush1.bf16.msra.mxu0 0
  %903 = vmatprep.subr.bf16.mxu0 0
  %904 = vmatpush1.bf16.msra.mxu0 0
  %905 = vmatprep.mubr.bf16.mxu0 0
  %906 = vmatmul.mubr.bf16.gmra.mrb[0].mxu0 %v868
  %v907 = vpop.f32.mrb[0].mxu0
  %v908 = vadd.f32 0.0, %v907
  %v909 = vpop.f32.mrb[0].mxu0
  %v910 = vpop.f32.mrb[0].mxu0
  %v911 = vadd.f32 0.0, %v910
  %v912 = vpop.f32.mrb[0].mxu0
  %913 = vmatprep.mubr.bf16.mxu0 0
  %914 = vmatmul.mubr.bf16.gmra.mrb[0].mxu0 %v871
  %v915 = vpop.f32.mrb[0].mxu0
  %v916 = vadd.f32 0.0, %v915
  %v917 = vpop.f32.mrb[0].mxu0
  %v918 = vpop.f32.mrb[0].mxu0
  %v919 = vadd.f32 0.0, %v918
  %v920 = vpop.f32.mrb[0].mxu0
  %921 = vdwg.mxu0
  %v926 = vunpack.c.l.b16 %v842
  %v927 = vunpack.c.l.b16 %v843
  %v928 = vunpack.c.l.b16 %v844
  %v929 = vunpack.c.l.b16 %v845
  %v930 = vpack.c.b16 %v927, %v926
  %v931 = vpack.c.b16 %v929, %v928
  %v935 = vsel %vm866, %v846, 0
  %v938 = vsel %vm866, %v847, 0
  %940 = vmatprep.subr.bf16.mxu0 0
  %941 = vmatpush1.bf16.msra.mxu0 %v930
  %942 = vmatprep.subr.bf16.mxu0 0
  %943 = vmatpush1.bf16.msra.mxu0 %v931
  %944 = vmatprep.subr.bf16.mxu0 0
  %945 = vmatpush1.bf16.msra.mxu0 0
  %946 = vmatprep.subr.bf16.mxu0 0
  %947 = vmatpush1.bf16.msra.mxu0 0
  %948 = vmatprep.subr.bf16.mxu0 0
  %949 = vmatpush1.bf16.msra.mxu0 0
  %950 = vmatprep.subr.bf16.mxu0 0
  %951 = vmatpush1.bf16.msra.mxu0 0
  %952 = vmatprep.subr.bf16.mxu0 0
  %953 = vmatpush1.bf16.msra.mxu0 0
  %954 = vmatprep.subr.bf16.mxu0 0
  %955 = vmatpush1.bf16.msra.mxu0 0
  %956 = vmatprep.subr.bf16.mxu0 0
  %957 = vmatpush1.bf16.msra.mxu0 0
  %958 = vmatprep.subr.bf16.mxu0 0
  %959 = vmatpush1.bf16.msra.mxu0 0
  %960 = vmatprep.subr.bf16.mxu0 0
  %961 = vmatpush1.bf16.msra.mxu0 0
  %962 = vmatprep.subr.bf16.mxu0 0
  %963 = vmatpush1.bf16.msra.mxu0 0
  %964 = vmatprep.subr.bf16.mxu0 0
  %965 = vmatpush1.bf16.msra.mxu0 0
  %966 = vmatprep.subr.bf16.mxu0 0
  %967 = vmatpush1.bf16.msra.mxu0 0
  %968 = vmatprep.subr.bf16.mxu0 0
  %969 = vmatpush1.bf16.msra.mxu0 0
  %970 = vmatprep.subr.bf16.mxu0 0
  %971 = vmatpush1.bf16.msra.mxu0 0
  %972 = vmatprep.mubr.bf16.mxu0 0
  %973 = vmatmul.mubr.bf16.gmra.mrb[0].mxu0 %v935
  %v974 = vpop.f32.mrb[0].mxu0
  %v975 = vadd.f32 %v908, %v974
  %v976 = vpop.f32.mrb[0].mxu0
  %v977 = vpop.f32.mrb[0].mxu0
  %v978 = vadd.f32 %v911, %v977
  %v979 = vpop.f32.mrb[0].mxu0
  %980 = vmatprep.mubr.bf16.mxu0 0
  %981 = vmatmul.mubr.bf16.gmra.mrb[0].mxu0 %v938
  %v982 = vpop.f32.mrb[0].mxu0
  %v983 = vadd.f32 %v916, %v982
  %v984 = vpop.f32.mrb[0].mxu0
  %v985 = vpop.f32.mrb[0].mxu0
  %v986 = vadd.f32 %v919, %v985
  %v987 = vpop.f32.mrb[0].mxu0
  %988 = vdwg.mxu0
  %v989 = vld [vmem:[%s14] sm:$0x1]
  %v991 = vlaneseq
  %v992 = vshrl.u32 %v991, 7
  %v993 = vsub.s32 0, %v992
  %v994 = vrot.slane %v989, %v993
  %v996 = vadd.f32 %v975, %v994
  %v997 = vadd.f32 %v978, %v994
  %v998 = vadd.f32 %v983, %v994
  %v999 = vadd.f32 %v986, %v994
  %v1000 = vmax.f32 %v996, 0.0
  %v1001 = vmax.f32 %v997, 0.0
  %v1002 = vmax.f32 %v998, 0.0
  %v1003 = vmax.f32 %v999, 0.0
  %v1004 = vld [vmem:[%s15] sm:$0xf]
  %v1005 = vld [vmem:[%s15 + $0x4] sm:$0xf]
  %v1006 = vld [vmem:[%s15 + $0x8] sm:$0xf]
  %v1007 = vld [vmem:[%s15 + $0xc] sm:$0xf]
  %v1008 = vld [vmem:[%s15 + $0x10] sm:$0xf]
  %v1009 = vld [vmem:[%s15 + $0x14] sm:$0xf]
  %v1010 = vld [vmem:[%s15 + $0x18] sm:$0xf]
  %v1011 = vld [vmem:[%s15 + $0x1c] sm:$0xf]
  %v1012 = vld [vmem:[%s16] sm:$0x1]
  %v1014 = vlaneseq
  %v1015 = vshrl.u32 %v1014, 7
  %v1016 = vsub.s32 0, %v1015
  %v1017 = vrot.slane %v1012, %v1016
  %v1027 = vunpack.c.l.b16 %v1004
  %v1028 = vunpack.c.l.b16 %v1005
  %v1029 = vunpack.c.l.b16 %v1006
  %v1030 = vunpack.c.l.b16 %v1007
  %v1031 = vunpack.c.l.b16 %v1008
  %v1032 = vunpack.c.l.b16 %v1009
  %v1033 = vunpack.c.l.b16 %v1010
  %v1034 = vunpack.c.l.b16 %v1011
  %v1035 = vpack.c.b16 %v1028, %v1027
  %v1036 = vpack.c.b16 %v1030, %v1029
  %v1037 = vpack.c.b16 %v1032, %v1031
  %v1038 = vpack.c.b16 %v1034, %v1033
  %1043 = vmatprep.subr.bf16.mxu0 0
  %1044 = vmatpush1.bf16.msra.mxu0 %v1035
  %1045 = vmatprep.subr.bf16.mxu0 0
  %1046 = vmatpush1.bf16.msra.mxu0 %v1036
  %1047 = vmatprep.subr.bf16.mxu0 0
  %1048 = vmatpush1.bf16.msra.mxu0 %v1037
  %1049 = vmatprep.subr.bf16.mxu0 0
  %1050 = vmatpush1.bf16.msra.mxu0 %v1038
  %1051 = vmatprep.subr.bf16.mxu0 0
  %1052 = vmatpush1.bf16.msra.mxu0 0
  %1053 = vmatprep.subr.bf16.mxu0 0
  %1054 = vmatpush1.bf16.msra.mxu0 0
  %1055 = vmatprep.subr.bf16.mxu0 0
  %1056 = vmatpush1.bf16.msra.mxu0 0
  %1057 = vmatprep.subr.bf16.mxu0 0
  %1058 = vmatpush1.bf16.msra.mxu0 0
  %1059 = vmatprep.subr.bf16.mxu0 0
  %1060 = vmatpush1.bf16.msra.mxu0 0
  %1061 = vmatprep.subr.bf16.mxu0 0
  %1062 = vmatpush1.bf16.msra.mxu0 0
  %1063 = vmatprep.subr.bf16.mxu0 0
  %1064 = vmatpush1.bf16.msra.mxu0 0
  %1065 = vmatprep.subr.bf16.mxu0 0
  %1066 = vmatpush1.bf16.msra.mxu0 0
  %1067 = vmatprep.subr.bf16.mxu0 0
  %1068 = vmatpush1.bf16.msra.mxu0 0
  %1069 = vmatprep.subr.bf16.mxu0 0
  %1070 = vmatpush1.bf16.msra.mxu0 0
  %1071 = vmatprep.subr.bf16.mxu0 0
  %1072 = vmatpush1.bf16.msra.mxu0 0
  %1073 = vmatprep.subr.bf16.mxu0 0
  %1074 = vmatpush1.bf16.msra.mxu0 0
  %1075 = vmatprep.mubr.bf16.mxu0 0
  %1076 = vmatmul.mubr.bf16.gmra.mrb[0].mxu0 %v682
  %v1077 = vpop.f32.mrb[0].mxu0
  %v1078 = vadd.f32 %v1017, %v1077
  %v1079 = vpop.f32.mrb[0].mxu0
  %v1080 = vpop.f32.mrb[0].mxu0
  %v1081 = vadd.f32 %v1017, %v1080
  %v1082 = vpop.f32.mrb[0].mxu0
  %1083 = vmatprep.mubr.bf16.mxu0 0
  %1084 = vmatmul.mubr.bf16.gmra.mrb[0].mxu0 %v685
  %v1085 = vpop.f32.mrb[0].mxu0
  %v1086 = vadd.f32 %v1017, %v1085
  %v1087 = vpop.f32.mrb[0].mxu0
  %v1088 = vpop.f32.mrb[0].mxu0
  %v1089 = vadd.f32 %v1017, %v1088
  %v1090 = vpop.f32.mrb[0].mxu0
  %1091 = vdwg.mxu0
  %v1092 = vadd.f32 %v1000, %v1078
  %v1093 = vadd.f32 %v1001, %v1081
  %v1094 = vadd.f32 %v1002, %v1086
  %v1095 = vadd.f32 %v1003, %v1089
  %v1096 = vmax.f32 %v1092, 0.0
  %v1097 = vmax.f32 %v1093, 0.0
  %v1098 = vmax.f32 %v1094, 0.0
  %v1099 = vmax.f32 %v1095, 0.0
  %v1100 = vld [vmem:[%s17] sm:$0xf]
  %v1101 = vld [vmem:[%s17 + $0x4] sm:$0xf]
  %v1102 = vld [vmem:[%s17 + $0x8] sm:$0xf]
  %v1103 = vld [vmem:[%s17 + $0xc] sm:$0xf]
  %v1104 = vpack.c.bf16 %v1097, %v1096
  %v1105 = vpack.c.bf16 %v1099, %v1098
  %v1106 = vld [vmem:[%s18] sm:$0x1]
  %v1108 = vlaneseq
  %v1109 = vshrl.u32 %v1108, 7
  %v1110 = vsub.s32 0, %v1109
  %v1111 = vrot.slane %v1106, %v1110
  %v1117 = vunpack.c.l.b16 %v1100
  %v1118 = vunpack.c.l.b16 %v1101
  %v1119 = vunpack.c.l.b16 %v1102
  %v1120 = vunpack.c.l.b16 %v1103
  %v1121 = vpack.c.b16 %v1118, %v1117
  %v1122 = vpack.c.b16 %v1120, %v1119
  %v1126 = vsel %vm866, %v1104, 0
  %v1129 = vsel %vm866, %v1105, 0
  %1131 = vmatprep.subr.bf16.mxu0 0
  %1132 = vmatpush1.bf16.msra.mxu0 %v1121
  %1133 = vmatprep.subr.bf16.mxu0 0
  %1134 = vmatpush1.bf16.msra.mxu0 %v1122
  %1135 = vmatprep.subr.bf16.mxu0 0
  %1136 = vmatpush1.bf16.msra.mxu0 0
  %1137 = vmatprep.subr.bf16.mxu0 0
  %1138 = vmatpush1.bf16.msra.mxu0 0
  %1139 = vmatprep.subr.bf16.mxu0 0
  %1140 = vmatpush1.bf16.msra.mxu0 0
  %1141 = vmatprep.subr.bf16.mxu0 0
  %1142 = vmatpush1.bf16.msra.mxu0 0
  %1143 = vmatprep.subr.bf16.mxu0 0
  %1144 = vmatpush1.bf16.msra.mxu0 0
  %1145 = vmatprep.subr.bf16.mxu0 0
  %1146 = vmatpush1.bf16.msra.mxu0 0
  %1147 = vmatprep.subr.bf16.mxu0 0
  %1148 = vmatpush1.bf16.msra.mxu0 0
  %1149 = vmatprep.subr.bf16.mxu0 0
  %1150 = vmatpush1.bf16.msra.mxu0 0
  %1151 = vmatprep.subr.bf16.mxu0 0
  %1152 = vmatpush1.bf16.msra.mxu0 0
  %1153 = vmatprep.subr.bf16.mxu0 0
  %1154 = vmatpush1.bf16.msra.mxu0 0
  %1155 = vmatprep.subr.bf16.mxu0 0
  %1156 = vmatpush1.bf16.msra.mxu0 0
  %1157 = vmatprep.subr.bf16.mxu0 0
  %1158 = vmatpush1.bf16.msra.mxu0 0
  %1159 = vmatprep.subr.bf16.mxu0 0
  %1160 = vmatpush1.bf16.msra.mxu0 0
  %1161 = vmatprep.subr.bf16.mxu0 0
  %1162 = vmatpush1.bf16.msra.mxu0 0
  %1163 = vmatprep.mubr.bf16.mxu0 0
  %1164 = vmatmul.mubr.bf16.gmra.mrb[0].mxu0 %v1126
  %v1165 = vpop.f32.mrb[0].mxu0
  %v1166 = vadd.f32 %v1111, %v1165
  %v1167 = vpop.f32.mrb[0].mxu0
  %v1168 = vpop.f32.mrb[0].mxu0
  %v1169 = vadd.f32 %v1111, %v1168
  %v1170 = vpop.f32.mrb[0].mxu0
  %1171 = vmatprep.mubr.bf16.mxu0 0
  %1172 = vmatmul.mubr.bf16.gmra.mrb[0].mxu0 %v1129
  %v1173 = vpop.f32.mrb[0].mxu0
  %v1174 = vadd.f32 %v1111, %v1173
  %v1175 = vpop.f32.mrb[0].mxu0
  %v1176 = vpop.f32.mrb[0].mxu0
  %v1177 = vadd.f32 %v1111, %v1176
  %v1178 = vpop.f32.mrb[0].mxu0
  %1179 = vdwg.mxu0
  %v1180 = vld [vmem:[%s19] sm:$0xf]
  %v1181 = vld [vmem:[%s19 + $0x4] sm:$0x3]
  %v1182 = vpack.c.bf16 %v1169, %v1166
  %v1183 = vpack.c.bf16 %v1177, %v1174
  %v1184 = vld [vmem:[%s20] sm:$0x1]
  %v1186 = vlaneseq
  %v1187 = vshrl.u32 %v1186, 7
  %v1188 = vsub.s32 0, %v1187
  %v1189 = vrot.slane %v1184, %v1188
  %v1193 = vunpack.c.l.b16 %v1180
  %v1194 = vunpack.c.l.b16 %v1181
  %v1195 = vpack.c.b16 %v1194, %v1193
  %vm1196 = vcmask 97280
  %v1198 = vsel %vm1196, %v1182, 0
  %v1201 = vsel %vm1196, %v1183, 0
  %vm1203 = vcmask 1045504
  %v1205 = vsel %vm1203, %v1195, 0
  %1207 = vmatprep.subr.bf16.mxu0 0
  %1208 = vmatpush1.bf16.msra.mxu0 %v1205
  %1209 = vmatprep.subr.bf16.mxu0 0
  %1210 = vmatpush1.bf16.msra.mxu0 0
  %1211 = vmatprep.subr.bf16.mxu0 0
  %1212 = vmatpush1.bf16.msra.mxu0 0
  %1213 = vmatprep.subr.bf16.mxu0 0
  %1214 = vmatpush1.bf16.msra.mxu0 0
  %1215 = vmatprep.subr.bf16.mxu0 0
  %1216 = vmatpush1.bf16.msra.mxu0 0
  %1217 = vmatprep.subr.bf16.mxu0 0
  %1218 = vmatpush1.bf16.msra.mxu0 0
  %1219 = vmatprep.subr.bf16.mxu0 0
  %1220 = vmatpush1.bf16.msra.mxu0 0
  %1221 = vmatprep.subr.bf16.mxu0 0
  %1222 = vmatpush1.bf16.msra.mxu0 0
  %1223 = vmatprep.subr.bf16.mxu0 0
  %1224 = vmatpush1.bf16.msra.mxu0 0
  %1225 = vmatprep.subr.bf16.mxu0 0
  %1226 = vmatpush1.bf16.msra.mxu0 0
  %1227 = vmatprep.subr.bf16.mxu0 0
  %1228 = vmatpush1.bf16.msra.mxu0 0
  %1229 = vmatprep.subr.bf16.mxu0 0
  %1230 = vmatpush1.bf16.msra.mxu0 0
  %1231 = vmatprep.subr.bf16.mxu0 0
  %1232 = vmatpush1.bf16.msra.mxu0 0
  %1233 = vmatprep.subr.bf16.mxu0 0
  %1234 = vmatpush1.bf16.msra.mxu0 0
  %1235 = vmatprep.subr.bf16.mxu0 0
  %1236 = vmatpush1.bf16.msra.mxu0 0
  %1237 = vmatprep.subr.bf16.mxu0 0
  %1238 = vmatpush1.bf16.msra.mxu0 0
  %1239 = vmatprep.mubr.bf16.mxu0 0
  %1240 = vmatmul.mubr.bf16.gmra.mrb[0].mxu0 %v1198
  %v1241 = vpop.f32.mrb[0].mxu0
  %v1242 = vadd.f32 %v1189, %v1241
  %v1243 = vpop.f32.mrb[0].mxu0
  %v1244 = vpop.f32.mrb[0].mxu0
  %v1245 = vadd.f32 %v1189, %v1244
  %v1246 = vpop.f32.mrb[0].mxu0
  %1247 = vmatprep.mubr.bf16.mxu0 0
  %1248 = vmatmul.mubr.bf16.gmra.mrb[0].mxu0 %v1201
  %v1249 = vpop.f32.mrb[0].mxu0
  %v1250 = vadd.f32 %v1189, %v1249
  %v1251 = vpop.f32.mrb[0].mxu0
  %v1252 = vpop.f32.mrb[0].mxu0
  %v1253 = vadd.f32 %v1189, %v1252
  %v1254 = vpop.f32.mrb[0].mxu0
  %1255 = vdwg.mxu0
  %v1260 = vcombine.high %v1242, %v1242
  %v1262 = vunpack.c.l.s4 1983009808
  %v1263 = vunpack.c.0.s8 %v1262
  %v1264 = vlaneseq
  %v1265 = vshrl.u32 %v1264, 7
  %v1266 = vsub.s32 %v1263, %v1265
  %v1267 = vrot.slane %v1242, %v1266
  %v1269 = vunpack.c.l.s4 1983009808
  %v1270 = vunpack.c.0.s8 %v1269
  %v1271 = vlaneseq
  %v1272 = vshrl.u32 %v1271, 7
  %v1273 = vsub.s32 %v1270, %v1272
  %v1274 = vrot.slane %v1260, %v1273
  %v1275 = vcombine.high %v1267, %v1267
  %v1276 = vcombine.high %v1274, %v1274
  %v1277 = vcombine.high %v1245, %v1245
  %v1279 = vunpack.c.l.s4 1983009808
  %v1280 = vunpack.c.0.s8 %v1279
  %v1281 = vlaneseq
  %v1282 = vshrl.u32 %v1281, 7
  %v1283 = vsub.s32 %v1280, %v1282
  %v1284 = vrot.slane %v1245, %v1283
  %v1286 = vunpack.c.l.s4 1983009808
  %v1287 = vunpack.c.0.s8 %v1286
  %v1288 = vlaneseq
  %v1289 = vshrl.u32 %v1288, 7
  %v1290 = vsub.s32 %v1287, %v1289
  %v1291 = vrot.slane %v1277, %v1290
  %v1292 = vcombine.high %v1284, %v1284
  %v1293 = vcombine.high %v1291, %v1291
  %v1294 = vcombine.high %v1250, %v1250
  %v1296 = vunpack.c.l.s4 1983009808
  %v1297 = vunpack.c.0.s8 %v1296
  %v1298 = vlaneseq
  %v1299 = vshrl.u32 %v1298, 7
  %v1300 = vsub.s32 %v1297, %v1299
  %v1301 = vrot.slane %v1250, %v1300
  %v1303 = vunpack.c.l.s4 1983009808
  %v1304 = vunpack.c.0.s8 %v1303
  %v1305 = vlaneseq
  %v1306 = vshrl.u32 %v1305, 7
  %v1307 = vsub.s32 %v1304, %v1306
  %v1308 = vrot.slane %v1294, %v1307
  %v1309 = vcombine.high %v1301, %v1301
  %v1310 = vcombine.high %v1308, %v1308
  %v1311 = vcombine.high %v1253, %v1253
  %v1313 = vunpack.c.l.s4 1983009808
  %v1314 = vunpack.c.0.s8 %v1313
  %v1315 = vlaneseq
  %v1316 = vshrl.u32 %v1315, 7
  %v1317 = vsub.s32 %v1314, %v1316
  %v1318 = vrot.slane %v1253, %v1317
  %v1320 = vunpack.c.l.s4 1983009808
  %v1321 = vunpack.c.0.s8 %v1320
  %v1322 = vlaneseq
  %v1323 = vshrl.u32 %v1322, 7
  %v1324 = vsub.s32 %v1321, %v1323
  %v1325 = vrot.slane %v1311, %v1324
  %v1326 = vcombine.high %v1318, %v1318
  %v1327 = vcombine.high %v1325, %v1325
  %vm1344 = vcmask 386048
  %1345 = vst.msk [vmem:[#allocation2] sm:$0x3] %vm1344, %v1267
  %1346 = vst.msk [vmem:[#allocation2 + $0x2] sm:$0x3] %vm1344, %v1275
  %1347 = vst.msk [vmem:[#allocation2 + $0x4] sm:$0x3] %vm1344, %v1274
  %1348 = vst.msk [vmem:[#allocation2 + $0x6] sm:$0x3] %vm1344, %v1276
  %1349 = vst.msk [vmem:[#allocation2 + $0x8] sm:$0x3] %vm1344, %v1284
  %1350 = vst.msk [vmem:[#allocation2 + $0xa] sm:$0x3] %vm1344, %v1292
  %1351 = vst.msk [vmem:[#allocation2 + $0xc] sm:$0x3] %vm1344, %v1291
  %1352 = vst.msk [vmem:[#allocation2 + $0xe] sm:$0x3] %vm1344, %v1293
  %1353 = vst.msk [vmem:[#allocation2 + $0x10] sm:$0x3] %vm1344, %v1301
  %1354 = vst.msk [vmem:[#allocation2 + $0x12] sm:$0x3] %vm1344, %v1309
  %1355 = vst.msk [vmem:[#allocation2 + $0x14] sm:$0x3] %vm1344, %v1308
  %1356 = vst.msk [vmem:[#allocation2 + $0x16] sm:$0x3] %vm1344, %v1310
  %1357 = vst.msk [vmem:[#allocation2 + $0x18] sm:$0x3] %vm1344, %v1318
  %1358 = vst.msk [vmem:[#allocation2 + $0x1a] sm:$0x3] %vm1344, %v1326
  %1359 = vst.msk [vmem:[#allocation2 + $0x1c] sm:$0x3] %vm1344, %v1325
  %1360 = vst.msk [vmem:[#allocation2 + $0x1e] sm:$0x3] %vm1344, %v1327
  %v1361 = vld [vmem:[%s21] sm:$0xff]
  %v1362 = vld [vmem:[%s21 + $0x8] sm:$0xff]
  %v1363 = vld [vmem:[%s22] sm:$0x1]
  %v1365 = vlaneseq
  %v1366 = vshrl.u32 %v1365, 7
  %v1367 = vsub.s32 0, %v1366
  %v1368 = vrot.slane %v1363, %v1367
  %v1369 = vld [vmem:[#allocation2] sm:$0x3]
  %vm1370 = vcmask 130048
  %v1372 = vsel %vm1370, 0.0, 0
  %1374 = vmatprep.subr.mxu0 0.0
  %1375 = vmatpush1.msra.mxu0 %v1361
  %1376 = vmatprep.subr.mxu0 0.0
  %1377 = vmatpush1.msra.mxu0 %v1362
  %1378 = vmatprep.subr.mxu0 0.0
  %1379 = vmatpush1.msra.mxu0 0.0
  %1380 = vmatprep.subr.mxu0 0.0
  %1381 = vmatpush1.msra.mxu0 0.0
  %1382 = vmatprep.subr.mxu0 0.0
  %1383 = vmatpush1.msra.mxu0 0.0
  %1384 = vmatprep.subr.mxu0 0.0
  %1385 = vmatpush1.msra.mxu0 0.0
  %1386 = vmatprep.subr.mxu0 0.0
  %1387 = vmatpush1.msra.mxu0 0.0
  %1388 = vmatprep.subr.mxu0 0.0
  %1389 = vmatpush1.msra.mxu0 0.0
  %1390 = vmatprep.subr.mxu0 0.0
  %1391 = vmatpush1.msra.mxu0 0.0
  %1392 = vmatprep.subr.mxu0 0.0
  %1393 = vmatpush1.msra.mxu0 0.0
  %1394 = vmatprep.subr.mxu0 0.0
  %1395 = vmatpush1.msra.mxu0 0.0
  %1396 = vmatprep.subr.mxu0 0.0
  %1397 = vmatpush1.msra.mxu0 0.0
  %1398 = vmatprep.subr.mxu0 0.0
  %1399 = vmatpush1.msra.mxu0 0.0
  %1400 = vmatprep.subr.mxu0 0.0
  %1401 = vmatpush1.msra.mxu0 0.0
  %1402 = vmatprep.subr.mxu0 0.0
  %1403 = vmatpush1.msra.mxu0 0.0
  %1404 = vmatprep.subr.mxu0 0.0
  %1405 = vmatpush1.msra.mxu0 0.0
  %1406 = vmatprep.subr.mxu0 0.0
  %1407 = vmatpush1.msra.mxu0 0.0
  %1408 = vmatprep.subr.mxu0 0.0
  %1409 = vmatpush1.msra.mxu0 0.0
  %1410 = vmatprep.subr.mxu0 0.0
  %1411 = vmatpush1.msra.mxu0 0.0
  %1412 = vmatprep.subr.mxu0 0.0
  %1413 = vmatpush1.msra.mxu0 0.0
  %1414 = vmatprep.subr.mxu0 0.0
  %1415 = vmatpush1.msra.mxu0 0.0
  %1416 = vmatprep.subr.mxu0 0.0
  %1417 = vmatpush1.msra.mxu0 0.0
  %1418 = vmatprep.subr.mxu0 0.0
  %1419 = vmatpush1.msra.mxu0 0.0
  %1420 = vmatprep.subr.mxu0 0.0
  %1421 = vmatpush1.msra.mxu0 0.0
  %1422 = vmatprep.subr.mxu0 0.0
  %1423 = vmatpush1.msra.mxu0 0.0
  %1424 = vmatprep.subr.mxu0 0.0
  %1425 = vmatpush1.msra.mxu0 0.0
  %1426 = vmatprep.subr.mxu0 0.0
  %1427 = vmatpush1.msra.mxu0 0.0
  %1428 = vmatprep.subr.mxu0 0.0
  %1429 = vmatpush1.msra.mxu0 0.0
  %1430 = vmatprep.subr.mxu0 0.0
  %1431 = vmatpush1.msra.mxu0 0.0
  %1432 = vmatprep.subr.mxu0 0.0
  %1433 = vmatpush1.msra.mxu0 0.0
  %1434 = vmatprep.subr.mxu0 0.0
  %1435 = vmatpush1.msra.mxu0 0.0
  %1436 = vmatprep.subr.mxu0 0.0
  %1437 = vmatpush1.msra.mxu0 0.0
  %1438 = vmatprep.mubr.f32.mxu0 0.0
  %1439 = vmatmul.mubr.f32.gmra.mrb[0].mxu0 %v1372
  %v1440 = vpop.f32.mrb[0].mxu0
  %v1441 = vadd.f32 0.0, %v1440
  %v1442 = vpop.f32.mrb[0].mxu0
  %1443 = vdwg.mxu0
  %v1444 = vadd.f32 %v1369, %v1441
  %v1445 = vxor.u32 %v1444, 2147483648
  %v1446 = vmul.f32 %v1445, 1.442695
  %v1447 = vpow.pop %v1446
  %v1448 = vadd.f32 %v1447, 1.0
  %v1449 = vrcp.pop %v1448
  %v1450 = vmul.f32 1.0, %v1449
  %1451 = vrot.lane.b32.xlu0 %v1368, 32
  %v1452 = vpop.permute.xlu0 %1451
  %v1454 = vadd.f32 %v1441, %v1452
  %1456 = vrot.lane.b32.xlu0 %v1454, 96
  %v1457 = vpop.permute.xlu0 %1456
  %v1459 = vmul.f32 %v1450, %v1457
  %1461 = vrot.lane.b32.xlu0 %v1459, 32
  %v1462 = vpop.permute.xlu0 %1461
  %v1464 = vadd.f32 %v1369, %v1462
  %v1465 = vtanh.pop %v1464
  %v1466 = vsub.f32 1.0, %v1450
  %1468 = vrot.lane.b32.xlu0 %v1465, 112
  %v1469 = vpop.permute.xlu0 %1468
  %v1471 = vmul.f32 %v1466, %v1469
  %v1472 = vmul.f32 %v1450, 0.0
  %v1473 = vadd.f32 %v1471, %v1472
  %v1474 = vmax.f32 %v1473, 0.0
  %1476 = vrot.lane.b32.xlu0 %v1474, 112
  %v1477 = vpop.permute.xlu0 %1476
  %vm1479 = vcmask 123904
  %1480 = vst.msk [vmem:[#allocation3] sm:$0x3] %vm1479, %v1477
  %s1481 = scalar_lea.vmem [#allocation2], 2
  %v1482 = vld [vmem:[%s1481] sm:$0x3]
  %1484 = vrot.lane.b32.xlu0 %v1473, 112
  %v1485 = vpop.permute.xlu0 %1484
  %v1486 = vsel %vm1370, %v1485, 0
  %1488 = vmatprep.subr.mxu0 0.0
  %1489 = vmatpush1.msra.mxu0 %v1361
  %1490 = vmatprep.subr.mxu0 0.0
  %1491 = vmatpush1.msra.mxu0 %v1362
  %1492 = vmatprep.subr.mxu0 0.0
  %1493 = vmatpush1.msra.mxu0 0.0
  %1494 = vmatprep.subr.mxu0 0.0
  %1495 = vmatpush1.msra.mxu0 0.0
  %1496 = vmatprep.subr.mxu0 0.0
  %1497 = vmatpush1.msra.mxu0 0.0
  %1498 = vmatprep.subr.mxu0 0.0
  %1499 = vmatpush1.msra.mxu0 0.0
  %1500 = vmatprep.subr.mxu0 0.0
  %1501 = vmatpush1.msra.mxu0 0.0
  %1502 = vmatprep.subr.mxu0 0.0
  %1503 = vmatpush1.msra.mxu0 0.0
  %1504 = vmatprep.subr.mxu0 0.0
  %1505 = vmatpush1.msra.mxu0 0.0
  %1506 = vmatprep.subr.mxu0 0.0
  %1507 = vmatpush1.msra.mxu0 0.0
  %1508 = vmatprep.subr.mxu0 0.0
  %1509 = vmatpush1.msra.mxu0 0.0
  %1510 = vmatprep.subr.mxu0 0.0
  %1511 = vmatpush1.msra.mxu0 0.0
  %1512 = vmatprep.subr.mxu0 0.0
  %1513 = vmatpush1.msra.mxu0 0.0
  %1514 = vmatprep.subr.mxu0 0.0
  %1515 = vmatpush1.msra.mxu0 0.0
  %1516 = vmatprep.subr.mxu0 0.0
  %1517 = vmatpush1.msra.mxu0 0.0
  %1518 = vmatprep.subr.mxu0 0.0
  %1519 = vmatpush1.msra.mxu0 0.0
  %1520 = vmatprep.subr.mxu0 0.0
  %1521 = vmatpush1.msra.mxu0 0.0
  %1522 = vmatprep.subr.mxu0 0.0
  %1523 = vmatpush1.msra.mxu0 0.0
  %1524 = vmatprep.subr.mxu0 0.0
  %1525 = vmatpush1.msra.mxu0 0.0
  %1526 = vmatprep.subr.mxu0 0.0
  %1527 = vmatpush1.msra.mxu0 0.0
  %1528 = vmatprep.subr.mxu0 0.0
  %1529 = vmatpush1.msra.mxu0 0.0
  %1530 = vmatprep.subr.mxu0 0.0
  %1531 = vmatpush1.msra.mxu0 0.0
  %1532 = vmatprep.subr.mxu0 0.0
  %1533 = vmatpush1.msra.mxu0 0.0
  %1534 = vmatprep.subr.mxu0 0.0
  %1535 = vmatpush1.msra.mxu0 0.0
  %1536 = vmatprep.subr.mxu0 0.0
  %1537 = vmatpush1.msra.mxu0 0.0
  %1538 = vmatprep.subr.mxu0 0.0
  %1539 = vmatpush1.msra.mxu0 0.0
  %1540 = vmatprep.subr.mxu0 0.0
  %1541 = vmatpush1.msra.mxu0 0.0
  %1542 = vmatprep.subr.mxu0 0.0
  %1543 = vmatpush1.msra.mxu0 0.0
  %1544 = vmatprep.subr.mxu0 0.0
  %1545 = vmatpush1.msra.mxu0 0.0
  %1546 = vmatprep.subr.mxu0 0.0
  %1547 = vmatpush1.msra.mxu0 0.0
  %1548 = vmatprep.subr.mxu0 0.0
  %1549 = vmatpush1.msra.mxu0 0.0
  %1550 = vmatprep.subr.mxu0 0.0
  %1551 = vmatpush1.msra.mxu0 0.0
  %1552 = vmatprep.mubr.f32.mxu0 0.0
  %1553 = vmatmul.mubr.f32.gmra.mrb[0].mxu0 %v1486
  %v1554 = vpop.f32.mrb[0].mxu0
  %v1555 = vadd.f32 0.0, %v1554
  %v1556 = vpop.f32.mrb[0].mxu0
  %1557 = vdwg.mxu0
  %v1558 = vadd.f32 %v1482, %v1555
  %v1559 = vxor.u32 %v1558, 2147483648
  %v1560 = vmul.f32 %v1559, 1.442695
  %v1561 = vpow.pop %v1560
  %v1562 = vadd.f32 %v1561, 1.0
  %v1563 = vrcp.pop %v1562
  %v1564 = vmul.f32 1.0, %v1563
  %v1565 = vadd.f32 %v1555, %v1452
  %1567 = vrot.lane.b32.xlu0 %v1565, 96
  %v1568 = vpop.permute.xlu0 %1567
  %v1570 = vmul.f32 %v1564, %v1568
  %1572 = vrot.lane.b32.xlu0 %v1570, 32
  %v1573 = vpop.permute.xlu0 %1572
  %v1575 = vadd.f32 %v1482, %v1573
  %v1576 = vtanh.pop %v1575
  %v1577 = vsub.f32 1.0, %v1564
  %1579 = vrot.lane.b32.xlu0 %v1576, 112
  %v1580 = vpop.permute.xlu0 %1579
  %v1582 = vmul.f32 %v1577, %v1580
  %v1583 = vmul.f32 %v1564, %v1473
  %v1584 = vadd.f32 %v1582, %v1583
  %v1585 = vmax.f32 %v1584, 0.0
  %1587 = vrot.lane.b32.xlu0 %v1585, 112
  %v1588 = vpop.permute.xlu0 %1587
  %s1590 = scalar_lea.vmem [#allocation3], 2
  %1591 = vst.msk [vmem:[%s1590] sm:$0x3] %vm1479, %v1588
  %s1592 = scalar_lea.vmem [#allocation2], 4
  %v1593 = vld [vmem:[%s1592] sm:$0x3]
  %1595 = vrot.lane.b32.xlu0 %v1584, 112
  %v1596 = vpop.permute.xlu0 %1595
  %v1597 = vsel %vm1370, %v1596, 0
  %1599 = vmatprep.subr.mxu0 0.0
  %1600 = vmatpush1.msra.mxu0 %v1361
  %1601 = vmatprep.subr.mxu0 0.0
  %1602 = vmatpush1.msra.mxu0 %v1362
  %1603 = vmatprep.subr.mxu0 0.0
  %1604 = vmatpush1.msra.mxu0 0.0
  %1605 = vmatprep.subr.mxu0 0.0
  %1606 = vmatpush1.msra.mxu0 0.0
  %1607 = vmatprep.subr.mxu0 0.0
  %1608 = vmatpush1.msra.mxu0 0.0
  %1609 = vmatprep.subr.mxu0 0.0
  %1610 = vmatpush1.msra.mxu0 0.0
  %1611 = vmatprep.subr.mxu0 0.0
  %1612 = vmatpush1.msra.mxu0 0.0
  %1613 = vmatprep.subr.mxu0 0.0
  %1614 = vmatpush1.msra.mxu0 0.0
  %1615 = vmatprep.subr.mxu0 0.0
  %1616 = vmatpush1.msra.mxu0 0.0
  %1617 = vmatprep.subr.mxu0 0.0
  %1618 = vmatpush1.msra.mxu0 0.0
  %1619 = vmatprep.subr.mxu0 0.0
  %1620 = vmatpush1.msra.mxu0 0.0
  %1621 = vmatprep.subr.mxu0 0.0
  %1622 = vmatpush1.msra.mxu0 0.0
  %1623 = vmatprep.subr.mxu0 0.0
  %1624 = vmatpush1.msra.mxu0 0.0
  %1625 = vmatprep.subr.mxu0 0.0
  %1626 = vmatpush1.msra.mxu0 0.0
  %1627 = vmatprep.subr.mxu0 0.0
  %1628 = vmatpush1.msra.mxu0 0.0
  %1629 = vmatprep.subr.mxu0 0.0
  %1630 = vmatpush1.msra.mxu0 0.0
  %1631 = vmatprep.subr.mxu0 0.0
  %1632 = vmatpush1.msra.mxu0 0.0
  %1633 = vmatprep.subr.mxu0 0.0
  %1634 = vmatpush1.msra.mxu0 0.0
  %1635 = vmatprep.subr.mxu0 0.0
  %1636 = vmatpush1.msra.mxu0 0.0
  %1637 = vmatprep.subr.mxu0 0.0
  %1638 = vmatpush1.msra.mxu0 0.0
  %1639 = vmatprep.subr.mxu0 0.0
  %1640 = vmatpush1.msra.mxu0 0.0
  %1641 = vmatprep.subr.mxu0 0.0
  %1642 = vmatpush1.msra.mxu0 0.0
  %1643 = vmatprep.subr.mxu0 0.0
  %1644 = vmatpush1.msra.mxu0 0.0
  %1645 = vmatprep.subr.mxu0 0.0
  %1646 = vmatpush1.msra.mxu0 0.0
  %1647 = vmatprep.subr.mxu0 0.0
  %1648 = vmatpush1.msra.mxu0 0.0
  %1649 = vmatprep.subr.mxu0 0.0
  %1650 = vmatpush1.msra.mxu0 0.0
  %1651 = vmatprep.subr.mxu0 0.0
  %1652 = vmatpush1.msra.mxu0 0.0
  %1653 = vmatprep.subr.mxu0 0.0
  %1654 = vmatpush1.msra.mxu0 0.0
  %1655 = vmatprep.subr.mxu0 0.0
  %1656 = vmatpush1.msra.mxu0 0.0
  %1657 = vmatprep.subr.mxu0 0.0
  %1658 = vmatpush1.msra.mxu0 0.0
  %1659 = vmatprep.subr.mxu0 0.0
  %1660 = vmatpush1.msra.mxu0 0.0
  %1661 = vmatprep.subr.mxu0 0.0
  %1662 = vmatpush1.msra.mxu0 0.0
  %1663 = vmatprep.mubr.f32.mxu0 0.0
  %1664 = vmatmul.mubr.f32.gmra.mrb[0].mxu0 %v1597
  %v1665 = vpop.f32.mrb[0].mxu0
  %v1666 = vadd.f32 0.0, %v1665
  %v1667 = vpop.f32.mrb[0].mxu0
  %1668 = vdwg.mxu0
  %v1669 = vadd.f32 %v1593, %v1666
  %v1670 = vxor.u32 %v1669, 2147483648
  %v1671 = vmul.f32 %v1670, 1.442695
  %v1672 = vpow.pop %v1671
  %v1673 = vadd.f32 %v1672, 1.0
  %v1674 = vrcp.pop %v1673
  %v1675 = vmul.f32 1.0, %v1674
  %v1676 = vadd.f32 %v1666, %v1452
  %1678 = vrot.lane.b32.xlu0 %v1676, 96
  %v1679 = vpop.permute.xlu0 %1678
  %v1681 = vmul.f32 %v1675, %v1679
  %1683 = vrot.lane.b32.xlu0 %v1681, 32
  %v1684 = vpop.permute.xlu0 %1683
  %v1686 = vadd.f32 %v1593, %v1684
  %v1687 = vtanh.pop %v1686
  %v1688 = vsub.f32 1.0, %v1675
  %1690 = vrot.lane.b32.xlu0 %v1687, 112
  %v1691 = vpop.permute.xlu0 %1690
  %v1693 = vmul.f32 %v1688, %v1691
  %v1694 = vmul.f32 %v1675, %v1584
  %v1695 = vadd.f32 %v1693, %v1694
  %v1696 = vmax.f32 %v1695, 0.0
  %1698 = vrot.lane.b32.xlu0 %v1696, 112
  %v1699 = vpop.permute.xlu0 %1698
  %s1701 = scalar_lea.vmem [#allocation3], 4
  %1702 = vst.msk [vmem:[%s1701] sm:$0x3] %vm1479, %v1699
  %s1703 = scalar_lea.vmem [#allocation2], 6
  %v1704 = vld [vmem:[%s1703] sm:$0x3]
  %1706 = vrot.lane.b32.xlu0 %v1695, 112
  %v1707 = vpop.permute.xlu0 %1706
  %v1708 = vsel %vm1370, %v1707, 0
  %1710 = vmatprep.subr.mxu0 0.0
  %1711 = vmatpush1.msra.mxu0 %v1361
  %1712 = vmatprep.subr.mxu0 0.0
  %1713 = vmatpush1.msra.mxu0 %v1362
  %1714 = vmatprep.subr.mxu0 0.0
  %1715 = vmatpush1.msra.mxu0 0.0
  %1716 = vmatprep.subr.mxu0 0.0
  %1717 = vmatpush1.msra.mxu0 0.0
  %1718 = vmatprep.subr.mxu0 0.0
  %1719 = vmatpush1.msra.mxu0 0.0
  %1720 = vmatprep.subr.mxu0 0.0
  %1721 = vmatpush1.msra.mxu0 0.0
  %1722 = vmatprep.subr.mxu0 0.0
  %1723 = vmatpush1.msra.mxu0 0.0
  %1724 = vmatprep.subr.mxu0 0.0
  %1725 = vmatpush1.msra.mxu0 0.0
  %1726 = vmatprep.subr.mxu0 0.0
  %1727 = vmatpush1.msra.mxu0 0.0
  %1728 = vmatprep.subr.mxu0 0.0
  %1729 = vmatpush1.msra.mxu0 0.0
  %1730 = vmatprep.subr.mxu0 0.0
  %1731 = vmatpush1.msra.mxu0 0.0
  %1732 = vmatprep.subr.mxu0 0.0
  %1733 = vmatpush1.msra.mxu0 0.0
  %1734 = vmatprep.subr.mxu0 0.0
  %1735 = vmatpush1.msra.mxu0 0.0
  %1736 = vmatprep.subr.mxu0 0.0
  %1737 = vmatpush1.msra.mxu0 0.0
  %1738 = vmatprep.subr.mxu0 0.0
  %1739 = vmatpush1.msra.mxu0 0.0
  %1740 = vmatprep.subr.mxu0 0.0
  %1741 = vmatpush1.msra.mxu0 0.0
  %1742 = vmatprep.subr.mxu0 0.0
  %1743 = vmatpush1.msra.mxu0 0.0
  %1744 = vmatprep.subr.mxu0 0.0
  %1745 = vmatpush1.msra.mxu0 0.0
  %1746 = vmatprep.subr.mxu0 0.0
  %1747 = vmatpush1.msra.mxu0 0.0
  %1748 = vmatprep.subr.mxu0 0.0
  %1749 = vmatpush1.msra.mxu0 0.0
  %1750 = vmatprep.subr.mxu0 0.0
  %1751 = vmatpush1.msra.mxu0 0.0
  %1752 = vmatprep.subr.mxu0 0.0
  %1753 = vmatpush1.msra.mxu0 0.0
  %1754 = vmatprep.subr.mxu0 0.0
  %1755 = vmatpush1.msra.mxu0 0.0
  %1756 = vmatprep.subr.mxu0 0.0
  %1757 = vmatpush1.msra.mxu0 0.0
  %1758 = vmatprep.subr.mxu0 0.0
  %1759 = vmatpush1.msra.mxu0 0.0
  %1760 = vmatprep.subr.mxu0 0.0
  %1761 = vmatpush1.msra.mxu0 0.0
  %1762 = vmatprep.subr.mxu0 0.0
  %1763 = vmatpush1.msra.mxu0 0.0
  %1764 = vmatprep.subr.mxu0 0.0
  %1765 = vmatpush1.msra.mxu0 0.0
  %1766 = vmatprep.subr.mxu0 0.0
  %1767 = vmatpush1.msra.mxu0 0.0
  %1768 = vmatprep.subr.mxu0 0.0
  %1769 = vmatpush1.msra.mxu0 0.0
  %1770 = vmatprep.subr.mxu0 0.0
  %1771 = vmatpush1.msra.mxu0 0.0
  %1772 = vmatprep.subr.mxu0 0.0
  %1773 = vmatpush1.msra.mxu0 0.0
  %1774 = vmatprep.mubr.f32.mxu0 0.0
  %1775 = vmatmul.mubr.f32.gmra.mrb[0].mxu0 %v1708
  %v1776 = vpop.f32.mrb[0].mxu0
  %v1777 = vadd.f32 0.0, %v1776
  %v1778 = vpop.f32.mrb[0].mxu0
  %1779 = vdwg.mxu0
  %v1780 = vadd.f32 %v1704, %v1777
  %v1781 = vxor.u32 %v1780, 2147483648
  %v1782 = vmul.f32 %v1781, 1.442695
  %v1783 = vpow.pop %v1782
  %v1784 = vadd.f32 %v1783, 1.0
  %v1785 = vrcp.pop %v1784
  %v1786 = vmul.f32 1.0, %v1785
  %v1787 = vadd.f32 %v1777, %v1452
  %1789 = vrot.lane.b32.xlu0 %v1787, 96
  %v1790 = vpop.permute.xlu0 %1789
  %v1792 = vmul.f32 %v1786, %v1790
  %1794 = vrot.lane.b32.xlu0 %v1792, 32
  %v1795 = vpop.permute.xlu0 %1794
  %v1797 = vadd.f32 %v1704, %v1795
  %v1798 = vtanh.pop %v1797
  %v1799 = vsub.f32 1.0, %v1786
  %1801 = vrot.lane.b32.xlu0 %v1798, 112
  %v1802 = vpop.permute.xlu0 %1801
  %v1804 = vmul.f32 %v1799, %v1802
  %v1805 = vmul.f32 %v1786, %v1695
  %v1806 = vadd.f32 %v1804, %v1805
  %v1807 = vmax.f32 %v1806, 0.0
  %1809 = vrot.lane.b32.xlu0 %v1807, 112
  %v1810 = vpop.permute.xlu0 %1809
  %s1812 = scalar_lea.vmem [#allocation3], 6
  %1813 = vst.msk [vmem:[%s1812] sm:$0x3] %vm1479, %v1810
  %s1814 = scalar_lea.vmem [#allocation2], 8
  %v1815 = vld [vmem:[%s1814] sm:$0x3]
  %1817 = vrot.lane.b32.xlu0 %v1806, 112
  %v1818 = vpop.permute.xlu0 %1817
  %v1819 = vsel %vm1370, %v1818, 0
  %1821 = vmatprep.subr.mxu0 0.0
  %1822 = vmatpush1.msra.mxu0 %v1361
  %1823 = vmatprep.subr.mxu0 0.0
  %1824 = vmatpush1.msra.mxu0 %v1362
  %1825 = vmatprep.subr.mxu0 0.0
  %1826 = vmatpush1.msra.mxu0 0.0
  %1827 = vmatprep.subr.mxu0 0.0
  %1828 = vmatpush1.msra.mxu0 0.0
  %1829 = vmatprep.subr.mxu0 0.0
  %1830 = vmatpush1.msra.mxu0 0.0
  %1831 = vmatprep.subr.mxu0 0.0
  %1832 = vmatpush1.msra.mxu0 0.0
  %1833 = vmatprep.subr.mxu0 0.0
  %1834 = vmatpush1.msra.mxu0 0.0
  %1835 = vmatprep.subr.mxu0 0.0
  %1836 = vmatpush1.msra.mxu0 0.0
  %1837 = vmatprep.subr.mxu0 0.0
  %1838 = vmatpush1.msra.mxu0 0.0
  %1839 = vmatprep.subr.mxu0 0.0
  %1840 = vmatpush1.msra.mxu0 0.0
  %1841 = vmatprep.subr.mxu0 0.0
  %1842 = vmatpush1.msra.mxu0 0.0
  %1843 = vmatprep.subr.mxu0 0.0
  %1844 = vmatpush1.msra.mxu0 0.0
  %1845 = vmatprep.subr.mxu0 0.0
  %1846 = vmatpush1.msra.mxu0 0.0
  %1847 = vmatprep.subr.mxu0 0.0
  %1848 = vmatpush1.msra.mxu0 0.0
  %1849 = vmatprep.subr.mxu0 0.0
  %1850 = vmatpush1.msra.mxu0 0.0
  %1851 = vmatprep.subr.mxu0 0.0
  %1852 = vmatpush1.msra.mxu0 0.0
  %1853 = vmatprep.subr.mxu0 0.0
  %1854 = vmatpush1.msra.mxu0 0.0
  %1855 = vmatprep.subr.mxu0 0.0
  %1856 = vmatpush1.msra.mxu0 0.0
  %1857 = vmatprep.subr.mxu0 0.0
  %1858 = vmatpush1.msra.mxu0 0.0
  %1859 = vmatprep.subr.mxu0 0.0
  %1860 = vmatpush1.msra.mxu0 0.0
  %1861 = vmatprep.subr.mxu0 0.0
  %1862 = vmatpush1.msra.mxu0 0.0
  %1863 = vmatprep.subr.mxu0 0.0
  %1864 = vmatpush1.msra.mxu0 0.0
  %1865 = vmatprep.subr.mxu0 0.0
  %1866 = vmatpush1.msra.mxu0 0.0
  %1867 = vmatprep.subr.mxu0 0.0
  %1868 = vmatpush1.msra.mxu0 0.0
  %1869 = vmatprep.subr.mxu0 0.0
  %1870 = vmatpush1.msra.mxu0 0.0
  %1871 = vmatprep.subr.mxu0 0.0
  %1872 = vmatpush1.msra.mxu0 0.0
  %1873 = vmatprep.subr.mxu0 0.0
  %1874 = vmatpush1.msra.mxu0 0.0
  %1875 = vmatprep.subr.mxu0 0.0
  %1876 = vmatpush1.msra.mxu0 0.0
  %1877 = vmatprep.subr.mxu0 0.0
  %1878 = vmatpush1.msra.mxu0 0.0
  %1879 = vmatprep.subr.mxu0 0.0
  %1880 = vmatpush1.msra.mxu0 0.0
  %1881 = vmatprep.subr.mxu0 0.0
  %1882 = vmatpush1.msra.mxu0 0.0
  %1883 = vmatprep.subr.mxu0 0.0
  %1884 = vmatpush1.msra.mxu0 0.0
  %1885 = vmatprep.mubr.f32.mxu0 0.0
  %1886 = vmatmul.mubr.f32.gmra.mrb[0].mxu0 %v1819
  %v1887 = vpop.f32.mrb[0].mxu0
  %v1888 = vadd.f32 0.0, %v1887
  %v1889 = vpop.f32.mrb[0].mxu0
  %1890 = vdwg.mxu0
  %v1891 = vadd.f32 %v1815, %v1888
  %v1892 = vxor.u32 %v1891, 2147483648
  %v1893 = vmul.f32 %v1892, 1.442695
  %v1894 = vpow.pop %v1893
  %v1895 = vadd.f32 %v1894, 1.0
  %v1896 = vrcp.pop %v1895
  %v1897 = vmul.f32 1.0, %v1896
  %v1898 = vadd.f32 %v1888, %v1452
  %1900 = vrot.lane.b32.xlu0 %v1898, 96
  %v1901 = vpop.permute.xlu0 %1900
  %v1903 = vmul.f32 %v1897, %v1901
  %1905 = vrot.lane.b32.xlu0 %v1903, 32
  %v1906 = vpop.permute.xlu0 %1905
  %v1908 = vadd.f32 %v1815, %v1906
  %v1909 = vtanh.pop %v1908
  %v1910 = vsub.f32 1.0, %v1897
  %1912 = vrot.lane.b32.xlu0 %v1909, 112
  %v1913 = vpop.permute.xlu0 %1912
  %v1915 = vmul.f32 %v1910, %v1913
  %v1916 = vmul.f32 %v1897, %v1806
  %v1917 = vadd.f32 %v1915, %v1916
  %v1918 = vmax.f32 %v1917, 0.0
  %1920 = vrot.lane.b32.xlu0 %v1918, 112
  %v1921 = vpop.permute.xlu0 %1920
  %s1923 = scalar_lea.vmem [#allocation3], 8
  %1924 = vst.msk [vmem:[%s1923] sm:$0x3] %vm1479, %v1921
  %s1925 = scalar_lea.vmem [#allocation2], 10
  %v1926 = vld [vmem:[%s1925] sm:$0x3]
  %1928 = vrot.lane.b32.xlu0 %v1917, 112
  %v1929 = vpop.permute.xlu0 %1928
  %v1930 = vsel %vm1370, %v1929, 0
  %1932 = vmatprep.subr.mxu0 0.0
  %1933 = vmatpush1.msra.mxu0 %v1361
  %1934 = vmatprep.subr.mxu0 0.0
  %1935 = vmatpush1.msra.mxu0 %v1362
  %1936 = vmatprep.subr.mxu0 0.0
  %1937 = vmatpush1.msra.mxu0 0.0
  %1938 = vmatprep.subr.mxu0 0.0
  %1939 = vmatpush1.msra.mxu0 0.0
  %1940 = vmatprep.subr.mxu0 0.0
  %1941 = vmatpush1.msra.mxu0 0.0
  %1942 = vmatprep.subr.mxu0 0.0
  %1943 = vmatpush1.msra.mxu0 0.0
  %1944 = vmatprep.subr.mxu0 0.0
  %1945 = vmatpush1.msra.mxu0 0.0
  %1946 = vmatprep.subr.mxu0 0.0
  %1947 = vmatpush1.msra.mxu0 0.0
  %1948 = vmatprep.subr.mxu0 0.0
  %1949 = vmatpush1.msra.mxu0 0.0
  %1950 = vmatprep.subr.mxu0 0.0
  %1951 = vmatpush1.msra.mxu0 0.0
  %1952 = vmatprep.subr.mxu0 0.0
  %1953 = vmatpush1.msra.mxu0 0.0
  %1954 = vmatprep.subr.mxu0 0.0
  %1955 = vmatpush1.msra.mxu0 0.0
  %1956 = vmatprep.subr.mxu0 0.0
  %1957 = vmatpush1.msra.mxu0 0.0
  %1958 = vmatprep.subr.mxu0 0.0
  %1959 = vmatpush1.msra.mxu0 0.0
  %1960 = vmatprep.subr.mxu0 0.0
  %1961 = vmatpush1.msra.mxu0 0.0
  %1962 = vmatprep.subr.mxu0 0.0
  %1963 = vmatpush1.msra.mxu0 0.0
  %1964 = vmatprep.subr.mxu0 0.0
  %1965 = vmatpush1.msra.mxu0 0.0
  %1966 = vmatprep.subr.mxu0 0.0
  %1967 = vmatpush1.msra.mxu0 0.0
  %1968 = vmatprep.subr.mxu0 0.0
  %1969 = vmatpush1.msra.mxu0 0.0
  %1970 = vmatprep.subr.mxu0 0.0
  %1971 = vmatpush1.msra.mxu0 0.0
  %1972 = vmatprep.subr.mxu0 0.0
  %1973 = vmatpush1.msra.mxu0 0.0
  %1974 = vmatprep.subr.mxu0 0.0
  %1975 = vmatpush1.msra.mxu0 0.0
  %1976 = vmatprep.subr.mxu0 0.0
  %1977 = vmatpush1.msra.mxu0 0.0
  %1978 = vmatprep.subr.mxu0 0.0
  %1979 = vmatpush1.msra.mxu0 0.0
  %1980 = vmatprep.subr.mxu0 0.0
  %1981 = vmatpush1.msra.mxu0 0.0
  %1982 = vmatprep.subr.mxu0 0.0
  %1983 = vmatpush1.msra.mxu0 0.0
  %1984 = vmatprep.subr.mxu0 0.0
  %1985 = vmatpush1.msra.mxu0 0.0
  %1986 = vmatprep.subr.mxu0 0.0
  %1987 = vmatpush1.msra.mxu0 0.0
  %1988 = vmatprep.subr.mxu0 0.0
  %1989 = vmatpush1.msra.mxu0 0.0
  %1990 = vmatprep.subr.mxu0 0.0
  %1991 = vmatpush1.msra.mxu0 0.0
  %1992 = vmatprep.subr.mxu0 0.0
  %1993 = vmatpush1.msra.mxu0 0.0
  %1994 = vmatprep.subr.mxu0 0.0
  %1995 = vmatpush1.msra.mxu0 0.0
  %1996 = vmatprep.mubr.f32.mxu0 0.0
  %1997 = vmatmul.mubr.f32.gmra.mrb[0].mxu0 %v1930
  %v1998 = vpop.f32.mrb[0].mxu0
  %v1999 = vadd.f32 0.0, %v1998
  %v2000 = vpop.f32.mrb[0].mxu0
  %2001 = vdwg.mxu0
  %v2002 = vadd.f32 %v1926, %v1999
  %v2003 = vxor.u32 %v2002, 2147483648
  %v2004 = vmul.f32 %v2003, 1.442695
  %v2005 = vpow.pop %v2004
  %v2006 = vadd.f32 %v2005, 1.0
  %v2007 = vrcp.pop %v2006
  %v2008 = vmul.f32 1.0, %v2007
  %v2009 = vadd.f32 %v1999, %v1452
  %2011 = vrot.lane.b32.xlu0 %v2009, 96
  %v2012 = vpop.permute.xlu0 %2011
  %v2014 = vmul.f32 %v2008, %v2012
  %2016 = vrot.lane.b32.xlu0 %v2014, 32
  %v2017 = vpop.permute.xlu0 %2016
  %v2019 = vadd.f32 %v1926, %v2017
  %v2020 = vtanh.pop %v2019
  %v2021 = vsub.f32 1.0, %v2008
  %2023 = vrot.lane.b32.xlu0 %v2020, 112
  %v2024 = vpop.permute.xlu0 %2023
  %v2026 = vmul.f32 %v2021, %v2024
  %v2027 = vmul.f32 %v2008, %v1917
  %v2028 = vadd.f32 %v2026, %v2027
  %v2029 = vmax.f32 %v2028, 0.0
  %2031 = vrot.lane.b32.xlu0 %v2029, 112
  %v2032 = vpop.permute.xlu0 %2031
  %s2034 = scalar_lea.vmem [#allocation3], 10
  %2035 = vst.msk [vmem:[%s2034] sm:$0x3] %vm1479, %v2032
  %s2036 = scalar_lea.vmem [#allocation2], 12
  %v2037 = vld [vmem:[%s2036] sm:$0x3]
  %2039 = vrot.lane.b32.xlu0 %v2028, 112
  %v2040 = vpop.permute.xlu0 %2039
  %v2041 = vsel %vm1370, %v2040, 0
  %2043 = vmatprep.subr.mxu0 0.0
  %2044 = vmatpush1.msra.mxu0 %v1361
  %2045 = vmatprep.subr.mxu0 0.0
  %2046 = vmatpush1.msra.mxu0 %v1362
  %2047 = vmatprep.subr.mxu0 0.0
  %2048 = vmatpush1.msra.mxu0 0.0
  %2049 = vmatprep.subr.mxu0 0.0
  %2050 = vmatpush1.msra.mxu0 0.0
  %2051 = vmatprep.subr.mxu0 0.0
  %2052 = vmatpush1.msra.mxu0 0.0
  %2053 = vmatprep.subr.mxu0 0.0
  %2054 = vmatpush1.msra.mxu0 0.0
  %2055 = vmatprep.subr.mxu0 0.0
  %2056 = vmatpush1.msra.mxu0 0.0
  %2057 = vmatprep.subr.mxu0 0.0
  %2058 = vmatpush1.msra.mxu0 0.0
  %2059 = vmatprep.subr.mxu0 0.0
  %2060 = vmatpush1.msra.mxu0 0.0
  %2061 = vmatprep.subr.mxu0 0.0
  %2062 = vmatpush1.msra.mxu0 0.0
  %2063 = vmatprep.subr.mxu0 0.0
  %2064 = vmatpush1.msra.mxu0 0.0
  %2065 = vmatprep.subr.mxu0 0.0
  %2066 = vmatpush1.msra.mxu0 0.0
  %2067 = vmatprep.subr.mxu0 0.0
  %2068 = vmatpush1.msra.mxu0 0.0
  %2069 = vmatprep.subr.mxu0 0.0
  %2070 = vmatpush1.msra.mxu0 0.0
  %2071 = vmatprep.subr.mxu0 0.0
  %2072 = vmatpush1.msra.mxu0 0.0
  %2073 = vmatprep.subr.mxu0 0.0
  %2074 = vmatpush1.msra.mxu0 0.0
  %2075 = vmatprep.subr.mxu0 0.0
  %2076 = vmatpush1.msra.mxu0 0.0
  %2077 = vmatprep.subr.mxu0 0.0
  %2078 = vmatpush1.msra.mxu0 0.0
  %2079 = vmatprep.subr.mxu0 0.0
  %2080 = vmatpush1.msra.mxu0 0.0
  %2081 = vmatprep.subr.mxu0 0.0
  %2082 = vmatpush1.msra.mxu0 0.0
  %2083 = vmatprep.subr.mxu0 0.0
  %2084 = vmatpush1.msra.mxu0 0.0
  %2085 = vmatprep.subr.mxu0 0.0
  %2086 = vmatpush1.msra.mxu0 0.0
  %2087 = vmatprep.subr.mxu0 0.0
  %2088 = vmatpush1.msra.mxu0 0.0
  %2089 = vmatprep.subr.mxu0 0.0
  %2090 = vmatpush1.msra.mxu0 0.0
  %2091 = vmatprep.subr.mxu0 0.0
  %2092 = vmatpush1.msra.mxu0 0.0
  %2093 = vmatprep.subr.mxu0 0.0
  %2094 = vmatpush1.msra.mxu0 0.0
  %2095 = vmatprep.subr.mxu0 0.0
  %2096 = vmatpush1.msra.mxu0 0.0
  %2097 = vmatprep.subr.mxu0 0.0
  %2098 = vmatpush1.msra.mxu0 0.0
  %2099 = vmatprep.subr.mxu0 0.0
  %2100 = vmatpush1.msra.mxu0 0.0
  %2101 = vmatprep.subr.mxu0 0.0
  %2102 = vmatpush1.msra.mxu0 0.0
  %2103 = vmatprep.subr.mxu0 0.0
  %2104 = vmatpush1.msra.mxu0 0.0
  %2105 = vmatprep.subr.mxu0 0.0
  %2106 = vmatpush1.msra.mxu0 0.0
  %2107 = vmatprep.mubr.f32.mxu0 0.0
  %2108 = vmatmul.mubr.f32.gmra.mrb[0].mxu0 %v2041
  %v2109 = vpop.f32.mrb[0].mxu0
  %v2110 = vadd.f32 0.0, %v2109
  %v2111 = vpop.f32.mrb[0].mxu0
  %2112 = vdwg.mxu0
  %v2113 = vadd.f32 %v2037, %v2110
  %v2114 = vxor.u32 %v2113, 2147483648
  %v2115 = vmul.f32 %v2114, 1.442695
  %v2116 = vpow.pop %v2115
  %v2117 = vadd.f32 %v2116, 1.0
  %v2118 = vrcp.pop %v2117
  %v2119 = vmul.f32 1.0, %v2118
  %v2120 = vadd.f32 %v2110, %v1452
  %2122 = vrot.lane.b32.xlu0 %v2120, 96
  %v2123 = vpop.permute.xlu0 %2122
  %v2125 = vmul.f32 %v2119, %v2123
  %2127 = vrot.lane.b32.xlu0 %v2125, 32
  %v2128 = vpop.permute.xlu0 %2127
  %v2130 = vadd.f32 %v2037, %v2128
  %v2131 = vtanh.pop %v2130
  %v2132 = vsub.f32 1.0, %v2119
  %2134 = vrot.lane.b32.xlu0 %v2131, 112
  %v2135 = vpop.permute.xlu0 %2134
  %v2137 = vmul.f32 %v2132, %v2135
  %v2138 = vmul.f32 %v2119, %v2028
  %v2139 = vadd.f32 %v2137, %v2138
  %v2140 = vmax.f32 %v2139, 0.0
  %2142 = vrot.lane.b32.xlu0 %v2140, 112
  %v2143 = vpop.permute.xlu0 %2142
  %s2145 = scalar_lea.vmem [#allocation3], 12
  %2146 = vst.msk [vmem:[%s2145] sm:$0x3] %vm1479, %v2143
  %s2147 = scalar_lea.vmem [#allocation2], 14
  %v2148 = vld [vmem:[%s2147] sm:$0x3]
  %2150 = vrot.lane.b32.xlu0 %v2139, 112
  %v2151 = vpop.permute.xlu0 %2150
  %v2152 = vsel %vm1370, %v2151, 0
  %2154 = vmatprep.subr.mxu0 0.0
  %2155 = vmatpush1.msra.mxu0 %v1361
  %2156 = vmatprep.subr.mxu0 0.0
  %2157 = vmatpush1.msra.mxu0 %v1362
  %2158 = vmatprep.subr.mxu0 0.0
  %2159 = vmatpush1.msra.mxu0 0.0
  %2160 = vmatprep.subr.mxu0 0.0
  %2161 = vmatpush1.msra.mxu0 0.0
  %2162 = vmatprep.subr.mxu0 0.0
  %2163 = vmatpush1.msra.mxu0 0.0
  %2164 = vmatprep.subr.mxu0 0.0
  %2165 = vmatpush1.msra.mxu0 0.0
  %2166 = vmatprep.subr.mxu0 0.0
  %2167 = vmatpush1.msra.mxu0 0.0
  %2168 = vmatprep.subr.mxu0 0.0
  %2169 = vmatpush1.msra.mxu0 0.0
  %2170 = vmatprep.subr.mxu0 0.0
  %2171 = vmatpush1.msra.mxu0 0.0
  %2172 = vmatprep.subr.mxu0 0.0
  %2173 = vmatpush1.msra.mxu0 0.0
  %2174 = vmatprep.subr.mxu0 0.0
  %2175 = vmatpush1.msra.mxu0 0.0
  %2176 = vmatprep.subr.mxu0 0.0
  %2177 = vmatpush1.msra.mxu0 0.0
  %2178 = vmatprep.subr.mxu0 0.0
  %2179 = vmatpush1.msra.mxu0 0.0
  %2180 = vmatprep.subr.mxu0 0.0
  %2181 = vmatpush1.msra.mxu0 0.0
  %2182 = vmatprep.subr.mxu0 0.0
  %2183 = vmatpush1.msra.mxu0 0.0
  %2184 = vmatprep.subr.mxu0 0.0
  %2185 = vmatpush1.msra.mxu0 0.0
  %2186 = vmatprep.subr.mxu0 0.0
  %2187 = vmatpush1.msra.mxu0 0.0
  %2188 = vmatprep.subr.mxu0 0.0
  %2189 = vmatpush1.msra.mxu0 0.0
  %2190 = vmatprep.subr.mxu0 0.0
  %2191 = vmatpush1.msra.mxu0 0.0
  %2192 = vmatprep.subr.mxu0 0.0
  %2193 = vmatpush1.msra.mxu0 0.0
  %2194 = vmatprep.subr.mxu0 0.0
  %2195 = vmatpush1.msra.mxu0 0.0
  %2196 = vmatprep.subr.mxu0 0.0
  %2197 = vmatpush1.msra.mxu0 0.0
  %2198 = vmatprep.subr.mxu0 0.0
  %2199 = vmatpush1.msra.mxu0 0.0
  %2200 = vmatprep.subr.mxu0 0.0
  %2201 = vmatpush1.msra.mxu0 0.0
  %2202 = vmatprep.subr.mxu0 0.0
  %2203 = vmatpush1.msra.mxu0 0.0
  %2204 = vmatprep.subr.mxu0 0.0
  %2205 = vmatpush1.msra.mxu0 0.0
  %2206 = vmatprep.subr.mxu0 0.0
  %2207 = vmatpush1.msra.mxu0 0.0
  %2208 = vmatprep.subr.mxu0 0.0
  %2209 = vmatpush1.msra.mxu0 0.0
  %2210 = vmatprep.subr.mxu0 0.0
  %2211 = vmatpush1.msra.mxu0 0.0
  %2212 = vmatprep.subr.mxu0 0.0
  %2213 = vmatpush1.msra.mxu0 0.0
  %2214 = vmatprep.subr.mxu0 0.0
  %2215 = vmatpush1.msra.mxu0 0.0
  %2216 = vmatprep.subr.mxu0 0.0
  %2217 = vmatpush1.msra.mxu0 0.0
  %2218 = vmatprep.mubr.f32.mxu0 0.0
  %2219 = vmatmul.mubr.f32.gmra.mrb[0].mxu0 %v2152
  %v2220 = vpop.f32.mrb[0].mxu0
  %v2221 = vadd.f32 0.0, %v2220
  %v2222 = vpop.f32.mrb[0].mxu0
  %2223 = vdwg.mxu0
  %v2224 = vadd.f32 %v2148, %v2221
  %v2225 = vxor.u32 %v2224, 2147483648
  %v2226 = vmul.f32 %v2225, 1.442695
  %v2227 = vpow.pop %v2226
  %v2228 = vadd.f32 %v2227, 1.0
  %v2229 = vrcp.pop %v2228
  %v2230 = vmul.f32 1.0, %v2229
  %v2231 = vadd.f32 %v2221, %v1452
  %2233 = vrot.lane.b32.xlu0 %v2231, 96
  %v2234 = vpop.permute.xlu0 %2233
  %v2236 = vmul.f32 %v2230, %v2234
  %2238 = vrot.lane.b32.xlu0 %v2236, 32
  %v2239 = vpop.permute.xlu0 %2238
  %v2241 = vadd.f32 %v2148, %v2239
  %v2242 = vtanh.pop %v2241
  %v2243 = vsub.f32 1.0, %v2230
  %2245 = vrot.lane.b32.xlu0 %v2242, 112
  %v2246 = vpop.permute.xlu0 %2245
  %v2248 = vmul.f32 %v2243, %v2246
  %v2249 = vmul.f32 %v2230, %v2139
  %v2250 = vadd.f32 %v2248, %v2249
  %v2251 = vmax.f32 %v2250, 0.0
  %2253 = vrot.lane.b32.xlu0 %v2251, 112
  %v2254 = vpop.permute.xlu0 %2253
  %s2256 = scalar_lea.vmem [#allocation3], 14
  %2257 = vst.msk [vmem:[%s2256] sm:$0x3] %vm1479, %v2254
  %s2258 = scalar_lea.vmem [#allocation2], 16
  %v2259 = vld [vmem:[%s2258] sm:$0x3]
  %2261 = vrot.lane.b32.xlu0 %v2250, 112
  %v2262 = vpop.permute.xlu0 %2261
  %v2263 = vsel %vm1370, %v2262, 0
  %2265 = vmatprep.subr.mxu0 0.0
  %2266 = vmatpush1.msra.mxu0 %v1361
  %2267 = vmatprep.subr.mxu0 0.0
  %2268 = vmatpush1.msra.mxu0 %v1362
  %2269 = vmatprep.subr.mxu0 0.0
  %2270 = vmatpush1.msra.mxu0 0.0
  %2271 = vmatprep.subr.mxu0 0.0
  %2272 = vmatpush1.msra.mxu0 0.0
  %2273 = vmatprep.subr.mxu0 0.0
  %2274 = vmatpush1.msra.mxu0 0.0
  %2275 = vmatprep.subr.mxu0 0.0
  %2276 = vmatpush1.msra.mxu0 0.0
  %2277 = vmatprep.subr.mxu0 0.0
  %2278 = vmatpush1.msra.mxu0 0.0
  %2279 = vmatprep.subr.mxu0 0.0
  %2280 = vmatpush1.msra.mxu0 0.0
  %2281 = vmatprep.subr.mxu0 0.0
  %2282 = vmatpush1.msra.mxu0 0.0
  %2283 = vmatprep.subr.mxu0 0.0
  %2284 = vmatpush1.msra.mxu0 0.0
  %2285 = vmatprep.subr.mxu0 0.0
  %2286 = vmatpush1.msra.mxu0 0.0
  %2287 = vmatprep.subr.mxu0 0.0
  %2288 = vmatpush1.msra.mxu0 0.0
  %2289 = vmatprep.subr.mxu0 0.0
  %2290 = vmatpush1.msra.mxu0 0.0
  %2291 = vmatprep.subr.mxu0 0.0
  %2292 = vmatpush1.msra.mxu0 0.0
  %2293 = vmatprep.subr.mxu0 0.0
  %2294 = vmatpush1.msra.mxu0 0.0
  %2295 = vmatprep.subr.mxu0 0.0
  %2296 = vmatpush1.msra.mxu0 0.0
  %2297 = vmatprep.subr.mxu0 0.0
  %2298 = vmatpush1.msra.mxu0 0.0
  %2299 = vmatprep.subr.mxu0 0.0
  %2300 = vmatpush1.msra.mxu0 0.0
  %2301 = vmatprep.subr.mxu0 0.0
  %2302 = vmatpush1.msra.mxu0 0.0
  %2303 = vmatprep.subr.mxu0 0.0
  %2304 = vmatpush1.msra.mxu0 0.0
  %2305 = vmatprep.subr.mxu0 0.0
  %2306 = vmatpush1.msra.mxu0 0.0
  %2307 = vmatprep.subr.mxu0 0.0
  %2308 = vmatpush1.msra.mxu0 0.0
  %2309 = vmatprep.subr.mxu0 0.0
  %2310 = vmatpush1.msra.mxu0 0.0
  %2311 = vmatprep.subr.mxu0 0.0
  %2312 = vmatpush1.msra.mxu0 0.0
  %2313 = vmatprep.subr.mxu0 0.0
  %2314 = vmatpush1.msra.mxu0 0.0
  %2315 = vmatprep.subr.mxu0 0.0
  %2316 = vmatpush1.msra.mxu0 0.0
  %2317 = vmatprep.subr.mxu0 0.0
  %2318 = vmatpush1.msra.mxu0 0.0
  %2319 = vmatprep.subr.mxu0 0.0
  %2320 = vmatpush1.msra.mxu0 0.0
  %2321 = vmatprep.subr.mxu0 0.0
  %2322 = vmatpush1.msra.mxu0 0.0
  %2323 = vmatprep.subr.mxu0 0.0
  %2324 = vmatpush1.msra.mxu0 0.0
  %2325 = vmatprep.subr.mxu0 0.0
  %2326 = vmatpush1.msra.mxu0 0.0
  %2327 = vmatprep.subr.mxu0 0.0
  %2328 = vmatpush1.msra.mxu0 0.0
  %2329 = vmatprep.mubr.f32.mxu0 0.0
  %2330 = vmatmul.mubr.f32.gmra.mrb[0].mxu0 %v2263
  %v2331 = vpop.f32.mrb[0].mxu0
  %v2332 = vadd.f32 0.0, %v2331
  %v2333 = vpop.f32.mrb[0].mxu0
  %2334 = vdwg.mxu0
  %v2335 = vadd.f32 %v2259, %v2332
  %v2336 = vxor.u32 %v2335, 2147483648
  %v2337 = vmul.f32 %v2336, 1.442695
  %v2338 = vpow.pop %v2337
  %v2339 = vadd.f32 %v2338, 1.0
  %v2340 = vrcp.pop %v2339
  %v2341 = vmul.f32 1.0, %v2340
  %v2342 = vadd.f32 %v2332, %v1452
  %2344 = vrot.lane.b32.xlu0 %v2342, 96
  %v2345 = vpop.permute.xlu0 %2344
  %v2347 = vmul.f32 %v2341, %v2345
  %2349 = vrot.lane.b32.xlu0 %v2347, 32
  %v2350 = vpop.permute.xlu0 %2349
  %v2352 = vadd.f32 %v2259, %v2350
  %v2353 = vtanh.pop %v2352
  %v2354 = vsub.f32 1.0, %v2341
  %2356 = vrot.lane.b32.xlu0 %v2353, 112
  %v2357 = vpop.permute.xlu0 %2356
  %v2359 = vmul.f32 %v2354, %v2357
  %v2360 = vmul.f32 %v2341, %v2250
  %v2361 = vadd.f32 %v2359, %v2360
  %v2362 = vmax.f32 %v2361, 0.0
  %2364 = vrot.lane.b32.xlu0 %v2362, 112
  %v2365 = vpop.permute.xlu0 %2364
  %s2367 = scalar_lea.vmem [#allocation3], 16
  %2368 = vst.msk [vmem:[%s2367] sm:$0x3] %vm1479, %v2365
  %s2369 = scalar_lea.vmem [#allocation2], 18
  %v2370 = vld [vmem:[%s2369] sm:$0x3]
  %2372 = vrot.lane.b32.xlu0 %v2361, 112
  %v2373 = vpop.permute.xlu0 %2372
  %v2374 = vsel %vm1370, %v2373, 0
  %2376 = vmatprep.subr.mxu0 0.0
  %2377 = vmatpush1.msra.mxu0 %v1361
  %2378 = vmatprep.subr.mxu0 0.0
  %2379 = vmatpush1.msra.mxu0 %v1362
  %2380 = vmatprep.subr.mxu0 0.0
  %2381 = vmatpush1.msra.mxu0 0.0
  %2382 = vmatprep.subr.mxu0 0.0
  %2383 = vmatpush1.msra.mxu0 0.0
  %2384 = vmatprep.subr.mxu0 0.0
  %2385 = vmatpush1.msra.mxu0 0.0
  %2386 = vmatprep.subr.mxu0 0.0
  %2387 = vmatpush1.msra.mxu0 0.0
  %2388 = vmatprep.subr.mxu0 0.0
  %2389 = vmatpush1.msra.mxu0 0.0
  %2390 = vmatprep.subr.mxu0 0.0
  %2391 = vmatpush1.msra.mxu0 0.0
  %2392 = vmatprep.subr.mxu0 0.0
  %2393 = vmatpush1.msra.mxu0 0.0
  %2394 = vmatprep.subr.mxu0 0.0
  %2395 = vmatpush1.msra.mxu0 0.0
  %2396 = vmatprep.subr.mxu0 0.0
  %2397 = vmatpush1.msra.mxu0 0.0
  %2398 = vmatprep.subr.mxu0 0.0
  %2399 = vmatpush1.msra.mxu0 0.0
  %2400 = vmatprep.subr.mxu0 0.0
  %2401 = vmatpush1.msra.mxu0 0.0
  %2402 = vmatprep.subr.mxu0 0.0
  %2403 = vmatpush1.msra.mxu0 0.0
  %2404 = vmatprep.subr.mxu0 0.0
  %2405 = vmatpush1.msra.mxu0 0.0
  %2406 = vmatprep.subr.mxu0 0.0
  %2407 = vmatpush1.msra.mxu0 0.0
  %2408 = vmatprep.subr.mxu0 0.0
  %2409 = vmatpush1.msra.mxu0 0.0
  %2410 = vmatprep.subr.mxu0 0.0
  %2411 = vmatpush1.msra.mxu0 0.0
  %2412 = vmatprep.subr.mxu0 0.0
  %2413 = vmatpush1.msra.mxu0 0.0
  %2414 = vmatprep.subr.mxu0 0.0
  %2415 = vmatpush1.msra.mxu0 0.0
  %2416 = vmatprep.subr.mxu0 0.0
  %2417 = vmatpush1.msra.mxu0 0.0
  %2418 = vmatprep.subr.mxu0 0.0
  %2419 = vmatpush1.msra.mxu0 0.0
  %2420 = vmatprep.subr.mxu0 0.0
  %2421 = vmatpush1.msra.mxu0 0.0
  %2422 = vmatprep.subr.mxu0 0.0
  %2423 = vmatpush1.msra.mxu0 0.0
  %2424 = vmatprep.subr.mxu0 0.0
  %2425 = vmatpush1.msra.mxu0 0.0
  %2426 = vmatprep.subr.mxu0 0.0
  %2427 = vmatpush1.msra.mxu0 0.0
  %2428 = vmatprep.subr.mxu0 0.0
  %2429 = vmatpush1.msra.mxu0 0.0
  %2430 = vmatprep.subr.mxu0 0.0
  %2431 = vmatpush1.msra.mxu0 0.0
  %2432 = vmatprep.subr.mxu0 0.0
  %2433 = vmatpush1.msra.mxu0 0.0
  %2434 = vmatprep.subr.mxu0 0.0
  %2435 = vmatpush1.msra.mxu0 0.0
  %2436 = vmatprep.subr.mxu0 0.0
  %2437 = vmatpush1.msra.mxu0 0.0
  %2438 = vmatprep.subr.mxu0 0.0
  %2439 = vmatpush1.msra.mxu0 0.0
  %2440 = vmatprep.mubr.f32.mxu0 0.0
  %2441 = vmatmul.mubr.f32.gmra.mrb[0].mxu0 %v2374
  %v2442 = vpop.f32.mrb[0].mxu0
  %v2443 = vadd.f32 0.0, %v2442
  %v2444 = vpop.f32.mrb[0].mxu0
  %2445 = vdwg.mxu0
  %v2446 = vadd.f32 %v2370, %v2443
  %v2447 = vxor.u32 %v2446, 2147483648
  %v2448 = vmul.f32 %v2447, 1.442695
  %v2449 = vpow.pop %v2448
  %v2450 = vadd.f32 %v2449, 1.0
  %v2451 = vrcp.pop %v2450
  %v2452 = vmul.f32 1.0, %v2451
  %v2453 = vadd.f32 %v2443, %v1452
  %2455 = vrot.lane.b32.xlu0 %v2453, 96
  %v2456 = vpop.permute.xlu0 %2455
  %v2458 = vmul.f32 %v2452, %v2456
  %2460 = vrot.lane.b32.xlu0 %v2458, 32
  %v2461 = vpop.permute.xlu0 %2460
  %v2463 = vadd.f32 %v2370, %v2461
  %v2464 = vtanh.pop %v2463
  %v2465 = vsub.f32 1.0, %v2452
  %2467 = vrot.lane.b32.xlu0 %v2464, 112
  %v2468 = vpop.permute.xlu0 %2467
  %v2470 = vmul.f32 %v2465, %v2468
  %v2471 = vmul.f32 %v2452, %v2361
  %v2472 = vadd.f32 %v2470, %v2471
  %v2473 = vmax.f32 %v2472, 0.0
  %2475 = vrot.lane.b32.xlu0 %v2473, 112
  %v2476 = vpop.permute.xlu0 %2475
  %s2478 = scalar_lea.vmem [#allocation3], 18
  %2479 = vst.msk [vmem:[%s2478] sm:$0x3] %vm1479, %v2476
  %s2480 = scalar_lea.vmem [#allocation2], 20
  %v2481 = vld [vmem:[%s2480] sm:$0x3]
  %2483 = vrot.lane.b32.xlu0 %v2472, 112
  %v2484 = vpop.permute.xlu0 %2483
  %v2485 = vsel %vm1370, %v2484, 0
  %2487 = vmatprep.subr.mxu0 0.0
  %2488 = vmatpush1.msra.mxu0 %v1361
  %2489 = vmatprep.subr.mxu0 0.0
  %2490 = vmatpush1.msra.mxu0 %v1362
  %2491 = vmatprep.subr.mxu0 0.0
  %2492 = vmatpush1.msra.mxu0 0.0
  %2493 = vmatprep.subr.mxu0 0.0
  %2494 = vmatpush1.msra.mxu0 0.0
  %2495 = vmatprep.subr.mxu0 0.0
  %2496 = vmatpush1.msra.mxu0 0.0
  %2497 = vmatprep.subr.mxu0 0.0
  %2498 = vmatpush1.msra.mxu0 0.0
  %2499 = vmatprep.subr.mxu0 0.0
  %2500 = vmatpush1.msra.mxu0 0.0
  %2501 = vmatprep.subr.mxu0 0.0
  %2502 = vmatpush1.msra.mxu0 0.0
  %2503 = vmatprep.subr.mxu0 0.0
  %2504 = vmatpush1.msra.mxu0 0.0
  %2505 = vmatprep.subr.mxu0 0.0
  %2506 = vmatpush1.msra.mxu0 0.0
  %2507 = vmatprep.subr.mxu0 0.0
  %2508 = vmatpush1.msra.mxu0 0.0
  %2509 = vmatprep.subr.mxu0 0.0
  %2510 = vmatpush1.msra.mxu0 0.0
  %2511 = vmatprep.subr.mxu0 0.0
  %2512 = vmatpush1.msra.mxu0 0.0
  %2513 = vmatprep.subr.mxu0 0.0
  %2514 = vmatpush1.msra.mxu0 0.0
  %2515 = vmatprep.subr.mxu0 0.0
  %2516 = vmatpush1.msra.mxu0 0.0
  %2517 = vmatprep.subr.mxu0 0.0
  %2518 = vmatpush1.msra.mxu0 0.0
  %2519 = vmatprep.subr.mxu0 0.0
  %2520 = vmatpush1.msra.mxu0 0.0
  %2521 = vmatprep.subr.mxu0 0.0
  %2522 = vmatpush1.msra.mxu0 0.0
  %2523 = vmatprep.subr.mxu0 0.0
  %2524 = vmatpush1.msra.mxu0 0.0
  %2525 = vmatprep.subr.mxu0 0.0
  %2526 = vmatpush1.msra.mxu0 0.0
  %2527 = vmatprep.subr.mxu0 0.0
  %2528 = vmatpush1.msra.mxu0 0.0
  %2529 = vmatprep.subr.mxu0 0.0
  %2530 = vmatpush1.msra.mxu0 0.0
  %2531 = vmatprep.subr.mxu0 0.0
  %2532 = vmatpush1.msra.mxu0 0.0
  %2533 = vmatprep.subr.mxu0 0.0
  %2534 = vmatpush1.msra.mxu0 0.0
  %2535 = vmatprep.subr.mxu0 0.0
  %2536 = vmatpush1.msra.mxu0 0.0
  %2537 = vmatprep.subr.mxu0 0.0
  %2538 = vmatpush1.msra.mxu0 0.0
  %2539 = vmatprep.subr.mxu0 0.0
  %2540 = vmatpush1.msra.mxu0 0.0
  %2541 = vmatprep.subr.mxu0 0.0
  %2542 = vmatpush1.msra.mxu0 0.0
  %2543 = vmatprep.subr.mxu0 0.0
  %2544 = vmatpush1.msra.mxu0 0.0
  %2545 = vmatprep.subr.mxu0 0.0
  %2546 = vmatpush1.msra.mxu0 0.0
  %2547 = vmatprep.subr.mxu0 0.0
  %2548 = vmatpush1.msra.mxu0 0.0
  %2549 = vmatprep.subr.mxu0 0.0
  %2550 = vmatpush1.msra.mxu0 0.0
  %2551 = vmatprep.mubr.f32.mxu0 0.0
  %2552 = vmatmul.mubr.f32.gmra.mrb[0].mxu0 %v2485
  %v2553 = vpop.f32.mrb[0].mxu0
  %v2554 = vadd.f32 0.0, %v2553
  %v2555 = vpop.f32.mrb[0].mxu0
  %2556 = vdwg.mxu0
  %v2557 = vadd.f32 %v2481, %v2554
  %v2558 = vxor.u32 %v2557, 2147483648
  %v2559 = vmul.f32 %v2558, 1.442695
  %v2560 = vpow.pop %v2559
  %v2561 = vadd.f32 %v2560, 1.0
  %v2562 = vrcp.pop %v2561
  %v2563 = vmul.f32 1.0, %v2562
  %v2564 = vadd.f32 %v2554, %v1452
  %2566 = vrot.lane.b32.xlu0 %v2564, 96
  %v2567 = vpop.permute.xlu0 %2566
  %v2569 = vmul.f32 %v2563, %v2567
  %2571 = vrot.lane.b32.xlu0 %v2569, 32
  %v2572 = vpop.permute.xlu0 %2571
  %v2574 = vadd.f32 %v2481, %v2572
  %v2575 = vtanh.pop %v2574
  %v2576 = vsub.f32 1.0, %v2563
  %2578 = vrot.lane.b32.xlu0 %v2575, 112
  %v2579 = vpop.permute.xlu0 %2578
  %v2581 = vmul.f32 %v2576, %v2579
  %v2582 = vmul.f32 %v2563, %v2472
  %v2583 = vadd.f32 %v2581, %v2582
  %v2584 = vmax.f32 %v2583, 0.0
  %2586 = vrot.lane.b32.xlu0 %v2584, 112
  %v2587 = vpop.permute.xlu0 %2586
  %s2589 = scalar_lea.vmem [#allocation3], 20
  %2590 = vst.msk [vmem:[%s2589] sm:$0x3] %vm1479, %v2587
  %s2591 = scalar_lea.vmem [#allocation2], 22
  %v2592 = vld [vmem:[%s2591] sm:$0x3]
  %2594 = vrot.lane.b32.xlu0 %v2583, 112
  %v2595 = vpop.permute.xlu0 %2594
  %v2596 = vsel %vm1370, %v2595, 0
  %2598 = vmatprep.subr.mxu0 0.0
  %2599 = vmatpush1.msra.mxu0 %v1361
  %2600 = vmatprep.subr.mxu0 0.0
  %2601 = vmatpush1.msra.mxu0 %v1362
  %2602 = vmatprep.subr.mxu0 0.0
  %2603 = vmatpush1.msra.mxu0 0.0
  %2604 = vmatprep.subr.mxu0 0.0
  %2605 = vmatpush1.msra.mxu0 0.0
  %2606 = vmatprep.subr.mxu0 0.0
  %2607 = vmatpush1.msra.mxu0 0.0
  %2608 = vmatprep.subr.mxu0 0.0
  %2609 = vmatpush1.msra.mxu0 0.0
  %2610 = vmatprep.subr.mxu0 0.0
  %2611 = vmatpush1.msra.mxu0 0.0
  %2612 = vmatprep.subr.mxu0 0.0
  %2613 = vmatpush1.msra.mxu0 0.0
  %2614 = vmatprep.subr.mxu0 0.0
  %2615 = vmatpush1.msra.mxu0 0.0
  %2616 = vmatprep.subr.mxu0 0.0
  %2617 = vmatpush1.msra.mxu0 0.0
  %2618 = vmatprep.subr.mxu0 0.0
  %2619 = vmatpush1.msra.mxu0 0.0
  %2620 = vmatprep.subr.mxu0 0.0
  %2621 = vmatpush1.msra.mxu0 0.0
  %2622 = vmatprep.subr.mxu0 0.0
  %2623 = vmatpush1.msra.mxu0 0.0
  %2624 = vmatprep.subr.mxu0 0.0
  %2625 = vmatpush1.msra.mxu0 0.0
  %2626 = vmatprep.subr.mxu0 0.0
  %2627 = vmatpush1.msra.mxu0 0.0
  %2628 = vmatprep.subr.mxu0 0.0
  %2629 = vmatpush1.msra.mxu0 0.0
  %2630 = vmatprep.subr.mxu0 0.0
  %2631 = vmatpush1.msra.mxu0 0.0
  %2632 = vmatprep.subr.mxu0 0.0
  %2633 = vmatpush1.msra.mxu0 0.0
  %2634 = vmatprep.subr.mxu0 0.0
  %2635 = vmatpush1.msra.mxu0 0.0
  %2636 = vmatprep.subr.mxu0 0.0
  %2637 = vmatpush1.msra.mxu0 0.0
  %2638 = vmatprep.subr.mxu0 0.0
  %2639 = vmatpush1.msra.mxu0 0.0
  %2640 = vmatprep.subr.mxu0 0.0
  %2641 = vmatpush1.msra.mxu0 0.0
  %2642 = vmatprep.subr.mxu0 0.0
  %2643 = vmatpush1.msra.mxu0 0.0
  %2644 = vmatprep.subr.mxu0 0.0
  %2645 = vmatpush1.msra.mxu0 0.0
  %2646 = vmatprep.subr.mxu0 0.0
  %2647 = vmatpush1.msra.mxu0 0.0
  %2648 = vmatprep.subr.mxu0 0.0
  %2649 = vmatpush1.msra.mxu0 0.0
  %2650 = vmatprep.subr.mxu0 0.0
  %2651 = vmatpush1.msra.mxu0 0.0
  %2652 = vmatprep.subr.mxu0 0.0
  %2653 = vmatpush1.msra.mxu0 0.0
  %2654 = vmatprep.subr.mxu0 0.0
  %2655 = vmatpush1.msra.mxu0 0.0
  %2656 = vmatprep.subr.mxu0 0.0
  %2657 = vmatpush1.msra.mxu0 0.0
  %2658 = vmatprep.subr.mxu0 0.0
  %2659 = vmatpush1.msra.mxu0 0.0
  %2660 = vmatprep.subr.mxu0 0.0
  %2661 = vmatpush1.msra.mxu0 0.0
  %2662 = vmatprep.mubr.f32.mxu0 0.0
  %2663 = vmatmul.mubr.f32.gmra.mrb[0].mxu0 %v2596
  %v2664 = vpop.f32.mrb[0].mxu0
  %v2665 = vadd.f32 0.0, %v2664
  %v2666 = vpop.f32.mrb[0].mxu0
  %2667 = vdwg.mxu0
  %v2668 = vadd.f32 %v2592, %v2665
  %v2669 = vxor.u32 %v2668, 2147483648
  %v2670 = vmul.f32 %v2669, 1.442695
  %v2671 = vpow.pop %v2670
  %v2672 = vadd.f32 %v2671, 1.0
  %v2673 = vrcp.pop %v2672
  %v2674 = vmul.f32 1.0, %v2673
  %v2675 = vadd.f32 %v2665, %v1452
  %2677 = vrot.lane.b32.xlu0 %v2675, 96
  %v2678 = vpop.permute.xlu0 %2677
  %v2680 = vmul.f32 %v2674, %v2678
  %2682 = vrot.lane.b32.xlu0 %v2680, 32
  %v2683 = vpop.permute.xlu0 %2682
  %v2685 = vadd.f32 %v2592, %v2683
  %v2686 = vtanh.pop %v2685
  %v2687 = vsub.f32 1.0, %v2674
  %2689 = vrot.lane.b32.xlu0 %v2686, 112
  %v2690 = vpop.permute.xlu0 %2689
  %v2692 = vmul.f32 %v2687, %v2690
  %v2693 = vmul.f32 %v2674, %v2583
  %v2694 = vadd.f32 %v2692, %v2693
  %v2695 = vmax.f32 %v2694, 0.0
  %2697 = vrot.lane.b32.xlu0 %v2695, 112
  %v2698 = vpop.permute.xlu0 %2697
  %s2700 = scalar_lea.vmem [#allocation3], 22
  %2701 = vst.msk [vmem:[%s2700] sm:$0x3] %vm1479, %v2698
  %s2702 = scalar_lea.vmem [#allocation2], 24
  %v2703 = vld [vmem:[%s2702] sm:$0x3]
  %2705 = vrot.lane.b32.xlu0 %v2694, 112
  %v2706 = vpop.permute.xlu0 %2705
  %v2707 = vsel %vm1370, %v2706, 0
  %2709 = vmatprep.subr.mxu0 0.0
  %2710 = vmatpush1.msra.mxu0 %v1361
  %2711 = vmatprep.subr.mxu0 0.0
  %2712 = vmatpush1.msra.mxu0 %v1362
  %2713 = vmatprep.subr.mxu0 0.0
  %2714 = vmatpush1.msra.mxu0 0.0
  %2715 = vmatprep.subr.mxu0 0.0
  %2716 = vmatpush1.msra.mxu0 0.0
  %2717 = vmatprep.subr.mxu0 0.0
  %2718 = vmatpush1.msra.mxu0 0.0
  %2719 = vmatprep.subr.mxu0 0.0
  %2720 = vmatpush1.msra.mxu0 0.0
  %2721 = vmatprep.subr.mxu0 0.0
  %2722 = vmatpush1.msra.mxu0 0.0
  %2723 = vmatprep.subr.mxu0 0.0
  %2724 = vmatpush1.msra.mxu0 0.0
  %2725 = vmatprep.subr.mxu0 0.0
  %2726 = vmatpush1.msra.mxu0 0.0
  %2727 = vmatprep.subr.mxu0 0.0
  %2728 = vmatpush1.msra.mxu0 0.0
  %2729 = vmatprep.subr.mxu0 0.0
  %2730 = vmatpush1.msra.mxu0 0.0
  %2731 = vmatprep.subr.mxu0 0.0
  %2732 = vmatpush1.msra.mxu0 0.0
  %2733 = vmatprep.subr.mxu0 0.0
  %2734 = vmatpush1.msra.mxu0 0.0
  %2735 = vmatprep.subr.mxu0 0.0
  %2736 = vmatpush1.msra.mxu0 0.0
  %2737 = vmatprep.subr.mxu0 0.0
  %2738 = vmatpush1.msra.mxu0 0.0
  %2739 = vmatprep.subr.mxu0 0.0
  %2740 = vmatpush1.msra.mxu0 0.0
  %2741 = vmatprep.subr.mxu0 0.0
  %2742 = vmatpush1.msra.mxu0 0.0
  %2743 = vmatprep.subr.mxu0 0.0
  %2744 = vmatpush1.msra.mxu0 0.0
  %2745 = vmatprep.subr.mxu0 0.0
  %2746 = vmatpush1.msra.mxu0 0.0
  %2747 = vmatprep.subr.mxu0 0.0
  %2748 = vmatpush1.msra.mxu0 0.0
  %2749 = vmatprep.subr.mxu0 0.0
  %2750 = vmatpush1.msra.mxu0 0.0
  %2751 = vmatprep.subr.mxu0 0.0
  %2752 = vmatpush1.msra.mxu0 0.0
  %2753 = vmatprep.subr.mxu0 0.0
  %2754 = vmatpush1.msra.mxu0 0.0
  %2755 = vmatprep.subr.mxu0 0.0
  %2756 = vmatpush1.msra.mxu0 0.0
  %2757 = vmatprep.subr.mxu0 0.0
  %2758 = vmatpush1.msra.mxu0 0.0
  %2759 = vmatprep.subr.mxu0 0.0
  %2760 = vmatpush1.msra.mxu0 0.0
  %2761 = vmatprep.subr.mxu0 0.0
  %2762 = vmatpush1.msra.mxu0 0.0
  %2763 = vmatprep.subr.mxu0 0.0
  %2764 = vmatpush1.msra.mxu0 0.0
  %2765 = vmatprep.subr.mxu0 0.0
  %2766 = vmatpush1.msra.mxu0 0.0
  %2767 = vmatprep.subr.mxu0 0.0
  %2768 = vmatpush1.msra.mxu0 0.0
  %2769 = vmatprep.subr.mxu0 0.0
  %2770 = vmatpush1.msra.mxu0 0.0
  %2771 = vmatprep.subr.mxu0 0.0
  %2772 = vmatpush1.msra.mxu0 0.0
  %2773 = vmatprep.mubr.f32.mxu0 0.0
  %2774 = vmatmul.mubr.f32.gmra.mrb[0].mxu0 %v2707
  %v2775 = vpop.f32.mrb[0].mxu0
  %v2776 = vadd.f32 0.0, %v2775
  %v2777 = vpop.f32.mrb[0].mxu0
  %2778 = vdwg.mxu0
  %v2779 = vadd.f32 %v2703, %v2776
  %v2780 = vxor.u32 %v2779, 2147483648
  %v2781 = vmul.f32 %v2780, 1.442695
  %v2782 = vpow.pop %v2781
  %v2783 = vadd.f32 %v2782, 1.0
  %v2784 = vrcp.pop %v2783
  %v2785 = vmul.f32 1.0, %v2784
  %v2786 = vadd.f32 %v2776, %v1452
  %2788 = vrot.lane.b32.xlu0 %v2786, 96
  %v2789 = vpop.permute.xlu0 %2788
  %v2791 = vmul.f32 %v2785, %v2789
  %2793 = vrot.lane.b32.xlu0 %v2791, 32
  %v2794 = vpop.permute.xlu0 %2793
  %v2796 = vadd.f32 %v2703, %v2794
  %v2797 = vtanh.pop %v2796
  %v2798 = vsub.f32 1.0, %v2785
  %2800 = vrot.lane.b32.xlu0 %v2797, 112
  %v2801 = vpop.permute.xlu0 %2800
  %v2803 = vmul.f32 %v2798, %v2801
  %v2804 = vmul.f32 %v2785, %v2694
  %v2805 = vadd.f32 %v2803, %v2804
  %v2806 = vmax.f32 %v2805, 0.0
  %2808 = vrot.lane.b32.xlu0 %v2806, 112
  %v2809 = vpop.permute.xlu0 %2808
  %s2811 = scalar_lea.vmem [#allocation3], 24
  %2812 = vst.msk [vmem:[%s2811] sm:$0x3] %vm1479, %v2809
  %s2813 = scalar_lea.vmem [#allocation2], 26
  %v2814 = vld [vmem:[%s2813] sm:$0x3]
  %2816 = vrot.lane.b32.xlu0 %v2805, 112
  %v2817 = vpop.permute.xlu0 %2816
  %v2818 = vsel %vm1370, %v2817, 0
  %2820 = vmatprep.subr.mxu0 0.0
  %2821 = vmatpush1.msra.mxu0 %v1361
  %2822 = vmatprep.subr.mxu0 0.0
  %2823 = vmatpush1.msra.mxu0 %v1362
  %2824 = vmatprep.subr.mxu0 0.0
  %2825 = vmatpush1.msra.mxu0 0.0
  %2826 = vmatprep.subr.mxu0 0.0
  %2827 = vmatpush1.msra.mxu0 0.0
  %2828 = vmatprep.subr.mxu0 0.0
  %2829 = vmatpush1.msra.mxu0 0.0
  %2830 = vmatprep.subr.mxu0 0.0
  %2831 = vmatpush1.msra.mxu0 0.0
  %2832 = vmatprep.subr.mxu0 0.0
  %2833 = vmatpush1.msra.mxu0 0.0
  %2834 = vmatprep.subr.mxu0 0.0
  %2835 = vmatpush1.msra.mxu0 0.0
  %2836 = vmatprep.subr.mxu0 0.0
  %2837 = vmatpush1.msra.mxu0 0.0
  %2838 = vmatprep.subr.mxu0 0.0
  %2839 = vmatpush1.msra.mxu0 0.0
  %2840 = vmatprep.subr.mxu0 0.0
  %2841 = vmatpush1.msra.mxu0 0.0
  %2842 = vmatprep.subr.mxu0 0.0
  %2843 = vmatpush1.msra.mxu0 0.0
  %2844 = vmatprep.subr.mxu0 0.0
  %2845 = vmatpush1.msra.mxu0 0.0
  %2846 = vmatprep.subr.mxu0 0.0
  %2847 = vmatpush1.msra.mxu0 0.0
  %2848 = vmatprep.subr.mxu0 0.0
  %2849 = vmatpush1.msra.mxu0 0.0
  %2850 = vmatprep.subr.mxu0 0.0
  %2851 = vmatpush1.msra.mxu0 0.0
  %2852 = vmatprep.subr.mxu0 0.0
  %2853 = vmatpush1.msra.mxu0 0.0
  %2854 = vmatprep.subr.mxu0 0.0
  %2855 = vmatpush1.msra.mxu0 0.0
  %2856 = vmatprep.subr.mxu0 0.0
  %2857 = vmatpush1.msra.mxu0 0.0
  %2858 = vmatprep.subr.mxu0 0.0
  %2859 = vmatpush1.msra.mxu0 0.0
  %2860 = vmatprep.subr.mxu0 0.0
  %2861 = vmatpush1.msra.mxu0 0.0
  %2862 = vmatprep.subr.mxu0 0.0
  %2863 = vmatpush1.msra.mxu0 0.0
  %2864 = vmatprep.subr.mxu0 0.0
  %2865 = vmatpush1.msra.mxu0 0.0
  %2866 = vmatprep.subr.mxu0 0.0
  %2867 = vmatpush1.msra.mxu0 0.0
  %2868 = vmatprep.subr.mxu0 0.0
  %2869 = vmatpush1.msra.mxu0 0.0
  %2870 = vmatprep.subr.mxu0 0.0
  %2871 = vmatpush1.msra.mxu0 0.0
  %2872 = vmatprep.subr.mxu0 0.0
  %2873 = vmatpush1.msra.mxu0 0.0
  %2874 = vmatprep.subr.mxu0 0.0
  %2875 = vmatpush1.msra.mxu0 0.0
  %2876 = vmatprep.subr.mxu0 0.0
  %2877 = vmatpush1.msra.mxu0 0.0
  %2878 = vmatprep.subr.mxu0 0.0
  %2879 = vmatpush1.msra.mxu0 0.0
  %2880 = vmatprep.subr.mxu0 0.0
  %2881 = vmatpush1.msra.mxu0 0.0
  %2882 = vmatprep.subr.mxu0 0.0
  %2883 = vmatpush1.msra.mxu0 0.0
  %2884 = vmatprep.mubr.f32.mxu0 0.0
  %2885 = vmatmul.mubr.f32.gmra.mrb[0].mxu0 %v2818
  %v2886 = vpop.f32.mrb[0].mxu0
  %v2887 = vadd.f32 0.0, %v2886
  %v2888 = vpop.f32.mrb[0].mxu0
  %2889 = vdwg.mxu0
  %v2890 = vadd.f32 %v2814, %v2887
  %v2891 = vxor.u32 %v2890, 2147483648
  %v2892 = vmul.f32 %v2891, 1.442695
  %v2893 = vpow.pop %v2892
  %v2894 = vadd.f32 %v2893, 1.0
  %v2895 = vrcp.pop %v2894
  %v2896 = vmul.f32 1.0, %v2895
  %v2897 = vadd.f32 %v2887, %v1452
  %2899 = vrot.lane.b32.xlu0 %v2897, 96
  %v2900 = vpop.permute.xlu0 %2899
  %v2902 = vmul.f32 %v2896, %v2900
  %2904 = vrot.lane.b32.xlu0 %v2902, 32
  %v2905 = vpop.permute.xlu0 %2904
  %v2907 = vadd.f32 %v2814, %v2905
  %v2908 = vtanh.pop %v2907
  %v2909 = vsub.f32 1.0, %v2896
  %2911 = vrot.lane.b32.xlu0 %v2908, 112
  %v2912 = vpop.permute.xlu0 %2911
  %v2914 = vmul.f32 %v2909, %v2912
  %v2915 = vmul.f32 %v2896, %v2805
  %v2916 = vadd.f32 %v2914, %v2915
  %v2917 = vmax.f32 %v2916, 0.0
  %2919 = vrot.lane.b32.xlu0 %v2917, 112
  %v2920 = vpop.permute.xlu0 %2919
  %s2922 = scalar_lea.vmem [#allocation3], 26
  %2923 = vst.msk [vmem:[%s2922] sm:$0x3] %vm1479, %v2920
  %s2924 = scalar_lea.vmem [#allocation2], 28
  %v2925 = vld [vmem:[%s2924] sm:$0x3]
  %2927 = vrot.lane.b32.xlu0 %v2916, 112
  %v2928 = vpop.permute.xlu0 %2927
  %v2929 = vsel %vm1370, %v2928, 0
  %2931 = vmatprep.subr.mxu0 0.0
  %2932 = vmatpush1.msra.mxu0 %v1361
  %2933 = vmatprep.subr.mxu0 0.0
  %2934 = vmatpush1.msra.mxu0 %v1362
  %2935 = vmatprep.subr.mxu0 0.0
  %2936 = vmatpush1.msra.mxu0 0.0
  %2937 = vmatprep.subr.mxu0 0.0
  %2938 = vmatpush1.msra.mxu0 0.0
  %2939 = vmatprep.subr.mxu0 0.0
  %2940 = vmatpush1.msra.mxu0 0.0
  %2941 = vmatprep.subr.mxu0 0.0
  %2942 = vmatpush1.msra.mxu0 0.0
  %2943 = vmatprep.subr.mxu0 0.0
  %2944 = vmatpush1.msra.mxu0 0.0
  %2945 = vmatprep.subr.mxu0 0.0
  %2946 = vmatpush1.msra.mxu0 0.0
  %2947 = vmatprep.subr.mxu0 0.0
  %2948 = vmatpush1.msra.mxu0 0.0
  %2949 = vmatprep.subr.mxu0 0.0
  %2950 = vmatpush1.msra.mxu0 0.0
  %2951 = vmatprep.subr.mxu0 0.0
  %2952 = vmatpush1.msra.mxu0 0.0
  %2953 = vmatprep.subr.mxu0 0.0
  %2954 = vmatpush1.msra.mxu0 0.0
  %2955 = vmatprep.subr.mxu0 0.0
  %2956 = vmatpush1.msra.mxu0 0.0
  %2957 = vmatprep.subr.mxu0 0.0
  %2958 = vmatpush1.msra.mxu0 0.0
  %2959 = vmatprep.subr.mxu0 0.0
  %2960 = vmatpush1.msra.mxu0 0.0
  %2961 = vmatprep.subr.mxu0 0.0
  %2962 = vmatpush1.msra.mxu0 0.0
  %2963 = vmatprep.subr.mxu0 0.0
  %2964 = vmatpush1.msra.mxu0 0.0
  %2965 = vmatprep.subr.mxu0 0.0
  %2966 = vmatpush1.msra.mxu0 0.0
  %2967 = vmatprep.subr.mxu0 0.0
  %2968 = vmatpush1.msra.mxu0 0.0
  %2969 = vmatprep.subr.mxu0 0.0
  %2970 = vmatpush1.msra.mxu0 0.0
  %2971 = vmatprep.subr.mxu0 0.0
  %2972 = vmatpush1.msra.mxu0 0.0
  %2973 = vmatprep.subr.mxu0 0.0
  %2974 = vmatpush1.msra.mxu0 0.0
  %2975 = vmatprep.subr.mxu0 0.0
  %2976 = vmatpush1.msra.mxu0 0.0
  %2977 = vmatprep.subr.mxu0 0.0
  %2978 = vmatpush1.msra.mxu0 0.0
  %2979 = vmatprep.subr.mxu0 0.0
  %2980 = vmatpush1.msra.mxu0 0.0
  %2981 = vmatprep.subr.mxu0 0.0
  %2982 = vmatpush1.msra.mxu0 0.0
  %2983 = vmatprep.subr.mxu0 0.0
  %2984 = vmatpush1.msra.mxu0 0.0
  %2985 = vmatprep.subr.mxu0 0.0
  %2986 = vmatpush1.msra.mxu0 0.0
  %2987 = vmatprep.subr.mxu0 0.0
  %2988 = vmatpush1.msra.mxu0 0.0
  %2989 = vmatprep.subr.mxu0 0.0
  %2990 = vmatpush1.msra.mxu0 0.0
  %2991 = vmatprep.subr.mxu0 0.0
  %2992 = vmatpush1.msra.mxu0 0.0
  %2993 = vmatprep.subr.mxu0 0.0
  %2994 = vmatpush1.msra.mxu0 0.0
  %2995 = vmatprep.mubr.f32.mxu0 0.0
  %2996 = vmatmul.mubr.f32.gmra.mrb[0].mxu0 %v2929
  %v2997 = vpop.f32.mrb[0].mxu0
  %v2998 = vadd.f32 0.0, %v2997
  %v2999 = vpop.f32.mrb[0].mxu0
  %3000 = vdwg.mxu0
  %v3001 = vadd.f32 %v2925, %v2998
  %v3002 = vxor.u32 %v3001, 2147483648
  %v3003 = vmul.f32 %v3002, 1.442695
  %v3004 = vpow.pop %v3003
  %v3005 = vadd.f32 %v3004, 1.0
  %v3006 = vrcp.pop %v3005
  %v3007 = vmul.f32 1.0, %v3006
  %v3008 = vadd.f32 %v2998, %v1452
  %3010 = vrot.lane.b32.xlu0 %v3008, 96
  %v3011 = vpop.permute.xlu0 %3010
  %v3013 = vmul.f32 %v3007, %v3011
  %3015 = vrot.lane.b32.xlu0 %v3013, 32
  %v3016 = vpop.permute.xlu0 %3015
  %v3018 = vadd.f32 %v2925, %v3016
  %v3019 = vtanh.pop %v3018
  %v3020 = vsub.f32 1.0, %v3007
  %3022 = vrot.lane.b32.xlu0 %v3019, 112
  %v3023 = vpop.permute.xlu0 %3022
  %v3025 = vmul.f32 %v3020, %v3023
  %v3026 = vmul.f32 %v3007, %v2916
  %v3027 = vadd.f32 %v3025, %v3026
  %v3028 = vmax.f32 %v3027, 0.0
  %3030 = vrot.lane.b32.xlu0 %v3028, 112
  %v3031 = vpop.permute.xlu0 %3030
  %s3033 = scalar_lea.vmem [#allocation3], 28
  %3034 = vst.msk [vmem:[%s3033] sm:$0x3] %vm1479, %v3031
  %s3035 = scalar_lea.vmem [#allocation2], 30
  %v3036 = vld [vmem:[%s3035] sm:$0x3]
  %3038 = vrot.lane.b32.xlu0 %v3027, 112
  %v3039 = vpop.permute.xlu0 %3038
  %v3040 = vsel %vm1370, %v3039, 0
  %3042 = vmatprep.subr.mxu0 0.0
  %3043 = vmatpush1.msra.mxu0 %v1361
  %3044 = vmatprep.subr.mxu0 0.0
  %3045 = vmatpush1.msra.mxu0 %v1362
  %3046 = vmatprep.subr.mxu0 0.0
  %3047 = vmatpush1.msra.mxu0 0.0
  %3048 = vmatprep.subr.mxu0 0.0
  %3049 = vmatpush1.msra.mxu0 0.0
  %3050 = vmatprep.subr.mxu0 0.0
  %3051 = vmatpush1.msra.mxu0 0.0
  %3052 = vmatprep.subr.mxu0 0.0
  %3053 = vmatpush1.msra.mxu0 0.0
  %3054 = vmatprep.subr.mxu0 0.0
  %3055 = vmatpush1.msra.mxu0 0.0
  %3056 = vmatprep.subr.mxu0 0.0
  %3057 = vmatpush1.msra.mxu0 0.0
  %3058 = vmatprep.subr.mxu0 0.0
  %3059 = vmatpush1.msra.mxu0 0.0
  %3060 = vmatprep.subr.mxu0 0.0
  %3061 = vmatpush1.msra.mxu0 0.0
  %3062 = vmatprep.subr.mxu0 0.0
  %3063 = vmatpush1.msra.mxu0 0.0
  %3064 = vmatprep.subr.mxu0 0.0
  %3065 = vmatpush1.msra.mxu0 0.0
  %3066 = vmatprep.subr.mxu0 0.0
  %3067 = vmatpush1.msra.mxu0 0.0
  %3068 = vmatprep.subr.mxu0 0.0
  %3069 = vmatpush1.msra.mxu0 0.0
  %3070 = vmatprep.subr.mxu0 0.0
  %3071 = vmatpush1.msra.mxu0 0.0
  %3072 = vmatprep.subr.mxu0 0.0
  %3073 = vmatpush1.msra.mxu0 0.0
  %3074 = vmatprep.subr.mxu0 0.0
  %3075 = vmatpush1.msra.mxu0 0.0
  %3076 = vmatprep.subr.mxu0 0.0
  %3077 = vmatpush1.msra.mxu0 0.0
  %3078 = vmatprep.subr.mxu0 0.0
  %3079 = vmatpush1.msra.mxu0 0.0
  %3080 = vmatprep.subr.mxu0 0.0
  %3081 = vmatpush1.msra.mxu0 0.0
  %3082 = vmatprep.subr.mxu0 0.0
  %3083 = vmatpush1.msra.mxu0 0.0
  %3084 = vmatprep.subr.mxu0 0.0
  %3085 = vmatpush1.msra.mxu0 0.0
  %3086 = vmatprep.subr.mxu0 0.0
  %3087 = vmatpush1.msra.mxu0 0.0
  %3088 = vmatprep.subr.mxu0 0.0
  %3089 = vmatpush1.msra.mxu0 0.0
  %3090 = vmatprep.subr.mxu0 0.0
  %3091 = vmatpush1.msra.mxu0 0.0
  %3092 = vmatprep.subr.mxu0 0.0
  %3093 = vmatpush1.msra.mxu0 0.0
  %3094 = vmatprep.subr.mxu0 0.0
  %3095 = vmatpush1.msra.mxu0 0.0
  %3096 = vmatprep.subr.mxu0 0.0
  %3097 = vmatpush1.msra.mxu0 0.0
  %3098 = vmatprep.subr.mxu0 0.0
  %3099 = vmatpush1.msra.mxu0 0.0
  %3100 = vmatprep.subr.mxu0 0.0
  %3101 = vmatpush1.msra.mxu0 0.0
  %3102 = vmatprep.subr.mxu0 0.0
  %3103 = vmatpush1.msra.mxu0 0.0
  %3104 = vmatprep.subr.mxu0 0.0
  %3105 = vmatpush1.msra.mxu0 0.0
  %3106 = vmatprep.mubr.f32.mxu0 0.0
  %3107 = vmatmul.mubr.f32.gmra.mrb[0].mxu0 %v3040
  %v3108 = vpop.f32.mrb[0].mxu0
  %v3109 = vadd.f32 0.0, %v3108
  %v3110 = vpop.f32.mrb[0].mxu0
  %3111 = vdwg.mxu0
  %v3112 = vadd.f32 %v3036, %v3109
  %v3113 = vxor.u32 %v3112, 2147483648
  %v3114 = vmul.f32 %v3113, 1.442695
  %v3115 = vpow.pop %v3114
  %v3116 = vadd.f32 %v3115, 1.0
  %v3117 = vrcp.pop %v3116
  %v3118 = vmul.f32 1.0, %v3117
  %v3119 = vadd.f32 %v3109, %v1452
  %3121 = vrot.lane.b32.xlu0 %v3119, 96
  %v3122 = vpop.permute.xlu0 %3121
  %v3124 = vmul.f32 %v3118, %v3122
  %3126 = vrot.lane.b32.xlu0 %v3124, 32
  %v3127 = vpop.permute.xlu0 %3126
  %v3129 = vadd.f32 %v3036, %v3127
  %v3130 = vtanh.pop %v3129
  %v3131 = vsub.f32 1.0, %v3118
  %3133 = vrot.lane.b32.xlu0 %v3130, 112
  %v3134 = vpop.permute.xlu0 %3133
  %v3136 = vmul.f32 %v3131, %v3134
  %v3137 = vmul.f32 %v3118, %v3027
  %v3138 = vadd.f32 %v3136, %v3137
  %v3139 = vmax.f32 %v3138, 0.0
  %3141 = vrot.lane.b32.xlu0 %v3139, 112
  %v3142 = vpop.permute.xlu0 %3141
  %s3144 = scalar_lea.vmem [#allocation3], 30
  %3145 = vst.msk [vmem:[%s3144] sm:$0x3] %vm1479, %v3142
  %v3146 = vld [vmem:[#allocation3] sm:$0x3]
  %v3147 = vld [vmem:[#allocation3 + $0x2] sm:$0x3]
  %v3148 = vld [vmem:[#allocation3 + $0x4] sm:$0x3]
  %v3149 = vld [vmem:[#allocation3 + $0x6] sm:$0x3]
  %v3150 = vld [vmem:[#allocation3 + $0x8] sm:$0x3]
  %v3151 = vld [vmem:[#allocation3 + $0xa] sm:$0x3]
  %v3152 = vld [vmem:[#allocation3 + $0xc] sm:$0x3]
  %v3153 = vld [vmem:[#allocation3 + $0xe] sm:$0x3]
  %v3154 = vld [vmem:[#allocation3 + $0x10] sm:$0x3]
  %v3155 = vld [vmem:[#allocation3 + $0x12] sm:$0x3]
  %v3156 = vld [vmem:[#allocation3 + $0x14] sm:$0x3]
  %v3157 = vld [vmem:[#allocation3 + $0x16] sm:$0x3]
  %v3158 = vld [vmem:[#allocation3 + $0x18] sm:$0x3]
  %v3159 = vld [vmem:[#allocation3 + $0x1a] sm:$0x3]
  %v3160 = vld [vmem:[#allocation3 + $0x1c] sm:$0x3]
  %v3161 = vld [vmem:[#allocation3 + $0x1e] sm:$0x3]
  %v3162 = vld [vmem:[%s23] sm:$0xf]
  %v3163 = vld [vmem:[%s23 + $0x4] sm:$0xf]
  %v3180 = vcombine.low %v3146, %v3147
  %v3181 = vcombine.low %v3148, %v3149
  %v3183 = vunpack.c.l.s4 1983009808
  %v3184 = vunpack.c.0.s8 %v3183
  %v3185 = vlaneseq
  %v3186 = vshrl.u32 %v3185, 7
  %v3187 = vsub.s32 %v3184, %v3186
  %v3188 = vrot.slane %v3180, %v3187
  %v3190 = vunpack.c.l.s4 1983009808
  %v3191 = vunpack.c.0.s8 %v3190
  %v3192 = vlaneseq
  %v3193 = vshrl.u32 %v3192, 7
  %v3194 = vsub.s32 %v3191, %v3193
  %v3195 = vrot.slane %v3181, %v3194
  %v3196 = vcombine.low %v3188, %v3195
  %v3197 = vcombine.low %v3150, %v3151
  %v3198 = vcombine.low %v3152, %v3153
  %v3200 = vunpack.c.l.s4 1983009808
  %v3201 = vunpack.c.0.s8 %v3200
  %v3202 = vlaneseq
  %v3203 = vshrl.u32 %v3202, 7
  %v3204 = vsub.s32 %v3201, %v3203
  %v3205 = vrot.slane %v3197, %v3204
  %v3207 = vunpack.c.l.s4 1983009808
  %v3208 = vunpack.c.0.s8 %v3207
  %v3209 = vlaneseq
  %v3210 = vshrl.u32 %v3209, 7
  %v3211 = vsub.s32 %v3208, %v3210
  %v3212 = vrot.slane %v3198, %v3211
  %v3213 = vcombine.low %v3205, %v3212
  %v3214 = vcombine.low %v3154, %v3155
  %v3215 = vcombine.low %v3156, %v3157
  %v3217 = vunpack.c.l.s4 1983009808
  %v3218 = vunpack.c.0.s8 %v3217
  %v3219 = vlaneseq
  %v3220 = vshrl.u32 %v3219, 7
  %v3221 = vsub.s32 %v3218, %v3220
  %v3222 = vrot.slane %v3214, %v3221
  %v3224 = vunpack.c.l.s4 1983009808
  %v3225 = vunpack.c.0.s8 %v3224
  %v3226 = vlaneseq
  %v3227 = vshrl.u32 %v3226, 7
  %v3228 = vsub.s32 %v3225, %v3227
  %v3229 = vrot.slane %v3215, %v3228
  %v3230 = vcombine.low %v3222, %v3229
  %v3231 = vcombine.low %v3158, %v3159
  %v3232 = vcombine.low %v3160, %v3161
  %v3234 = vunpack.c.l.s4 1983009808
  %v3235 = vunpack.c.0.s8 %v3234
  %v3236 = vlaneseq
  %v3237 = vshrl.u32 %v3236, 7
  %v3238 = vsub.s32 %v3235, %v3237
  %v3239 = vrot.slane %v3231, %v3238
  %v3241 = vunpack.c.l.s4 1983009808
  %v3242 = vunpack.c.0.s8 %v3241
  %v3243 = vlaneseq
  %v3244 = vshrl.u32 %v3243, 7
  %v3245 = vsub.s32 %v3242, %v3244
  %v3246 = vrot.slane %v3232, %v3245
  %v3247 = vcombine.low %v3239, %v3246
  %v3252 = vpack.c.bf16 %v3213, %v3196
  %v3253 = vpack.c.bf16 %v3247, %v3230
  %v3254 = vld [vmem:[%s24] sm:$0x1]
  %v3256 = vlaneseq
  %v3257 = vshrl.u32 %v3256, 7
  %v3258 = vsub.s32 0, %v3257
  %v3259 = vrot.slane %v3254, %v3258
  %v3263 = vunpack.c.l.b16 %v3162
  %v3264 = vunpack.c.l.b16 %v3163
  %v3265 = vpack.c.b16 %v3264, %v3263
  %v3268 = vsel %vm1370, %v3252, 0
  %v3271 = vsel %vm1370, %v3253, 0
  %3273 = vmatprep.subr.bf16.mxu0 0
  %3274 = vmatpush1.bf16.msra.mxu0 %v3265
  %3275 = vmatprep.subr.bf16.mxu0 0
  %3276 = vmatpush1.bf16.msra.mxu0 0
  %3277 = vmatprep.subr.bf16.mxu0 0
  %3278 = vmatpush1.bf16.msra.mxu0 0
  %3279 = vmatprep.subr.bf16.mxu0 0
  %3280 = vmatpush1.bf16.msra.mxu0 0
  %3281 = vmatprep.subr.bf16.mxu0 0
  %3282 = vmatpush1.bf16.msra.mxu0 0
  %3283 = vmatprep.subr.bf16.mxu0 0
  %3284 = vmatpush1.bf16.msra.mxu0 0
  %3285 = vmatprep.subr.bf16.mxu0 0
  %3286 = vmatpush1.bf16.msra.mxu0 0
  %3287 = vmatprep.subr.bf16.mxu0 0
  %3288 = vmatpush1.bf16.msra.mxu0 0
  %3289 = vmatprep.subr.bf16.mxu0 0
  %3290 = vmatpush1.bf16.msra.mxu0 0
  %3291 = vmatprep.subr.bf16.mxu0 0
  %3292 = vmatpush1.bf16.msra.mxu0 0
  %3293 = vmatprep.subr.bf16.mxu0 0
  %3294 = vmatpush1.bf16.msra.mxu0 0
  %3295 = vmatprep.subr.bf16.mxu0 0
  %3296 = vmatpush1.bf16.msra.mxu0 0
  %3297 = vmatprep.subr.bf16.mxu0 0
  %3298 = vmatpush1.bf16.msra.mxu0 0
  %3299 = vmatprep.subr.bf16.mxu0 0
  %3300 = vmatpush1.bf16.msra.mxu0 0
  %3301 = vmatprep.subr.bf16.mxu0 0
  %3302 = vmatpush1.bf16.msra.mxu0 0
  %3303 = vmatprep.subr.bf16.mxu0 0
  %3304 = vmatpush1.bf16.msra.mxu0 0
  %3305 = vmatprep.mubr.bf16.mxu0 0
  %3306 = vmatmul.mubr.bf16.gmra.mrb[0].mxu0 %v3268
  %v3307 = vpop.f32.mrb[0].mxu0
  %v3308 = vadd.f32 %v3259, %v3307
  %v3309 = vpop.f32.mrb[0].mxu0
  %v3310 = vpop.f32.mrb[0].mxu0
  %v3311 = vadd.f32 %v3259, %v3310
  %v3312 = vpop.f32.mrb[0].mxu0
  %3313 = vmatprep.mubr.bf16.mxu0 0
  %3314 = vmatmul.mubr.bf16.gmra.mrb[0].mxu0 %v3271
  %v3315 = vpop.f32.mrb[0].mxu0
  %v3316 = vadd.f32 %v3259, %v3315
  %v3317 = vpop.f32.mrb[0].mxu0
  %v3318 = vpop.f32.mrb[0].mxu0
  %v3319 = vadd.f32 %v3259, %v3318
  %v3320 = vpop.f32.mrb[0].mxu0
  %3321 = vdwg.mxu0
  %v3326 = vcombine.high %v3308, %v3308
  %v3328 = vunpack.c.l.s4 1983009808
  %v3329 = vunpack.c.0.s8 %v3328
  %v3330 = vlaneseq
  %v3331 = vshrl.u32 %v3330, 7
  %v3332 = vsub.s32 %v3329, %v3331
  %v3333 = vrot.slane %v3308, %v3332
  %v3335 = vunpack.c.l.s4 1983009808
  %v3336 = vunpack.c.0.s8 %v3335
  %v3337 = vlaneseq
  %v3338 = vshrl.u32 %v3337, 7
  %v3339 = vsub.s32 %v3336, %v3338
  %v3340 = vrot.slane %v3326, %v3339
  %v3341 = vcombine.high %v3333, %v3333
  %v3342 = vcombine.high %v3340, %v3340
  %v3343 = vcombine.high %v3311, %v3311
  %v3345 = vunpack.c.l.s4 1983009808
  %v3346 = vunpack.c.0.s8 %v3345
  %v3347 = vlaneseq
  %v3348 = vshrl.u32 %v3347, 7
  %v3349 = vsub.s32 %v3346, %v3348
  %v3350 = vrot.slane %v3311, %v3349
  %v3352 = vunpack.c.l.s4 1983009808
  %v3353 = vunpack.c.0.s8 %v3352
  %v3354 = vlaneseq
  %v3355 = vshrl.u32 %v3354, 7
  %v3356 = vsub.s32 %v3353, %v3355
  %v3357 = vrot.slane %v3343, %v3356
  %v3358 = vcombine.high %v3350, %v3350
  %v3359 = vcombine.high %v3357, %v3357
  %v3360 = vcombine.high %v3316, %v3316
  %v3362 = vunpack.c.l.s4 1983009808
  %v3363 = vunpack.c.0.s8 %v3362
  %v3364 = vlaneseq
  %v3365 = vshrl.u32 %v3364, 7
  %v3366 = vsub.s32 %v3363, %v3365
  %v3367 = vrot.slane %v3316, %v3366
  %v3369 = vunpack.c.l.s4 1983009808
  %v3370 = vunpack.c.0.s8 %v3369
  %v3371 = vlaneseq
  %v3372 = vshrl.u32 %v3371, 7
  %v3373 = vsub.s32 %v3370, %v3372
  %v3374 = vrot.slane %v3360, %v3373
  %v3375 = vcombine.high %v3367, %v3367
  %v3376 = vcombine.high %v3374, %v3374
  %v3377 = vcombine.high %v3319, %v3319
  %v3379 = vunpack.c.l.s4 1983009808
  %v3380 = vunpack.c.0.s8 %v3379
  %v3381 = vlaneseq
  %v3382 = vshrl.u32 %v3381, 7
  %v3383 = vsub.s32 %v3380, %v3382
  %v3384 = vrot.slane %v3319, %v3383
  %v3386 = vunpack.c.l.s4 1983009808
  %v3387 = vunpack.c.0.s8 %v3386
  %v3388 = vlaneseq
  %v3389 = vshrl.u32 %v3388, 7
  %v3390 = vsub.s32 %v3387, %v3389
  %v3391 = vrot.slane %v3377, %v3390
  %v3392 = vcombine.high %v3384, %v3384
  %v3393 = vcombine.high %v3391, %v3391
  %vm3410 = vcmask 25600
  %3411 = vst.msk [vmem:[%s25] sm:$0x3] %vm3410, %v3333
  %3412 = vst.msk [vmem:[%s25 + $0x2] sm:$0x3] %vm3410, %v3341
  %3413 = vst.msk [vmem:[%s25 + $0x4] sm:$0x3] %vm3410, %v3340
  %3414 = vst.msk [vmem:[%s25 + $0x6] sm:$0x3] %vm3410, %v3342
  %3415 = vst.msk [vmem:[%s25 + $0x8] sm:$0x3] %vm3410, %v3350
  %3416 = vst.msk [vmem:[%s25 + $0xa] sm:$0x3] %vm3410, %v3358
  %3417 = vst.msk [vmem:[%s25 + $0xc] sm:$0x3] %vm3410, %v3357
  %3418 = vst.msk [vmem:[%s25 + $0xe] sm:$0x3] %vm3410, %v3359
  %3419 = vst.msk [vmem:[%s25 + $0x10] sm:$0x3] %vm3410, %v3367
  %3420 = vst.msk [vmem:[%s25 + $0x12] sm:$0x3] %vm3410, %v3375
  %3421 = vst.msk [vmem:[%s25 + $0x14] sm:$0x3] %vm3410, %v3374
  %3422 = vst.msk [vmem:[%s25 + $0x16] sm:$0x3] %vm3410, %v3376
  %3423 = vst.msk [vmem:[%s25 + $0x18] sm:$0x3] %vm3410, %v3384
  %3424 = vst.msk [vmem:[%s25 + $0x1a] sm:$0x3] %vm3410, %v3392
  %3425 = vst.msk [vmem:[%s25 + $0x1c] sm:$0x3] %vm3410, %v3391
  %3426 = vst.msk [vmem:[%s25 + $0x1e] sm:$0x3] %vm3410, %v3393
  // Predicated region
  $region102: #{astcg_no_spatial_forward.1} parent=0 // pred_check
    _
  $region103: #{astcg_no_spatial_forward.1} parent=0 // pred_check_branch
    %3428 = sbr.rel (0) target = $region105
  $region104: #{astcg_no_spatial_forward.1} parent=0 // pred_region
    _
  $region105: #{astcg_no_spatial_forward.1} parent=0 // pred_fallthru
    _
  // Predicated region
  $region106: #{astcg_no_spatial_forward.1} parent=0 // pred_check
    _
  $region107: #{astcg_no_spatial_forward.1} parent=0 // pred_check_branch
    %3430 = sbr.rel (0) target = $region109
  $region108: #{astcg_no_spatial_forward.1} parent=0 // pred_region
    _
  $region109: #{astcg_no_spatial_forward.1} parent=0 // pred_fallthru
    _

</llo_original>
